<compile_context>
chip_gen: v7x
topology: tpu7x:2x2x1
jax: 0.10.0
libtpu: 0.0.40
codegen_flags: <defaults>
</compile_context>

<pallas_src>
import functools

import jax
import jax.numpy as jnp
from jax.experimental import pallas as pl
from jax.experimental.pallas import tpu as pltpu

F32 = jnp.float32
BF16 = jnp.bfloat16

PARAM_ORDER = (
    "g1", "b1n", "wq1", "wk1", "wv1", "wo1", "bo1",
    "g2", "b2n", "wq2", "wk2", "wv2", "wo2", "bo2",
    "g3", "b3n", "wf1", "bf1", "wf2", "bf2",
)
_NUM_PARAMS = len(PARAM_ORDER)
# Weights that feed the MXU -> stored/passed as bf16.  LN params & biases stay f32.
_MATMUL_WEIGHTS = frozenset(
    {"wq1", "wk1", "wv1", "wo1", "wq2", "wk2", "wv2", "wo2", "wf1", "wf2"})


# ----------------------------------------------------------------------------
# Shared math helpers (used both inside the Pallas kernel and in the reference)
# ----------------------------------------------------------------------------
def _layer_norm(x, gamma, beta, eps=1e-5):
    mu = jnp.mean(x, axis=-1, keepdims=True)
    var = jnp.mean(jnp.square(x - mu), axis=-1, keepdims=True)
    return (x - mu) * jax.lax.rsqrt(var + eps) * gamma + beta


def _gelu_exact(x):
    # nn.GELU() default: exact erf-based GELU
    return 0.5 * x * (1.0 + jax.lax.erf(x * 0.7071067811865476))


# ----------------------------------------------------------------------------
# In-kernel multi-head attention for one query tile, given pre-projected K/V
# ----------------------------------------------------------------------------
def _mha(xq_norm, k, v, wq, wo, bo, n_heads, d_head):
    """xq_norm: (tq, D) f32.  k, v: (M, inner) bf16.  wq/wo: bf16.  Returns (tq, D) f32."""
    scale = float(d_head) ** -0.5
    # fold the 1/sqrt(d_head) scale into q once (instead of scaling every (tq, M) sim)
    q = jnp.dot(xq_norm.astype(BF16), wq, preferred_element_type=F32) * scale
    q = q.astype(BF16)                                        # (tq, inner)

    head_outs = []
    for h in range(n_heads):
        s = h * d_head
        qh = q[:, s:s + d_head]                               # (tq, dh) bf16
        kh = k[:, s:s + d_head]                               # (M,  dh) bf16
        vh = v[:, s:s + d_head]                               # (M,  dh) bf16
        # contract on d_head directly -> no explicit K^T materialization
        sim = jax.lax.dot_general(qh, kh, (((1,), (1,)), ((), ())),
                                  preferred_element_type=F32)  # (tq, M) f32
        sim = sim - jnp.max(sim, axis=-1, keepdims=True)
        p = jnp.exp(sim)
        denom = jnp.sum(p, axis=-1, keepdims=True)
        p = p * pl.reciprocal(denom, approx=True)              # EUP, not VPU divide
        head_outs.append(jnp.dot(p.astype(BF16), vh, preferred_element_type=F32))

    # heads are contiguous along the lane axis -> ONE (tq, inner) @ (inner, D) matmul
    o = jnp.concatenate(head_outs, axis=-1).astype(BF16)       # (tq, inner)
    return jnp.dot(o, wo, preferred_element_type=F32) + bo


# ----------------------------------------------------------------------------
# Fused kernel: grid = (batch, q_tiles)
# ----------------------------------------------------------------------------
def _block_kernel(*args, n_heads, d_head, self_context):
    idx = 0
    x_ref = args[idx]; idx += 1                       # (1, tq, D) query tile
    if self_context:
        xf_ref, ctx_ref = x_ref, None                 # tq == N in this mode
    else:
        xf_ref = args[idx]; idx += 1                  # (1, N, D) full sequence (K/V source)
        ctx_ref = args[idx]; idx += 1                 # (1, M, Dc) cross-attn context
    (g1, b1n, wq1, wk1, wv1, wo1, bo1,
     g2, b2n, wq2, wk2, wv2, wo2, bo2,
     g3, b3n, wf1, bf1, wf2, bf2) = args[idx:idx + _NUM_PARAMS]
    idx += _NUM_PARAMS
    o_ref = args[idx]; idx += 1
    k1_sc, v1_sc = args[idx], args[idx + 1]; idx += 2
    if self_context:
        k2_sc = v2_sc = None
    else:
        k2_sc, v2_sc = args[idx], args[idx + 1]

    # ---- once per batch element (first q-tile): project & cache K/V in VMEM scratch ----
    @pl.when(pl.program_id(1) == 0)
    def _():
        xf = xf_ref[0].astype(F32)                                            # (N, D)
        x1f = _layer_norm(xf, g1[...], b1n[...]).astype(BF16)
        k1_sc[...] = jnp.dot(x1f, wk1[...], preferred_element_type=F32).astype(BF16)
        v1_sc[...] = jnp.dot(x1f, wv1[...], preferred_element_type=F32).astype(BF16)
        if not self_context:
            cf = ctx_ref[0].astype(BF16)                                      # (M, Dc)
            k2_sc[...] = jnp.dot(cf, wk2[...], preferred_element_type=F32).astype(BF16)
            v2_sc[...] = jnp.dot(cf, wv2[...], preferred_element_type=F32).astype(BF16)

    x = x_ref[0].astype(F32)                                                  # (tq, D)

    # x = attn1(norm1(x)) + x        (self attention; K/V over the full sequence)
    x1 = _layer_norm(x, g1[...], b1n[...])
    x = x + _mha(x1, k1_sc[...], v1_sc[...], wq1[...], wo1[...], bo1[...],
                 n_heads, d_head)

    # x = attn2(norm2(x), context) + x   (cross attention; context=None -> self)
    x2 = _layer_norm(x, g2[...], b2n[...])
    if self_context:
        x2b = x2.astype(BF16)
        k2 = jnp.dot(x2b, wk2[...], preferred_element_type=F32).astype(BF16)
        v2 = jnp.dot(x2b, wv2[...], preferred_element_type=F32).astype(BF16)
    else:
        k2 = k2_sc[...]
        v2 = v2_sc[...]
    x = x + _mha(x2, k2, v2, wq2[...], wo2[...], bo2[...], n_heads, d_head)

    # x = ff(norm3(x)) + x           (Linear -> GELU -> Linear)
    x3 = _layer_norm(x, g3[...], b3n[...]).astype(BF16)
    h = jnp.dot(x3, wf1[...], preferred_element_type=F32) + bf1[...]
    h = _gelu_exact(h).astype(BF16)
    x = x + jnp.dot(h, wf2[...], preferred_element_type=F32) + bf2[...]

    o_ref[0] = x.astype(o_ref.dtype)


def _pick_q_tile(n, target):
    """Largest multiple-of-8 divisor of n that is <= target (or n itself if n <= target)."""
    if n <= target:
        return n
    for t in range(min(target, n), 7, -1):
        if n % t == 0 and t % 8 == 0:
            return t
    return n


def basic_transformer_block(x, context, params, n_heads, d_head, q_tile=256):
    """Forward pass of BasicTransformerBlock as a single fused Pallas TPU kernel."""
    B, N, D = x.shape
    inner = n_heads * d_head
    self_context = context is None

    if not self_context and context.ndim == 2:
        # PyTorch path: 2-D context is expanded along the sequence axis
        context = jnp.broadcast_to(context[:, None, :], (B, N, context.shape[-1]))

    # Sequence (query) tiling.  With an external context, attn2's K/V do not depend on x,
    # so queries tile freely; with self-context attn2's K/V need the full post-attn1
    # sequence, so keep a single tile there.
    # TODO(synk): two-pass schedule to Q-tile the context=None case at large N.
    tq = N if self_context else _pick_q_tile(N, q_tile)
    nq = N // tq

    # bf16 feeds for all MXU matmuls (f32 accumulation); LN params & biases stay f32.
    weights = [params[k].astype(BF16) if k in _MATMUL_WEIGHTS else params[k]
               for k in PARAM_ORDER]
    # NOTE: weights are grid-invariant; pl.Buffered(1) on these specs would halve their
    # VMEM footprint (most valuable on v7x) -- left default-buffered for portability.
    weight_specs = [pl.BlockSpec(w.shape, lambda b, i: (0, 0)) for w in weights]

    x_tile_spec = pl.BlockSpec((1, tq, D), lambda b, i: (b, i, 0))
    if self_context:
        arrays = [x] + weights
        in_specs = [x_tile_spec] + weight_specs
    else:
        M, Dc = context.shape[1], context.shape[2]
        arrays = [x, x, context] + weights
        in_specs = [x_tile_spec,
                    pl.BlockSpec((1, N, D), lambda b, i: (b, 0, 0)),
                    pl.BlockSpec((1, M, Dc), lambda b, i: (b, 0, 0))] + weight_specs

    scratch_shapes = [pltpu.VMEM((N, inner), BF16),      # attn1 K cache (per batch elem)
                      pltpu.VMEM((N, inner), BF16)]      # attn1 V cache
    if not self_context:
        scratch_shapes += [pltpu.VMEM((M, inner), BF16),  # attn2 K cache (from context)
                           pltpu.VMEM((M, inner), BF16)]  # attn2 V cache

    kernel = functools.partial(_block_kernel, n_heads=n_heads, d_head=d_head,
                               self_context=self_context)

    return pl.pallas_call(
        kernel,
        out_shape=jax.ShapeDtypeStruct((B, N, D), x.dtype),
        grid_spec=pltpu.PrefetchScalarGridSpec(
            num_scalar_prefetch=0,
            grid=(B, nq),
            in_specs=in_specs,
            out_specs=pl.BlockSpec((1, tq, D), lambda b, i: (b, i, 0)),
            scratch_shapes=scratch_shapes,
        ),
        compiler_params=pltpu.CompilerParams(
            # batch elements are independent -> shard across TensorCores (v7x megacore);
            # q-tile axis reuses the cached K/V scratch -> must stay sequential.
            dimension_semantics=("parallel", "arbitrary"),
            vmem_limit_bytes=32 * 1024 * 1024,
        ),
    )(*arrays)


# ----------------------------------------------------------------------------
# Deterministic synthetic parameter init (shapes from BasicTransformerBlock.__init__)
# ----------------------------------------------------------------------------
def init_params(key, dim, n_heads, d_head, context_dim):
    inner = n_heads * d_head
    ff_inner = 4 * dim
    ks = jax.random.split(key, 20)

    def lin(k, fi, fo):
        return jax.random.normal(k, (fi, fo), jnp.float32) / jnp.sqrt(float(fi))

    def vec(k, d, scale=0.05):
        return scale * jax.random.normal(k, (1, d), jnp.float32)

    return {
        # norm1 / attn1 (self)
        "g1": 1.0 + vec(ks[0], dim), "b1n": vec(ks[1], dim),
        "wq1": lin(ks[2], dim, inner), "wk1": lin(ks[3], dim, inner),
        "wv1": lin(ks[4], dim, inner),
        "wo1": lin(ks[5], inner, dim), "bo1": vec(ks[6], dim),
        # norm2 / attn2 (cross)
        "g2": 1.0 + vec(ks[7], dim), "b2n": vec(ks[8], dim),
        "wq2": lin(ks[9], dim, inner), "wk2": lin(ks[10], context_dim, inner),
        "wv2": lin(ks[11], context_dim, inner),
        "wo2": lin(ks[12], inner, dim), "bo2": vec(ks[13], dim),
        # norm3 / ff
        "g3": 1.0 + vec(ks[14], dim), "b3n": vec(ks[15], dim),
        "wf1": lin(ks[16], dim, ff_inner), "bf1": vec(ks[17], ff_inner),
        "wf2": lin(ks[18], ff_inner, dim), "bf2": vec(ks[19], dim),
    }


# ----------------------------------------------------------------------------
# Pure-JAX reference.  matmul_dtype=bfloat16 mirrors the kernel's MXU precision;
# matmul_dtype=float32 is the exact module semantics.
# ----------------------------------------------------------------------------
def ref_forward(x, context, params, n_heads, d_head, matmul_dtype=jnp.float32):
    p = params
    md = matmul_dtype

    def dot(a, b):
        return jnp.dot(a.astype(md), b.astype(md), preferred_element_type=jnp.float32)

    def attention(xq, ctx, wq, wk, wv, wo, bo):
        scale = float(d_head) ** -0.5
        q = (dot(xq, wq) * scale).astype(md)
        k = dot(ctx, wk).astype(md)
        v = dot(ctx, wv).astype(md)
        outs = []
        for h in range(n_heads):
            s = h * d_head
            qh, kh, vh = q[:, s:s + d_head], k[:, s:s + d_head], v[:, s:s + d_head]
            sim = jax.lax.dot_general(qh, kh, (((1,), (1,)), ((), ())),
                                      preferred_element_type=jnp.float32)
            sim = sim - jnp.max(sim, axis=-1, keepdims=True)
            pr = jnp.exp(sim)
            pr = pr / jnp.sum(pr, axis=-1, keepdims=True)
            outs.append(dot(pr, vh))
        o = jnp.concatenate(outs, axis=-1)
        return dot(o, wo) + bo

    def per_sample(xs, cs):
        x1 = _layer_norm(xs, p["g1"], p["b1n"])
        xs = xs + attention(x1, x1, p["wq1"], p["wk1"], p["wv1"], p["wo1"], p["bo1"])
        x2 = _layer_norm(xs, p["g2"], p["b2n"])
        ctx = x2 if cs is None else cs
        xs = xs + attention(x2, ctx, p["wq2"], p["wk2"], p["wv2"], p["wo2"], p["bo2"])
        x3 = _layer_norm(xs, p["g3"], p["b3n"])
        h = _gelu_exact(dot(x3, p["wf1"]) + p["bf1"])
        return xs + dot(h, p["wf2"]) + p["bf2"]

    if context is None:
        return jax.vmap(lambda xs: per_sample(xs, None))(x)
    if context.ndim == 2:
        context = jnp.broadcast_to(context[:, None, :],
                                   (x.shape[0], x.shape[1], context.shape[-1]))
    return jax.vmap(per_sample)(x, context)


# ----------------------------------------------------------------------------
if __name__ == "__main__":
    B, N, M = 2, 8, 8
    dim, n_heads, d_head, context_dim = 32, 4, 8, 16

    key = jax.random.PRNGKey(0)
    kx, kc, kp, kp2 = jax.random.split(key, 4)
    x = jax.random.normal(kx, (B, N, dim), jnp.float32)
    context = jax.random.normal(kc, (B, M, context_dim), jnp.float32)
    params = init_params(kp, dim, n_heads, d_head, context_dim)

    # --- cross-attention (context provided) path ---
    out = jax.block_until_ready(
        basic_transformer_block(x, context, params, n_heads, d_head))
    assert out.shape == (B, N, dim)
    ref_bf16 = ref_forward(x, context, params, n_heads, d_head, matmul_dtype=jnp.bfloat16)
    ref_f32 = ref_forward(x, context, params, n_heads, d_head, matmul_dtype=jnp.float32)
    err_impl = float(jnp.max(jnp.abs(out - ref_bf16)))
    err_full = float(jnp.max(jnp.abs(out - ref_f32)))
    assert jnp.allclose(out, ref_bf16, atol=2e-2, rtol=2e-2), \
        f"cross: max abs err vs precision-matched ref = {err_impl}"
    assert err_full < 0.25, f"cross: max abs err vs exact-f32 ref = {err_full}"

    # --- self-attention (context=None) path ---
    params_self = init_params(kp2, dim, n_heads, d_head, context_dim=dim)
    out_self = jax.block_until_ready(
        basic_transformer_block(x, None, params_self, n_heads, d_head))
    ref_self = ref_forward(x, None, params_self, n_heads, d_head,
                           matmul_dtype=jnp.bfloat16)
    err_self = float(jnp.max(jnp.abs(out_self - ref_self)))
    assert jnp.allclose(out_self, ref_self, atol=2e-2, rtol=2e-2), \
        f"self: max abs err = {err_self}"

    print("KERNEL_OK")
</pallas_src>

<mosaic_0001>
module attributes {stable_mosaic.version = 11 : i64} {
  func.func @_block_kernel(%arg0: i32, %arg1: i32, %arg2: memref<1x8x32xf32, #tpu.memory_space<vmem>>, %arg3: memref<1x8x32xf32, #tpu.memory_space<vmem>>, %arg4: memref<1x8x16xf32, #tpu.memory_space<vmem>>, %arg5: memref<1x32xf32, #tpu.memory_space<vmem>>, %arg6: memref<1x32xf32, #tpu.memory_space<vmem>>, %arg7: memref<32x32xbf16, #tpu.memory_space<vmem>>, %arg8: memref<32x32xbf16, #tpu.memory_space<vmem>>, %arg9: memref<32x32xbf16, #tpu.memory_space<vmem>>, %arg10: memref<32x32xbf16, #tpu.memory_space<vmem>>, %arg11: memref<1x32xf32, #tpu.memory_space<vmem>>, %arg12: memref<1x32xf32, #tpu.memory_space<vmem>>, %arg13: memref<1x32xf32, #tpu.memory_space<vmem>>, %arg14: memref<32x32xbf16, #tpu.memory_space<vmem>>, %arg15: memref<16x32xbf16, #tpu.memory_space<vmem>>, %arg16: memref<16x32xbf16, #tpu.memory_space<vmem>>, %arg17: memref<32x32xbf16, #tpu.memory_space<vmem>>, %arg18: memref<1x32xf32, #tpu.memory_space<vmem>>, %arg19: memref<1x32xf32, #tpu.memory_space<vmem>>, %arg20: memref<1x32xf32, #tpu.memory_space<vmem>>, %arg21: memref<32x128xbf16, #tpu.memory_space<vmem>>, %arg22: memref<1x128xf32, #tpu.memory_space<vmem>>, %arg23: memref<128x32xbf16, #tpu.memory_space<vmem>>, %arg24: memref<1x32xf32, #tpu.memory_space<vmem>>, %arg25: memref<1x8x32xf32, #tpu.memory_space<vmem>>, %arg26: memref<8x32xbf16, #tpu.memory_space<vmem>>, %arg27: memref<8x32xbf16, #tpu.memory_space<vmem>>, %arg28: memref<8x32xbf16, #tpu.memory_space<vmem>>, %arg29: memref<8x32xbf16, #tpu.memory_space<vmem>>) attributes {dimension_semantics = [#tpu.dimension_semantics<parallel>, #tpu.dimension_semantics<arbitrary>], iteration_bounds = array<i64: 2, 1>, scalar_prefetch = 0 : i64, scratch_operands = 4 : i64, tpu.core_type = #tpu.core_type<tc>, window_params = [{transform_indices = @transform_0, window_bounds = array<i64: 1, 8, 32>}, {transform_indices = @transform_1, window_bounds = array<i64: 1, 8, 32>}, {transform_indices = @transform_2, window_bounds = array<i64: 1, 8, 16>}, {pipeline_mode = #tpu.pipeline_mode<synchronous>, transform_indices = @transform_3, window_bounds = array<i64: 1, 32>}, {pipeline_mode = #tpu.pipeline_mode<synchronous>, transform_indices = @transform_4, window_bounds = array<i64: 1, 32>}, {pipeline_mode = #tpu.pipeline_mode<synchronous>, transform_indices = @transform_5, window_bounds = array<i64: 32, 32>}, {pipeline_mode = #tpu.pipeline_mode<synchronous>, transform_indices = @transform_6, window_bounds = array<i64: 32, 32>}, {pipeline_mode = #tpu.pipeline_mode<synchronous>, transform_indices = @transform_7, window_bounds = array<i64: 32, 32>}, {pipeline_mode = #tpu.pipeline_mode<synchronous>, transform_indices = @transform_8, window_bounds = array<i64: 32, 32>}, {pipeline_mode = #tpu.pipeline_mode<synchronous>, transform_indices = @transform_9, window_bounds = array<i64: 1, 32>}, {pipeline_mode = #tpu.pipeline_mode<synchronous>, transform_indices = @transform_10, window_bounds = array<i64: 1, 32>}, {pipeline_mode = #tpu.pipeline_mode<synchronous>, transform_indices = @transform_11, window_bounds = array<i64: 1, 32>}, {pipeline_mode = #tpu.pipeline_mode<synchronous>, transform_indices = @transform_12, window_bounds = array<i64: 32, 32>}, {pipeline_mode = #tpu.pipeline_mode<synchronous>, transform_indices = @transform_13, window_bounds = array<i64: 16, 32>}, {pipeline_mode = #tpu.pipeline_mode<synchronous>, transform_indices = @transform_14, window_bounds = array<i64: 16, 32>}, {pipeline_mode = #tpu.pipeline_mode<synchronous>, transform_indices = @transform_15, window_bounds = array<i64: 32, 32>}, {pipeline_mode = #tpu.pipeline_mode<synchronous>, transform_indices = @transform_16, window_bounds = array<i64: 1, 32>}, {pipeline_mode = #tpu.pipeline_mode<synchronous>, transform_indices = @transform_17, window_bounds = array<i64: 1, 32>}, {pipeline_mode = #tpu.pipeline_mode<synchronous>, transform_indices = @transform_18, window_bounds = array<i64: 1, 32>}, {pipeline_mode = #tpu.pipeline_mode<synchronous>, transform_indices = @transform_19, window_bounds = array<i64: 32, 128>}, {pipeline_mode = #tpu.pipeline_mode<synchronous>, transform_indices = @transform_20, window_bounds = array<i64: 1, 128>}, {pipeline_mode = #tpu.pipeline_mode<synchronous>, transform_indices = @transform_21, window_bounds = array<i64: 128, 32>}, {pipeline_mode = #tpu.pipeline_mode<synchronous>, transform_indices = @transform_22, window_bounds = array<i64: 1, 32>}, {transform_indices = @transform_23, window_bounds = array<i64: 1, 8, 32>}]} {
    %c0_i32 = arith.constant 0 : i32
    %0 = arith.cmpi eq, %arg1, %c0_i32 : i32
    %1 = arith.extui %0 : i1 to i32
    %c0_i32_0 = arith.constant 0 : i32
    %2 = arith.cmpi ne, %1, %c0_i32_0 : i32
    scf.if %2 {
      %c0_103 = arith.constant 0 : index
      %c0_104 = arith.constant 0 : index
      %c0_105 = arith.constant 0 : index
      %261 = vector.load %arg3[%c0_103, %c0_104, %c0_105] : memref<1x8x32xf32, #tpu.memory_space<vmem>>, vector<1x8x32xf32>
      %262 = vector.shape_cast %261 : vector<1x8x32xf32> to vector<8x32xf32>
      %c0_106 = arith.constant 0 : index
      %c0_107 = arith.constant 0 : index
      %263 = vector.load %arg5[%c0_106, %c0_107] : memref<1x32xf32, #tpu.memory_space<vmem>>, vector<1x32xf32>
      %c0_108 = arith.constant 0 : index
      %c0_109 = arith.constant 0 : index
      %264 = vector.load %arg6[%c0_108, %c0_109] : memref<1x32xf32, #tpu.memory_space<vmem>>, vector<1x32xf32>
      %cst_110 = arith.constant dense<0.000000e+00> : vector<8xf32>
      %265 = vector.multi_reduction <add>, %262, %cst_110 [1] : vector<8x32xf32> to vector<8xf32>
      %266 = vector.shape_cast %265 : vector<8xf32> to vector<8x1xf32>
      %cst_111 = arith.constant 3.200000e+01 : f32
      %267 = vector.broadcast %cst_111 : f32 to vector<8x1xf32>
      %268 = arith.divf %266, %267 : vector<8x1xf32>
      %269 = vector.broadcast %268 : vector<8x1xf32> to vector<8x32xf32>
      %270 = arith.subf %262, %269 : vector<8x32xf32>
      %271 = arith.mulf %270, %270 : vector<8x32xf32>
      %cst_112 = arith.constant dense<0.000000e+00> : vector<8xf32>
      %272 = vector.multi_reduction <add>, %271, %cst_112 [1] : vector<8x32xf32> to vector<8xf32>
      %273 = vector.shape_cast %272 : vector<8xf32> to vector<8x1xf32>
      %cst_113 = arith.constant 3.200000e+01 : f32
      %274 = vector.broadcast %cst_113 : f32 to vector<8x1xf32>
      %275 = arith.divf %273, %274 : vector<8x1xf32>
      %276 = vector.broadcast %268 : vector<8x1xf32> to vector<8x32xf32>
      %277 = arith.subf %262, %276 : vector<8x32xf32>
      %cst_114 = arith.constant 9.99999974E-6 : f32
      %278 = vector.broadcast %cst_114 : f32 to vector<8x1xf32>
      %279 = arith.addf %275, %278 : vector<8x1xf32>
      %280 = math.rsqrt %279 : vector<8x1xf32>
      %281 = vector.broadcast %280 : vector<8x1xf32> to vector<8x32xf32>
      %282 = arith.mulf %277, %281 : vector<8x32xf32>
      %283 = vector.broadcast %263 : vector<1x32xf32> to vector<8x32xf32>
      %284 = arith.mulf %282, %283 : vector<8x32xf32>
      %285 = vector.broadcast %264 : vector<1x32xf32> to vector<8x32xf32>
      %286 = arith.addf %284, %285 : vector<8x32xf32>
      %287 = arith.truncf %286 : vector<8x32xf32> to vector<8x32xbf16>
      %c0_115 = arith.constant 0 : index
      %c0_116 = arith.constant 0 : index
      %288 = vector.load %arg8[%c0_115, %c0_116] : memref<32x32xbf16, #tpu.memory_space<vmem>>, vector<32x32xbf16>
      %cst_117 = arith.constant dense<0.000000e+00> : vector<8x32xf32>
      %289 = tpu.matmul %287, %288, %cst_117 {dimension_numbers = #tpu.dot_dimension_numbers<[1], [0], [0], [1], [0, 0, 1, 1], [], []>} : vector<8x32xbf16>, vector<32x32xbf16>, vector<8x32xf32> -> vector<8x32xf32>
      %290 = arith.truncf %289 : vector<8x32xf32> to vector<8x32xbf16>
      %c0_118 = arith.constant 0 : index
      %c0_119 = arith.constant 0 : index
      %291 = vector.load %arg26[%c0_118, %c0_119] : memref<8x32xbf16, #tpu.memory_space<vmem>>, vector<8x32xbf16>
      tpu.vector_store %arg26[%c0_118, %c0_119], %290 {strides = array<i32>} : memref<8x32xbf16, #tpu.memory_space<vmem>>, vector<8x32xbf16>,
      %c0_120 = arith.constant 0 : index
      %c0_121 = arith.constant 0 : index
      %292 = vector.load %arg9[%c0_120, %c0_121] : memref<32x32xbf16, #tpu.memory_space<vmem>>, vector<32x32xbf16>
      %cst_122 = arith.constant dense<0.000000e+00> : vector<8x32xf32>
      %293 = tpu.matmul %287, %292, %cst_122 {dimension_numbers = #tpu.dot_dimension_numbers<[1], [0], [0], [1], [0, 0, 1, 1], [], []>} : vector<8x32xbf16>, vector<32x32xbf16>, vector<8x32xf32> -> vector<8x32xf32>
      %294 = arith.truncf %293 : vector<8x32xf32> to vector<8x32xbf16>
      %c0_123 = arith.constant 0 : index
      %c0_124 = arith.constant 0 : index
      %295 = vector.load %arg27[%c0_123, %c0_124] : memref<8x32xbf16, #tpu.memory_space<vmem>>, vector<8x32xbf16>
      tpu.vector_store %arg27[%c0_123, %c0_124], %294 {strides = array<i32>} : memref<8x32xbf16, #tpu.memory_space<vmem>>, vector<8x32xbf16>,
      %c0_125 = arith.constant 0 : index
      %c0_126 = arith.constant 0 : index
      %c0_127 = arith.constant 0 : index
      %296 = vector.load %arg4[%c0_125, %c0_126, %c0_127] : memref<1x8x16xf32, #tpu.memory_space<vmem>>, vector<1x8x16xf32>
      %297 = vector.shape_cast %296 : vector<1x8x16xf32> to vector<8x16xf32>
      %298 = arith.truncf %297 : vector<8x16xf32> to vector<8x16xbf16>
      %c0_128 = arith.constant 0 : index
      %c0_129 = arith.constant 0 : index
      %299 = vector.load %arg15[%c0_128, %c0_129] : memref<16x32xbf16, #tpu.memory_space<vmem>>, vector<16x32xbf16>
      %cst_130 = arith.constant dense<0.000000e+00> : vector<8x32xf32>
      %300 = tpu.matmul %298, %299, %cst_130 {dimension_numbers = #tpu.dot_dimension_numbers<[1], [0], [0], [1], [0, 0, 1, 1], [], []>} : vector<8x16xbf16>, vector<16x32xbf16>, vector<8x32xf32> -> vector<8x32xf32>
      %301 = arith.truncf %300 : vector<8x32xf32> to vector<8x32xbf16>
      %c0_131 = arith.constant 0 : index
      %c0_132 = arith.constant 0 : index
      %302 = vector.load %arg28[%c0_131, %c0_132] : memref<8x32xbf16, #tpu.memory_space<vmem>>, vector<8x32xbf16>
      tpu.vector_store %arg28[%c0_131, %c0_132], %301 {strides = array<i32>} : memref<8x32xbf16, #tpu.memory_space<vmem>>, vector<8x32xbf16>,
      %c0_133 = arith.constant 0 : index
      %c0_134 = arith.constant 0 : index
      %303 = vector.load %arg16[%c0_133, %c0_134] : memref<16x32xbf16, #tpu.memory_space<vmem>>, vector<16x32xbf16>
      %cst_135 = arith.constant dense<0.000000e+00> : vector<8x32xf32>
      %304 = tpu.matmul %298, %303, %cst_135 {dimension_numbers = #tpu.dot_dimension_numbers<[1], [0], [0], [1], [0, 0, 1, 1], [], []>} : vector<8x16xbf16>, vector<16x32xbf16>, vector<8x32xf32> -> vector<8x32xf32>
      %305 = arith.truncf %304 : vector<8x32xf32> to vector<8x32xbf16>
      %c0_136 = arith.constant 0 : index
      %c0_137 = arith.constant 0 : index
      %306 = vector.load %arg29[%c0_136, %c0_137] : memref<8x32xbf16, #tpu.memory_space<vmem>>, vector<8x32xbf16>
      tpu.vector_store %arg29[%c0_136, %c0_137], %305 {strides = array<i32>} : memref<8x32xbf16, #tpu.memory_space<vmem>>, vector<8x32xbf16>,
    } else {
    }
    %c0 = arith.constant 0 : index
    %c0_1 = arith.constant 0 : index
    %c0_2 = arith.constant 0 : index
    %3 = vector.load %arg2[%c0, %c0_1, %c0_2] : memref<1x8x32xf32, #tpu.memory_space<vmem>>, vector<1x8x32xf32>
    %4 = vector.shape_cast %3 : vector<1x8x32xf32> to vector<8x32xf32>
    %c0_3 = arith.constant 0 : index
    %c0_4 = arith.constant 0 : index
    %5 = vector.load %arg5[%c0_3, %c0_4] : memref<1x32xf32, #tpu.memory_space<vmem>>, vector<1x32xf32>
    %c0_5 = arith.constant 0 : index
    %c0_6 = arith.constant 0 : index
    %6 = vector.load %arg6[%c0_5, %c0_6] : memref<1x32xf32, #tpu.memory_space<vmem>>, vector<1x32xf32>
    %cst = arith.constant dense<0.000000e+00> : vector<8xf32>
    %7 = vector.multi_reduction <add>, %4, %cst [1] : vector<8x32xf32> to vector<8xf32>
    %8 = vector.shape_cast %7 : vector<8xf32> to vector<8x1xf32>
    %cst_7 = arith.constant 3.200000e+01 : f32
    %9 = vector.broadcast %cst_7 : f32 to vector<8x1xf32>
    %10 = arith.divf %8, %9 : vector<8x1xf32>
    %11 = vector.broadcast %10 : vector<8x1xf32> to vector<8x32xf32>
    %12 = arith.subf %4, %11 : vector<8x32xf32>
    %13 = arith.mulf %12, %12 : vector<8x32xf32>
    %cst_8 = arith.constant dense<0.000000e+00> : vector<8xf32>
    %14 = vector.multi_reduction <add>, %13, %cst_8 [1] : vector<8x32xf32> to vector<8xf32>
    %15 = vector.shape_cast %14 : vector<8xf32> to vector<8x1xf32>
    %cst_9 = arith.constant 3.200000e+01 : f32
    %16 = vector.broadcast %cst_9 : f32 to vector<8x1xf32>
    %17 = arith.divf %15, %16 : vector<8x1xf32>
    %18 = vector.broadcast %10 : vector<8x1xf32> to vector<8x32xf32>
    %19 = arith.subf %4, %18 : vector<8x32xf32>
    %cst_10 = arith.constant 9.99999974E-6 : f32
    %20 = vector.broadcast %cst_10 : f32 to vector<8x1xf32>
    %21 = arith.addf %17, %20 : vector<8x1xf32>
    %22 = math.rsqrt %21 : vector<8x1xf32>
    %23 = vector.broadcast %22 : vector<8x1xf32> to vector<8x32xf32>
    %24 = arith.mulf %19, %23 : vector<8x32xf32>
    %25 = vector.broadcast %5 : vector<1x32xf32> to vector<8x32xf32>
    %26 = arith.mulf %24, %25 : vector<8x32xf32>
    %27 = vector.broadcast %6 : vector<1x32xf32> to vector<8x32xf32>
    %28 = arith.addf %26, %27 : vector<8x32xf32>
    %c0_11 = arith.constant 0 : index
    %c0_12 = arith.constant 0 : index
    %29 = vector.load %arg26[%c0_11, %c0_12] : memref<8x32xbf16, #tpu.memory_space<vmem>>, vector<8x32xbf16>
    %c0_13 = arith.constant 0 : index
    %c0_14 = arith.constant 0 : index
    %30 = vector.load %arg27[%c0_13, %c0_14] : memref<8x32xbf16, #tpu.memory_space<vmem>>, vector<8x32xbf16>
    %c0_15 = arith.constant 0 : index
    %c0_16 = arith.constant 0 : index
    %31 = vector.load %arg7[%c0_15, %c0_16] : memref<32x32xbf16, #tpu.memory_space<vmem>>, vector<32x32xbf16>
    %c0_17 = arith.constant 0 : index
    %c0_18 = arith.constant 0 : index
    %32 = vector.load %arg10[%c0_17, %c0_18] : memref<32x32xbf16, #tpu.memory_space<vmem>>, vector<32x32xbf16>
    %c0_19 = arith.constant 0 : index
    %c0_20 = arith.constant 0 : index
    %33 = vector.load %arg11[%c0_19, %c0_20] : memref<1x32xf32, #tpu.memory_space<vmem>>, vector<1x32xf32>
    %34 = arith.truncf %28 : vector<8x32xf32> to vector<8x32xbf16>
    %cst_21 = arith.constant dense<0.000000e+00> : vector<8x32xf32>
    %35 = tpu.matmul %34, %31, %cst_21 {dimension_numbers = #tpu.dot_dimension_numbers<[1], [0], [0], [1], [0, 0, 1, 1], [], []>} : vector<8x32xbf16>, vector<32x32xbf16>, vector<8x32xf32> -> vector<8x32xf32>
    %cst_22 = arith.constant 0.353553385 : f32
    %36 = vector.broadcast %cst_22 : f32 to vector<8x32xf32>
    %37 = arith.mulf %35, %36 : vector<8x32xf32>
    %38 = arith.truncf %37 : vector<8x32xf32> to vector<8x32xbf16>
    %39 = vector.extract_strided_slice %38 {offsets = [0, 0], sizes = [8, 8], strides = [1, 1]} : vector<8x32xbf16> to vector<8x8xbf16>
    %40 = vector.extract_strided_slice %29 {offsets = [0, 0], sizes = [8, 8], strides = [1, 1]} : vector<8x32xbf16> to vector<8x8xbf16>
    %41 = vector.extract_strided_slice %30 {offsets = [0, 0], sizes = [8, 8], strides = [1, 1]} : vector<8x32xbf16> to vector<8x8xbf16>
    %cst_23 = arith.constant dense<0.000000e+00> : vector<8x8xf32>
    %42 = tpu.matmul %39, %40, %cst_23 {dimension_numbers = #tpu.dot_dimension_numbers<[1], [1], [0], [0], [0, 0, 1, 0], [], []>} : vector<8x8xbf16>, vector<8x8xbf16>, vector<8x8xf32> -> vector<8x8xf32>
    %cst_24 = arith.constant dense<0xFF800000> : vector<8xf32>
    %43 = vector.multi_reduction <maximumf>, %42, %cst_24 [1] : vector<8x8xf32> to vector<8xf32>
    %44 = vector.shape_cast %43 : vector<8xf32> to vector<8x1xf32>
    %45 = vector.broadcast %44 : vector<8x1xf32> to vector<8x8xf32>
    %46 = arith.subf %42, %45 : vector<8x8xf32>
    %47 = math.exp %46 : vector<8x8xf32>
    %cst_25 = arith.constant dense<0.000000e+00> : vector<8xf32>
    %48 = vector.multi_reduction <add>, %47, %cst_25 [1] : vector<8x8xf32> to vector<8xf32>
    %49 = vector.shape_cast %48 : vector<8xf32> to vector<8x1xf32>
    %50 = tpu.reciprocal %49 {approx = true} : vector<8x1xf32> -> vector<8x1xf32>
    %51 = vector.broadcast %50 : vector<8x1xf32> to vector<8x8xf32>
    %52 = arith.mulf %47, %51 : vector<8x8xf32>
    %53 = arith.truncf %52 : vector<8x8xf32> to vector<8x8xbf16>
    %cst_26 = arith.constant dense<0.000000e+00> : vector<8x8xf32>
    %54 = tpu.matmul %53, %41, %cst_26 {dimension_numbers = #tpu.dot_dimension_numbers<[1], [0], [0], [1], [0, 0, 1, 1], [], []>} : vector<8x8xbf16>, vector<8x8xbf16>, vector<8x8xf32> -> vector<8x8xf32>
    %55 = vector.extract_strided_slice %38 {offsets = [0, 8], sizes = [8, 8], strides = [1, 1]} : vector<8x32xbf16> to vector<8x8xbf16>
    %56 = vector.extract_strided_slice %29 {offsets = [0, 8], sizes = [8, 8], strides = [1, 1]} : vector<8x32xbf16> to vector<8x8xbf16>
    %57 = vector.extract_strided_slice %30 {offsets = [0, 8], sizes = [8, 8], strides = [1, 1]} : vector<8x32xbf16> to vector<8x8xbf16>
    %cst_27 = arith.constant dense<0.000000e+00> : vector<8x8xf32>
    %58 = tpu.matmul %55, %56, %cst_27 {dimension_numbers = #tpu.dot_dimension_numbers<[1], [1], [0], [0], [0, 0, 1, 0], [], []>} : vector<8x8xbf16>, vector<8x8xbf16>, vector<8x8xf32> -> vector<8x8xf32>
    %cst_28 = arith.constant dense<0xFF800000> : vector<8xf32>
    %59 = vector.multi_reduction <maximumf>, %58, %cst_28 [1] : vector<8x8xf32> to vector<8xf32>
    %60 = vector.shape_cast %59 : vector<8xf32> to vector<8x1xf32>
    %61 = vector.broadcast %60 : vector<8x1xf32> to vector<8x8xf32>
    %62 = arith.subf %58, %61 : vector<8x8xf32>
    %63 = math.exp %62 : vector<8x8xf32>
    %cst_29 = arith.constant dense<0.000000e+00> : vector<8xf32>
    %64 = vector.multi_reduction <add>, %63, %cst_29 [1] : vector<8x8xf32> to vector<8xf32>
    %65 = vector.shape_cast %64 : vector<8xf32> to vector<8x1xf32>
    %66 = tpu.reciprocal %65 {approx = true} : vector<8x1xf32> -> vector<8x1xf32>
    %67 = vector.broadcast %66 : vector<8x1xf32> to vector<8x8xf32>
    %68 = arith.mulf %63, %67 : vector<8x8xf32>
    %69 = arith.truncf %68 : vector<8x8xf32> to vector<8x8xbf16>
    %cst_30 = arith.constant dense<0.000000e+00> : vector<8x8xf32>
    %70 = tpu.matmul %69, %57, %cst_30 {dimension_numbers = #tpu.dot_dimension_numbers<[1], [0], [0], [1], [0, 0, 1, 1], [], []>} : vector<8x8xbf16>, vector<8x8xbf16>, vector<8x8xf32> -> vector<8x8xf32>
    %71 = vector.extract_strided_slice %38 {offsets = [0, 16], sizes = [8, 8], strides = [1, 1]} : vector<8x32xbf16> to vector<8x8xbf16>
    %72 = vector.extract_strided_slice %29 {offsets = [0, 16], sizes = [8, 8], strides = [1, 1]} : vector<8x32xbf16> to vector<8x8xbf16>
    %73 = vector.extract_strided_slice %30 {offsets = [0, 16], sizes = [8, 8], strides = [1, 1]} : vector<8x32xbf16> to vector<8x8xbf16>
    %cst_31 = arith.constant dense<0.000000e+00> : vector<8x8xf32>
    %74 = tpu.matmul %71, %72, %cst_31 {dimension_numbers = #tpu.dot_dimension_numbers<[1], [1], [0], [0], [0, 0, 1, 0], [], []>} : vector<8x8xbf16>, vector<8x8xbf16>, vector<8x8xf32> -> vector<8x8xf32>
    %cst_32 = arith.constant dense<0xFF800000> : vector<8xf32>
    %75 = vector.multi_reduction <maximumf>, %74, %cst_32 [1] : vector<8x8xf32> to vector<8xf32>
    %76 = vector.shape_cast %75 : vector<8xf32> to vector<8x1xf32>
    %77 = vector.broadcast %76 : vector<8x1xf32> to vector<8x8xf32>
    %78 = arith.subf %74, %77 : vector<8x8xf32>
    %79 = math.exp %78 : vector<8x8xf32>
    %cst_33 = arith.constant dense<0.000000e+00> : vector<8xf32>
    %80 = vector.multi_reduction <add>, %79, %cst_33 [1] : vector<8x8xf32> to vector<8xf32>
    %81 = vector.shape_cast %80 : vector<8xf32> to vector<8x1xf32>
    %82 = tpu.reciprocal %81 {approx = true} : vector<8x1xf32> -> vector<8x1xf32>
    %83 = vector.broadcast %82 : vector<8x1xf32> to vector<8x8xf32>
    %84 = arith.mulf %79, %83 : vector<8x8xf32>
    %85 = arith.truncf %84 : vector<8x8xf32> to vector<8x8xbf16>
    %cst_34 = arith.constant dense<0.000000e+00> : vector<8x8xf32>
    %86 = tpu.matmul %85, %73, %cst_34 {dimension_numbers = #tpu.dot_dimension_numbers<[1], [0], [0], [1], [0, 0, 1, 1], [], []>} : vector<8x8xbf16>, vector<8x8xbf16>, vector<8x8xf32> -> vector<8x8xf32>
    %87 = vector.extract_strided_slice %38 {offsets = [0, 24], sizes = [8, 8], strides = [1, 1]} : vector<8x32xbf16> to vector<8x8xbf16>
    %88 = vector.extract_strided_slice %29 {offsets = [0, 24], sizes = [8, 8], strides = [1, 1]} : vector<8x32xbf16> to vector<8x8xbf16>
    %89 = vector.extract_strided_slice %30 {offsets = [0, 24], sizes = [8, 8], strides = [1, 1]} : vector<8x32xbf16> to vector<8x8xbf16>
    %cst_35 = arith.constant dense<0.000000e+00> : vector<8x8xf32>
    %90 = tpu.matmul %87, %88, %cst_35 {dimension_numbers = #tpu.dot_dimension_numbers<[1], [1], [0], [0], [0, 0, 1, 0], [], []>} : vector<8x8xbf16>, vector<8x8xbf16>, vector<8x8xf32> -> vector<8x8xf32>
    %cst_36 = arith.constant dense<0xFF800000> : vector<8xf32>
    %91 = vector.multi_reduction <maximumf>, %90, %cst_36 [1] : vector<8x8xf32> to vector<8xf32>
    %92 = vector.shape_cast %91 : vector<8xf32> to vector<8x1xf32>
    %93 = vector.broadcast %92 : vector<8x1xf32> to vector<8x8xf32>
    %94 = arith.subf %90, %93 : vector<8x8xf32>
    %95 = math.exp %94 : vector<8x8xf32>
    %cst_37 = arith.constant dense<0.000000e+00> : vector<8xf32>
    %96 = vector.multi_reduction <add>, %95, %cst_37 [1] : vector<8x8xf32> to vector<8xf32>
    %97 = vector.shape_cast %96 : vector<8xf32> to vector<8x1xf32>
    %98 = tpu.reciprocal %97 {approx = true} : vector<8x1xf32> -> vector<8x1xf32>
    %99 = vector.broadcast %98 : vector<8x1xf32> to vector<8x8xf32>
    %100 = arith.mulf %95, %99 : vector<8x8xf32>
    %101 = arith.truncf %100 : vector<8x8xf32> to vector<8x8xbf16>
    %cst_38 = arith.constant dense<0.000000e+00> : vector<8x8xf32>
    %102 = tpu.matmul %101, %89, %cst_38 {dimension_numbers = #tpu.dot_dimension_numbers<[1], [0], [0], [1], [0, 0, 1, 1], [], []>} : vector<8x8xbf16>, vector<8x8xbf16>, vector<8x8xf32> -> vector<8x8xf32>
    %103 = tpu.concatenate %54, %70, %86, %102 in 1 : vector<8x8xf32>, vector<8x8xf32>, vector<8x8xf32>, vector<8x8xf32> -> vector<8x32xf32>
    %104 = arith.truncf %103 : vector<8x32xf32> to vector<8x32xbf16>
    %cst_39 = arith.constant dense<0.000000e+00> : vector<8x32xf32>
    %105 = tpu.matmul %104, %32, %cst_39 {dimension_numbers = #tpu.dot_dimension_numbers<[1], [0], [0], [1], [0, 0, 1, 1], [], []>} : vector<8x32xbf16>, vector<32x32xbf16>, vector<8x32xf32> -> vector<8x32xf32>
    %106 = vector.broadcast %33 : vector<1x32xf32> to vector<8x32xf32>
    %107 = arith.addf %105, %106 : vector<8x32xf32>
    %108 = arith.addf %4, %107 : vector<8x32xf32>
    %c0_40 = arith.constant 0 : index
    %c0_41 = arith.constant 0 : index
    %109 = vector.load %arg12[%c0_40, %c0_41] : memref<1x32xf32, #tpu.memory_space<vmem>>, vector<1x32xf32>
    %c0_42 = arith.constant 0 : index
    %c0_43 = arith.constant 0 : index
    %110 = vector.load %arg13[%c0_42, %c0_43] : memref<1x32xf32, #tpu.memory_space<vmem>>, vector<1x32xf32>
    %cst_44 = arith.constant dense<0.000000e+00> : vector<8xf32>
    %111 = vector.multi_reduction <add>, %108, %cst_44 [1] : vector<8x32xf32> to vector<8xf32>
    %112 = vector.shape_cast %111 : vector<8xf32> to vector<8x1xf32>
    %cst_45 = arith.constant 3.200000e+01 : f32
    %113 = vector.broadcast %cst_45 : f32 to vector<8x1xf32>
    %114 = arith.divf %112, %113 : vector<8x1xf32>
    %115 = vector.broadcast %114 : vector<8x1xf32> to vector<8x32xf32>
    %116 = arith.subf %108, %115 : vector<8x32xf32>
    %117 = arith.mulf %116, %116 : vector<8x32xf32>
    %cst_46 = arith.constant dense<0.000000e+00> : vector<8xf32>
    %118 = vector.multi_reduction <add>, %117, %cst_46 [1] : vector<8x32xf32> to vector<8xf32>
    %119 = vector.shape_cast %118 : vector<8xf32> to vector<8x1xf32>
    %cst_47 = arith.constant 3.200000e+01 : f32
    %120 = vector.broadcast %cst_47 : f32 to vector<8x1xf32>
    %121 = arith.divf %119, %120 : vector<8x1xf32>
    %122 = vector.broadcast %114 : vector<8x1xf32> to vector<8x32xf32>
    %123 = arith.subf %108, %122 : vector<8x32xf32>
    %cst_48 = arith.constant 9.99999974E-6 : f32
    %124 = vector.broadcast %cst_48 : f32 to vector<8x1xf32>
    %125 = arith.addf %121, %124 : vector<8x1xf32>
    %126 = math.rsqrt %125 : vector<8x1xf32>
    %127 = vector.broadcast %126 : vector<8x1xf32> to vector<8x32xf32>
    %128 = arith.mulf %123, %127 : vector<8x32xf32>
    %129 = vector.broadcast %109 : vector<1x32xf32> to vector<8x32xf32>
    %130 = arith.mulf %128, %129 : vector<8x32xf32>
    %131 = vector.broadcast %110 : vector<1x32xf32> to vector<8x32xf32>
    %132 = arith.addf %130, %131 : vector<8x32xf32>
    %c0_49 = arith.constant 0 : index
    %c0_50 = arith.constant 0 : index
    %133 = vector.load %arg28[%c0_49, %c0_50] : memref<8x32xbf16, #tpu.memory_space<vmem>>, vector<8x32xbf16>
    %c0_51 = arith.constant 0 : index
    %c0_52 = arith.constant 0 : index
    %134 = vector.load %arg29[%c0_51, %c0_52] : memref<8x32xbf16, #tpu.memory_space<vmem>>, vector<8x32xbf16>
    %c0_53 = arith.constant 0 : index
    %c0_54 = arith.constant 0 : index
    %135 = vector.load %arg14[%c0_53, %c0_54] : memref<32x32xbf16, #tpu.memory_space<vmem>>, vector<32x32xbf16>
    %c0_55 = arith.constant 0 : index
    %c0_56 = arith.constant 0 : index
    %136 = vector.load %arg17[%c0_55, %c0_56] : memref<32x32xbf16, #tpu.memory_space<vmem>>, vector<32x32xbf16>
    %c0_57 = arith.constant 0 : index
    %c0_58 = arith.constant 0 : index
    %137 = vector.load %arg18[%c0_57, %c0_58] : memref<1x32xf32, #tpu.memory_space<vmem>>, vector<1x32xf32>
    %138 = arith.truncf %132 : vector<8x32xf32> to vector<8x32xbf16>
    %cst_59 = arith.constant dense<0.000000e+00> : vector<8x32xf32>
    %139 = tpu.matmul %138, %135, %cst_59 {dimension_numbers = #tpu.dot_dimension_numbers<[1], [0], [0], [1], [0, 0, 1, 1], [], []>} : vector<8x32xbf16>, vector<32x32xbf16>, vector<8x32xf32> -> vector<8x32xf32>
    %cst_60 = arith.constant 0.353553385 : f32
    %140 = vector.broadcast %cst_60 : f32 to vector<8x32xf32>
    %141 = arith.mulf %139, %140 : vector<8x32xf32>
    %142 = arith.truncf %141 : vector<8x32xf32> to vector<8x32xbf16>
    %143 = vector.extract_strided_slice %142 {offsets = [0, 0], sizes = [8, 8], strides = [1, 1]} : vector<8x32xbf16> to vector<8x8xbf16>
    %144 = vector.extract_strided_slice %133 {offsets = [0, 0], sizes = [8, 8], strides = [1, 1]} : vector<8x32xbf16> to vector<8x8xbf16>
    %145 = vector.extract_strided_slice %134 {offsets = [0, 0], sizes = [8, 8], strides = [1, 1]} : vector<8x32xbf16> to vector<8x8xbf16>
    %cst_61 = arith.constant dense<0.000000e+00> : vector<8x8xf32>
    %146 = tpu.matmul %143, %144, %cst_61 {dimension_numbers = #tpu.dot_dimension_numbers<[1], [1], [0], [0], [0, 0, 1, 0], [], []>} : vector<8x8xbf16>, vector<8x8xbf16>, vector<8x8xf32> -> vector<8x8xf32>
    %cst_62 = arith.constant dense<0xFF800000> : vector<8xf32>
    %147 = vector.multi_reduction <maximumf>, %146, %cst_62 [1] : vector<8x8xf32> to vector<8xf32>
    %148 = vector.shape_cast %147 : vector<8xf32> to vector<8x1xf32>
    %149 = vector.broadcast %148 : vector<8x1xf32> to vector<8x8xf32>
    %150 = arith.subf %146, %149 : vector<8x8xf32>
    %151 = math.exp %150 : vector<8x8xf32>
    %cst_63 = arith.constant dense<0.000000e+00> : vector<8xf32>
    %152 = vector.multi_reduction <add>, %151, %cst_63 [1] : vector<8x8xf32> to vector<8xf32>
    %153 = vector.shape_cast %152 : vector<8xf32> to vector<8x1xf32>
    %154 = tpu.reciprocal %153 {approx = true} : vector<8x1xf32> -> vector<8x1xf32>
    %155 = vector.broadcast %154 : vector<8x1xf32> to vector<8x8xf32>
    %156 = arith.mulf %151, %155 : vector<8x8xf32>
    %157 = arith.truncf %156 : vector<8x8xf32> to vector<8x8xbf16>
    %cst_64 = arith.constant dense<0.000000e+00> : vector<8x8xf32>
    %158 = tpu.matmul %157, %145, %cst_64 {dimension_numbers = #tpu.dot_dimension_numbers<[1], [0], [0], [1], [0, 0, 1, 1], [], []>} : vector<8x8xbf16>, vector<8x8xbf16>, vector<8x8xf32> -> vector<8x8xf32>
    %159 = vector.extract_strided_slice %142 {offsets = [0, 8], sizes = [8, 8], strides = [1, 1]} : vector<8x32xbf16> to vector<8x8xbf16>
    %160 = vector.extract_strided_slice %133 {offsets = [0, 8], sizes = [8, 8], strides = [1, 1]} : vector<8x32xbf16> to vector<8x8xbf16>
    %161 = vector.extract_strided_slice %134 {offsets = [0, 8], sizes = [8, 8], strides = [1, 1]} : vector<8x32xbf16> to vector<8x8xbf16>
    %cst_65 = arith.constant dense<0.000000e+00> : vector<8x8xf32>
    %162 = tpu.matmul %159, %160, %cst_65 {dimension_numbers = #tpu.dot_dimension_numbers<[1], [1], [0], [0], [0, 0, 1, 0], [], []>} : vector<8x8xbf16>, vector<8x8xbf16>, vector<8x8xf32> -> vector<8x8xf32>
    %cst_66 = arith.constant dense<0xFF800000> : vector<8xf32>
    %163 = vector.multi_reduction <maximumf>, %162, %cst_66 [1] : vector<8x8xf32> to vector<8xf32>
    %164 = vector.shape_cast %163 : vector<8xf32> to vector<8x1xf32>
    %165 = vector.broadcast %164 : vector<8x1xf32> to vector<8x8xf32>
    %166 = arith.subf %162, %165 : vector<8x8xf32>
    %167 = math.exp %166 : vector<8x8xf32>
    %cst_67 = arith.constant dense<0.000000e+00> : vector<8xf32>
    %168 = vector.multi_reduction <add>, %167, %cst_67 [1] : vector<8x8xf32> to vector<8xf32>
    %169 = vector.shape_cast %168 : vector<8xf32> to vector<8x1xf32>
    %170 = tpu.reciprocal %169 {approx = true} : vector<8x1xf32> -> vector<8x1xf32>
    %171 = vector.broadcast %170 : vector<8x1xf32> to vector<8x8xf32>
    %172 = arith.mulf %167, %171 : vector<8x8xf32>
    %173 = arith.truncf %172 : vector<8x8xf32> to vector<8x8xbf16>
    %cst_68 = arith.constant dense<0.000000e+00> : vector<8x8xf32>
    %174 = tpu.matmul %173, %161, %cst_68 {dimension_numbers = #tpu.dot_dimension_numbers<[1], [0], [0], [1], [0, 0, 1, 1], [], []>} : vector<8x8xbf16>, vector<8x8xbf16>, vector<8x8xf32> -> vector<8x8xf32>
    %175 = vector.extract_strided_slice %142 {offsets = [0, 16], sizes = [8, 8], strides = [1, 1]} : vector<8x32xbf16> to vector<8x8xbf16>
    %176 = vector.extract_strided_slice %133 {offsets = [0, 16], sizes = [8, 8], strides = [1, 1]} : vector<8x32xbf16> to vector<8x8xbf16>
    %177 = vector.extract_strided_slice %134 {offsets = [0, 16], sizes = [8, 8], strides = [1, 1]} : vector<8x32xbf16> to vector<8x8xbf16>
    %cst_69 = arith.constant dense<0.000000e+00> : vector<8x8xf32>
    %178 = tpu.matmul %175, %176, %cst_69 {dimension_numbers = #tpu.dot_dimension_numbers<[1], [1], [0], [0], [0, 0, 1, 0], [], []>} : vector<8x8xbf16>, vector<8x8xbf16>, vector<8x8xf32> -> vector<8x8xf32>
    %cst_70 = arith.constant dense<0xFF800000> : vector<8xf32>
    %179 = vector.multi_reduction <maximumf>, %178, %cst_70 [1] : vector<8x8xf32> to vector<8xf32>
    %180 = vector.shape_cast %179 : vector<8xf32> to vector<8x1xf32>
    %181 = vector.broadcast %180 : vector<8x1xf32> to vector<8x8xf32>
    %182 = arith.subf %178, %181 : vector<8x8xf32>
    %183 = math.exp %182 : vector<8x8xf32>
    %cst_71 = arith.constant dense<0.000000e+00> : vector<8xf32>
    %184 = vector.multi_reduction <add>, %183, %cst_71 [1] : vector<8x8xf32> to vector<8xf32>
    %185 = vector.shape_cast %184 : vector<8xf32> to vector<8x1xf32>
    %186 = tpu.reciprocal %185 {approx = true} : vector<8x1xf32> -> vector<8x1xf32>
    %187 = vector.broadcast %186 : vector<8x1xf32> to vector<8x8xf32>
    %188 = arith.mulf %183, %187 : vector<8x8xf32>
    %189 = arith.truncf %188 : vector<8x8xf32> to vector<8x8xbf16>
    %cst_72 = arith.constant dense<0.000000e+00> : vector<8x8xf32>
    %190 = tpu.matmul %189, %177, %cst_72 {dimension_numbers = #tpu.dot_dimension_numbers<[1], [0], [0], [1], [0, 0, 1, 1], [], []>} : vector<8x8xbf16>, vector<8x8xbf16>, vector<8x8xf32> -> vector<8x8xf32>
    %191 = vector.extract_strided_slice %142 {offsets = [0, 24], sizes = [8, 8], strides = [1, 1]} : vector<8x32xbf16> to vector<8x8xbf16>
    %192 = vector.extract_strided_slice %133 {offsets = [0, 24], sizes = [8, 8], strides = [1, 1]} : vector<8x32xbf16> to vector<8x8xbf16>
    %193 = vector.extract_strided_slice %134 {offsets = [0, 24], sizes = [8, 8], strides = [1, 1]} : vector<8x32xbf16> to vector<8x8xbf16>
    %cst_73 = arith.constant dense<0.000000e+00> : vector<8x8xf32>
    %194 = tpu.matmul %191, %192, %cst_73 {dimension_numbers = #tpu.dot_dimension_numbers<[1], [1], [0], [0], [0, 0, 1, 0], [], []>} : vector<8x8xbf16>, vector<8x8xbf16>, vector<8x8xf32> -> vector<8x8xf32>
    %cst_74 = arith.constant dense<0xFF800000> : vector<8xf32>
    %195 = vector.multi_reduction <maximumf>, %194, %cst_74 [1] : vector<8x8xf32> to vector<8xf32>
    %196 = vector.shape_cast %195 : vector<8xf32> to vector<8x1xf32>
    %197 = vector.broadcast %196 : vector<8x1xf32> to vector<8x8xf32>
    %198 = arith.subf %194, %197 : vector<8x8xf32>
    %199 = math.exp %198 : vector<8x8xf32>
    %cst_75 = arith.constant dense<0.000000e+00> : vector<8xf32>
    %200 = vector.multi_reduction <add>, %199, %cst_75 [1] : vector<8x8xf32> to vector<8xf32>
    %201 = vector.shape_cast %200 : vector<8xf32> to vector<8x1xf32>
    %202 = tpu.reciprocal %201 {approx = true} : vector<8x1xf32> -> vector<8x1xf32>
    %203 = vector.broadcast %202 : vector<8x1xf32> to vector<8x8xf32>
    %204 = arith.mulf %199, %203 : vector<8x8xf32>
    %205 = arith.truncf %204 : vector<8x8xf32> to vector<8x8xbf16>
    %cst_76 = arith.constant dense<0.000000e+00> : vector<8x8xf32>
    %206 = tpu.matmul %205, %193, %cst_76 {dimension_numbers = #tpu.dot_dimension_numbers<[1], [0], [0], [1], [0, 0, 1, 1], [], []>} : vector<8x8xbf16>, vector<8x8xbf16>, vector<8x8xf32> -> vector<8x8xf32>
    %207 = tpu.concatenate %158, %174, %190, %206 in 1 : vector<8x8xf32>, vector<8x8xf32>, vector<8x8xf32>, vector<8x8xf32> -> vector<8x32xf32>
    %208 = arith.truncf %207 : vector<8x32xf32> to vector<8x32xbf16>
    %cst_77 = arith.constant dense<0.000000e+00> : vector<8x32xf32>
    %209 = tpu.matmul %208, %136, %cst_77 {dimension_numbers = #tpu.dot_dimension_numbers<[1], [0], [0], [1], [0, 0, 1, 1], [], []>} : vector<8x32xbf16>, vector<32x32xbf16>, vector<8x32xf32> -> vector<8x32xf32>
    %210 = vector.broadcast %137 : vector<1x32xf32> to vector<8x32xf32>
    %211 = arith.addf %209, %210 : vector<8x32xf32>
    %212 = arith.addf %108, %211 : vector<8x32xf32>
    %c0_78 = arith.constant 0 : index
    %c0_79 = arith.constant 0 : index
    %213 = vector.load %arg19[%c0_78, %c0_79] : memref<1x32xf32, #tpu.memory_space<vmem>>, vector<1x32xf32>
    %c0_80 = arith.constant 0 : index
    %c0_81 = arith.constant 0 : index
    %214 = vector.load %arg20[%c0_80, %c0_81] : memref<1x32xf32, #tpu.memory_space<vmem>>, vector<1x32xf32>
    %cst_82 = arith.constant dense<0.000000e+00> : vector<8xf32>
    %215 = vector.multi_reduction <add>, %212, %cst_82 [1] : vector<8x32xf32> to vector<8xf32>
    %216 = vector.shape_cast %215 : vector<8xf32> to vector<8x1xf32>
    %cst_83 = arith.constant 3.200000e+01 : f32
    %217 = vector.broadcast %cst_83 : f32 to vector<8x1xf32>
    %218 = arith.divf %216, %217 : vector<8x1xf32>
    %219 = vector.broadcast %218 : vector<8x1xf32> to vector<8x32xf32>
    %220 = arith.subf %212, %219 : vector<8x32xf32>
    %221 = arith.mulf %220, %220 : vector<8x32xf32>
    %cst_84 = arith.constant dense<0.000000e+00> : vector<8xf32>
    %222 = vector.multi_reduction <add>, %221, %cst_84 [1] : vector<8x32xf32> to vector<8xf32>
    %223 = vector.shape_cast %222 : vector<8xf32> to vector<8x1xf32>
    %cst_85 = arith.constant 3.200000e+01 : f32
    %224 = vector.broadcast %cst_85 : f32 to vector<8x1xf32>
    %225 = arith.divf %223, %224 : vector<8x1xf32>
    %226 = vector.broadcast %218 : vector<8x1xf32> to vector<8x32xf32>
    %227 = arith.subf %212, %226 : vector<8x32xf32>
    %cst_86 = arith.constant 9.99999974E-6 : f32
    %228 = vector.broadcast %cst_86 : f32 to vector<8x1xf32>
    %229 = arith.addf %225, %228 : vector<8x1xf32>
    %230 = math.rsqrt %229 : vector<8x1xf32>
    %231 = vector.broadcast %230 : vector<8x1xf32> to vector<8x32xf32>
    %232 = arith.mulf %227, %231 : vector<8x32xf32>
    %233 = vector.broadcast %213 : vector<1x32xf32> to vector<8x32xf32>
    %234 = arith.mulf %232, %233 : vector<8x32xf32>
    %235 = vector.broadcast %214 : vector<1x32xf32> to vector<8x32xf32>
    %236 = arith.addf %234, %235 : vector<8x32xf32>
    %237 = arith.truncf %236 : vector<8x32xf32> to vector<8x32xbf16>
    %c0_87 = arith.constant 0 : index
    %c0_88 = arith.constant 0 : index
    %238 = vector.load %arg21[%c0_87, %c0_88] : memref<32x128xbf16, #tpu.memory_space<vmem>>, vector<32x128xbf16>
    %cst_89 = arith.constant dense<0.000000e+00> : vector<8x128xf32>
    %239 = tpu.matmul %237, %238, %cst_89 {dimension_numbers = #tpu.dot_dimension_numbers<[1], [0], [0], [1], [0, 0, 1, 1], [], []>} : vector<8x32xbf16>, vector<32x128xbf16>, vector<8x128xf32> -> vector<8x128xf32>
    %c0_90 = arith.constant 0 : index
    %c0_91 = arith.constant 0 : index
    %240 = vector.load %arg22[%c0_90, %c0_91] : memref<1x128xf32, #tpu.memory_space<vmem>>, vector<1x128xf32>
    %241 = vector.broadcast %240 : vector<1x128xf32> to vector<8x128xf32>
    %242 = arith.addf %239, %241 : vector<8x128xf32>
    %cst_92 = arith.constant 5.000000e-01 : f32
    %243 = vector.broadcast %cst_92 : f32 to vector<8x128xf32>
    %244 = arith.mulf %243, %242 : vector<8x128xf32>
    %cst_93 = arith.constant 0.707106769 : f32
    %245 = vector.broadcast %cst_93 : f32 to vector<8x128xf32>
    %246 = arith.mulf %242, %245 : vector<8x128xf32>
    %247 = math.erf %246 : vector<8x128xf32>
    %cst_94 = arith.constant 1.000000e+00 : f32
    %248 = vector.broadcast %cst_94 : f32 to vector<8x128xf32>
    %249 = arith.addf %248, %247 : vector<8x128xf32>
    %250 = arith.mulf %244, %249 : vector<8x128xf32>
    %251 = arith.truncf %250 : vector<8x128xf32> to vector<8x128xbf16>
    %c0_95 = arith.constant 0 : index
    %c0_96 = arith.constant 0 : index
    %252 = vector.load %arg23[%c0_95, %c0_96] : memref<128x32xbf16, #tpu.memory_space<vmem>>, vector<128x32xbf16>
    %cst_97 = arith.constant dense<0.000000e+00> : vector<8x32xf32>
    %253 = tpu.matmul %251, %252, %cst_97 {dimension_numbers = #tpu.dot_dimension_numbers<[1], [0], [0], [1], [0, 0, 1, 1], [], []>} : vector<8x128xbf16>, vector<128x32xbf16>, vector<8x32xf32> -> vector<8x32xf32>
    %254 = arith.addf %212, %253 : vector<8x32xf32>
    %c0_98 = arith.constant 0 : index
    %c0_99 = arith.constant 0 : index
    %255 = vector.load %arg24[%c0_98, %c0_99] : memref<1x32xf32, #tpu.memory_space<vmem>>, vector<1x32xf32>
    %256 = vector.broadcast %255 : vector<1x32xf32> to vector<8x32xf32>
    %257 = arith.addf %254, %256 : vector<8x32xf32>
    %c0_100 = arith.constant 0 : index
    %c0_101 = arith.constant 0 : index
    %c0_102 = arith.constant 0 : index
    %258 = vector.load %arg25[%c0_100, %c0_101, %c0_102] : memref<1x8x32xf32, #tpu.memory_space<vmem>>, vector<1x8x32xf32>
    %259 = vector.shape_cast %258 : vector<1x8x32xf32> to vector<8x32xf32>
    %260 = vector.shape_cast %257 : vector<8x32xf32> to vector<1x8x32xf32>
    tpu.vector_store %arg25[%c0_100, %c0_101, %c0_102], %260 {strides = array<i32>} : memref<1x8x32xf32, #tpu.memory_space<vmem>>, vector<1x8x32xf32>,
    return
  }
  func.func @transform_0(%arg0: i32, %arg1: i32) -> (i32, i32, i32) {
    %c0_i32 = arith.constant 0 : i32
    %c0_i32_0 = arith.constant 0 : i32
    return %arg0, %arg1, %c0_i32 : i32, i32, i32
  }
  func.func @transform_1(%arg0: i32, %arg1: i32) -> (i32, i32, i32) {
    %c0_i32 = arith.constant 0 : i32
    %c0_i32_0 = arith.constant 0 : i32
    %c0_i32_1 = arith.constant 0 : i32
    return %arg0, %c0_i32, %c0_i32_0 : i32, i32, i32
  }
  func.func @transform_2(%arg0: i32, %arg1: i32) -> (i32, i32, i32) {
    %c0_i32 = arith.constant 0 : i32
    %c0_i32_0 = arith.constant 0 : i32
    %c0_i32_1 = arith.constant 0 : i32
    return %arg0, %c0_i32, %c0_i32_0 : i32, i32, i32
  }
  func.func @transform_3(%arg0: i32, %arg1: i32) -> (i32, i32) {
    %c0_i32 = arith.constant 0 : i32
    %c0_i32_0 = arith.constant 0 : i32
    %c0_i32_1 = arith.constant 0 : i32
    return %c0_i32, %c0_i32_0 : i32, i32
  }
  func.func @transform_4(%arg0: i32, %arg1: i32) -> (i32, i32) {
    %c0_i32 = arith.constant 0 : i32
    %c0_i32_0 = arith.constant 0 : i32
    %c0_i32_1 = arith.constant 0 : i32
    return %c0_i32, %c0_i32_0 : i32, i32
  }
  func.func @transform_5(%arg0: i32, %arg1: i32) -> (i32, i32) {
    %c0_i32 = arith.constant 0 : i32
    %c0_i32_0 = arith.constant 0 : i32
    %c0_i32_1 = arith.constant 0 : i32
    return %c0_i32, %c0_i32_0 : i32, i32
  }
  func.func @transform_6(%arg0: i32, %arg1: i32) -> (i32, i32) {
    %c0_i32 = arith.constant 0 : i32
    %c0_i32_0 = arith.constant 0 : i32
    %c0_i32_1 = arith.constant 0 : i32
    return %c0_i32, %c0_i32_0 : i32, i32
  }
  func.func @transform_7(%arg0: i32, %arg1: i32) -> (i32, i32) {
    %c0_i32 = arith.constant 0 : i32
    %c0_i32_0 = arith.constant 0 : i32
    %c0_i32_1 = arith.constant 0 : i32
    return %c0_i32, %c0_i32_0 : i32, i32
  }
  func.func @transform_8(%arg0: i32, %arg1: i32) -> (i32, i32) {
    %c0_i32 = arith.constant 0 : i32
    %c0_i32_0 = arith.constant 0 : i32
    %c0_i32_1 = arith.constant 0 : i32
    return %c0_i32, %c0_i32_0 : i32, i32
  }
  func.func @transform_9(%arg0: i32, %arg1: i32) -> (i32, i32) {
    %c0_i32 = arith.constant 0 : i32
    %c0_i32_0 = arith.constant 0 : i32
    %c0_i32_1 = arith.constant 0 : i32
    return %c0_i32, %c0_i32_0 : i32, i32
  }
  func.func @transform_10(%arg0: i32, %arg1: i32) -> (i32, i32) {
    %c0_i32 = arith.constant 0 : i32
    %c0_i32_0 = arith.constant 0 : i32
    %c0_i32_1 = arith.constant 0 : i32
    return %c0_i32, %c0_i32_0 : i32, i32
  }
  func.func @transform_11(%arg0: i32, %arg1: i32) -> (i32, i32) {
    %c0_i32 = arith.constant 0 : i32
    %c0_i32_0 = arith.constant 0 : i32
    %c0_i32_1 = arith.constant 0 : i32
    return %c0_i32, %c0_i32_0 : i32, i32
  }
  func.func @transform_12(%arg0: i32, %arg1: i32) -> (i32, i32) {
    %c0_i32 = arith.constant 0 : i32
    %c0_i32_0 = arith.constant 0 : i32
    %c0_i32_1 = arith.constant 0 : i32
    return %c0_i32, %c0_i32_0 : i32, i32
  }
  func.func @transform_13(%arg0: i32, %arg1: i32) -> (i32, i32) {
    %c0_i32 = arith.constant 0 : i32
    %c0_i32_0 = arith.constant 0 : i32
    %c0_i32_1 = arith.constant 0 : i32
    return %c0_i32, %c0_i32_0 : i32, i32
  }
  func.func @transform_14(%arg0: i32, %arg1: i32) -> (i32, i32) {
    %c0_i32 = arith.constant 0 : i32
    %c0_i32_0 = arith.constant 0 : i32
    %c0_i32_1 = arith.constant 0 : i32
    return %c0_i32, %c0_i32_0 : i32, i32
  }
  func.func @transform_15(%arg0: i32, %arg1: i32) -> (i32, i32) {
    %c0_i32 = arith.constant 0 : i32
    %c0_i32_0 = arith.constant 0 : i32
    %c0_i32_1 = arith.constant 0 : i32
    return %c0_i32, %c0_i32_0 : i32, i32
  }
  func.func @transform_16(%arg0: i32, %arg1: i32) -> (i32, i32) {
    %c0_i32 = arith.constant 0 : i32
    %c0_i32_0 = arith.constant 0 : i32
    %c0_i32_1 = arith.constant 0 : i32
    return %c0_i32, %c0_i32_0 : i32, i32
  }
  func.func @transform_17(%arg0: i32, %arg1: i32) -> (i32, i32) {
    %c0_i32 = arith.constant 0 : i32
    %c0_i32_0 = arith.constant 0 : i32
    %c0_i32_1 = arith.constant 0 : i32
    return %c0_i32, %c0_i32_0 : i32, i32
  }
  func.func @transform_18(%arg0: i32, %arg1: i32) -> (i32, i32) {
    %c0_i32 = arith.constant 0 : i32
    %c0_i32_0 = arith.constant 0 : i32
    %c0_i32_1 = arith.constant 0 : i32
    return %c0_i32, %c0_i32_0 : i32, i32
  }
  func.func @transform_19(%arg0: i32, %arg1: i32) -> (i32, i32) {
    %c0_i32 = arith.constant 0 : i32
    %c0_i32_0 = arith.constant 0 : i32
    %c0_i32_1 = arith.constant 0 : i32
    return %c0_i32, %c0_i32_0 : i32, i32
  }
  func.func @transform_20(%arg0: i32, %arg1: i32) -> (i32, i32) {
    %c0_i32 = arith.constant 0 : i32
    %c0_i32_0 = arith.constant 0 : i32
    %c0_i32_1 = arith.constant 0 : i32
    return %c0_i32, %c0_i32_0 : i32, i32
  }
  func.func @transform_21(%arg0: i32, %arg1: i32) -> (i32, i32) {
    %c0_i32 = arith.constant 0 : i32
    %c0_i32_0 = arith.constant 0 : i32
    %c0_i32_1 = arith.constant 0 : i32
    return %c0_i32, %c0_i32_0 : i32, i32
  }
  func.func @transform_22(%arg0: i32, %arg1: i32) -> (i32, i32) {
    %c0_i32 = arith.constant 0 : i32
    %c0_i32_0 = arith.constant 0 : i32
    %c0_i32_1 = arith.constant 0 : i32
    return %c0_i32, %c0_i32_0 : i32, i32
  }
  func.func @transform_23(%arg0: i32, %arg1: i32) -> (i32, i32, i32) {
    %c0_i32 = arith.constant 0 : i32
    %c0_i32_0 = arith.constant 0 : i32
    return %arg0, %arg1, %c0_i32 : i32, i32, i32
  }
}

</mosaic_0001>

<llo_original>
// kernel: tpu_custom_call.1
$region0: #{tpu_custom_call.1}
  #allocation0 [shape = 'u32[]', space=smem, size = 0x4, offset = 0x4, fixed_abs, tag = 'smem constant byte address 0x4 - core index']
  #allocation1 [shape = 'u32[144,128]{1,0:T(1,128)}', space=vmem, size = 0x12000, scoped, tag = 'internal scratch']
  #allocation2 [shape = 'bf16[8,32]{1,0:T(8,128)(2,1)}', space=vmem, size = 0x800, scoped, tag = 'scratch operand']
  #allocation3 [shape = 'bf16[8,32]{1,0:T(8,128)(2,1)}', space=vmem, size = 0x800, scoped, tag = 'scratch operand']
  #allocation4 [shape = 'bf16[8,32]{1,0:T(8,128)(2,1)}', space=vmem, size = 0x800, scoped, tag = 'scratch operand']
  #allocation5 [shape = 'bf16[8,32]{1,0:T(8,128)(2,1)}', space=vmem, size = 0x800, scoped, tag = 'scratch operand']
  %s0 = inlined_call_operand.vmem [shape: f32[2,8,32], index: 0, kind: input, shape index: {}]
  %s1 = inlined_call_operand.vmem [shape: f32[2,8,32], index: 1, kind: input, shape index: {}]
  %s2 = inlined_call_operand.vmem [shape: f32[2,8,16], index: 2, kind: input, shape index: {}]
  %s3 = inlined_call_operand.hbm [shape: f32[1,32], index: 3, kind: input, shape index: {}]
  %s4 = inlined_call_operand.hbm [shape: f32[1,32], index: 4, kind: input, shape index: {}]
  %s5 = inlined_call_operand.vmem [shape: bf16[32,32], index: 5, kind: input, shape index: {}]
  %s6 = inlined_call_operand.vmem [shape: bf16[32,32], index: 6, kind: input, shape index: {}]
  %s7 = inlined_call_operand.hbm [shape: bf16[32,32], index: 7, kind: input, shape index: {}]
  %s8 = inlined_call_operand.hbm [shape: bf16[32,32], index: 8, kind: input, shape index: {}]
  %s9 = inlined_call_operand.hbm [shape: f32[1,32], index: 9, kind: input, shape index: {}]
  %s10 = inlined_call_operand.hbm [shape: f32[1,32], index: 10, kind: input, shape index: {}]
  %s11 = inlined_call_operand.hbm [shape: f32[1,32], index: 11, kind: input, shape index: {}]
  %s12 = inlined_call_operand.vmem [shape: bf16[32,32], index: 12, kind: input, shape index: {}]
  %s13 = inlined_call_operand.hbm [shape: bf16[16,32], index: 13, kind: input, shape index: {}]
  %s14 = inlined_call_operand.hbm [shape: bf16[16,32], index: 14, kind: input, shape index: {}]
  %s15 = inlined_call_operand.vmem [shape: bf16[32,32], index: 15, kind: input, shape index: {}]
  %s16 = inlined_call_operand.hbm [shape: f32[1,32], index: 16, kind: input, shape index: {}]
  %s17 = inlined_call_operand.hbm [shape: f32[1,32], index: 17, kind: input, shape index: {}]
  %s18 = inlined_call_operand.vmem [shape: f32[1,32], index: 18, kind: input, shape index: {}]
  %s19 = inlined_call_operand.vmem [shape: bf16[32,128], index: 19, kind: input, shape index: {}]
  %s20 = inlined_call_operand.vmem [shape: f32[1,128], index: 20, kind: input, shape index: {}]
  %s21 = inlined_call_operand.vmem [shape: bf16[128,32], index: 21, kind: input, shape index: {}]
  %s22 = inlined_call_operand.vmem [shape: f32[1,32], index: 22, kind: input, shape index: {}]
  %s23 = inlined_call_operand.hbm [shape: f32[2,8,32], index: 23, kind: output, shape index: {}]
  %s24 = sld [smem:[#allocation0]]
  $region173: #{tpu_custom_call.1} parent=0
    _
  %s26 = ssub.s32 1, %s24
  %s27 = scalar_select 0, %s26, %s24
  $region1: #{tpu_custom_call.1} parent=0
    #allocation6 [shape = 'u8[512]{0}', space=vmem, size = 0x400, scoped, tag = 'input window, operand 3, single buffered']
    #allocation7 [shape = 's32[2]{0}', space=sflag, size = 0x8, scoped, tag = 'scoped memory for tpu_custom_call.1']
    #allocation8 [shape = 's32[2]{0}', space=sflag, size = 0x8, scoped, tag = 'scoped memory for tpu_custom_call.1']
    #allocation9 [shape = 'u8[512]{0}', space=vmem, size = 0x400, scoped, tag = 'input window, operand 4, single buffered']
    #allocation10 [shape = 's32[1]{0}', space=sflag, size = 0x4, scoped, tag = 'scoped memory for tpu_custom_call.1']
    #allocation11 [shape = 'u8[8192]{0}', space=vmem, size = 0x2000, scoped, tag = 'input window, operand 7, single buffered']
    #allocation12 [shape = 'u8[8192]{0}', space=vmem, size = 0x2000, scoped, tag = 'input window, operand 8, single buffered']
    #allocation13 [shape = 's32[1]{0}', space=sflag, size = 0x4, scoped, tag = 'scoped memory for tpu_custom_call.1']
    #allocation14 [shape = 'u8[512]{0}', space=vmem, size = 0x400, scoped, tag = 'input window, operand 9, single buffered']
    #allocation15 [shape = 'u8[512]{0}', space=vmem, size = 0x400, scoped, tag = 'input window, operand 10, single buffered']
    #allocation16 [shape = 's32[1]{0}', space=sflag, size = 0x4, scoped, tag = 'scoped memory for tpu_custom_call.1']
    #allocation17 [shape = 'u8[512]{0}', space=vmem, size = 0x400, scoped, tag = 'input window, operand 11, single buffered']
    #allocation18 [shape = 'u8[4096]{0}', space=vmem, size = 0x1000, scoped, tag = 'input window, operand 13, single buffered']
    #allocation19 [shape = 's32[1]{0}', space=sflag, size = 0x4, scoped, tag = 'scoped memory for tpu_custom_call.1']
    #allocation20 [shape = 'u8[4096]{0}', space=vmem, size = 0x1000, scoped, tag = 'input window, operand 14, single buffered']
    #allocation21 [shape = 'u8[512]{0}', space=vmem, size = 0x400, scoped, tag = 'input window, operand 16, single buffered']
    #allocation22 [shape = 's32[1]{0}', space=sflag, size = 0x4, scoped, tag = 'scoped memory for tpu_custom_call.1']
    #allocation23 [shape = 'u8[512]{0}', space=vmem, size = 0x400, scoped, tag = 'input window, operand 17, single buffered']
    #allocation24 [shape = 'u8[8192]{0}', space=vmem, size = 0x2000, scoped, tag = 'output window, operand 0']
    %28 = vsyncpa [#allocation7], 0
    %29 = vsyncpa [#allocation10], 0
    %30 = vsyncpa [#allocation13], 0
    %31 = vsyncpa [#allocation16], 0
    %32 = vsyncpa [#allocation19], 0
    %33 = vsyncpa [#allocation22], 0
    %34 = vsyncpa [#allocation8], 0
    %s35 = scalar_lea.sflag [#allocation8], 1
    %36 = vsyncpa %s35, 0
    loop: start=0, step=1, limit=4
    $region2: #{tpu_custom_call.1} parent=1 // loop_pre_header
      _
    $region3: #{tpu_custom_call.1} parent=1 // loop_header
      %s38 = sphi 0, %s42
      %p39 = scmp.ge.s32.totalorder %s38, 4
      %s45 = sphi 0, %s57
      %s46 = sphi 0, %s53
      %s47 = sphi 0, %s45
      %s48 = sphi 0, %s46
      %s49 = sphi 0, %s47
      %s50 = sphi 0, %s48
      %s62 = sphi 0, %s64
      %s65 = sphi 0, %s62
      %s66 = sphi 0, %s65
      %s82 = sphi 0, %s66
      %s88 = sphi 0, %s90
      %s91 = sphi 0, %s88
      %s92 = sphi 0, %s91
      %s108 = sphi 0, %s92
      %s114 = sphi 0, %s116
      %s117 = sphi 0, %s114
      %s118 = sphi 0, %s117
      %s134 = sphi 0, %s118
      %s138 = sphi 0, %s138
      %s140 = sphi 0, %s138
      %s141 = sphi 0, %s140
      %s155 = sphi 0, %s141
      %s159 = sphi 0, %s159
      %s161 = sphi 0, %s159
      %s162 = sphi 0, %s161
      %s176 = sphi 0, %s162
      %s180 = sphi 0, %s180
      %s182 = sphi 0, %s180
      %s183 = sphi 0, %s182
      %s197 = sphi 0, %s183
      %s201 = sphi 0, %s201
      %s203 = sphi 0, %s201
      %s204 = sphi 0, %s203
      %s218 = sphi 0, %s204
      %s222 = sphi 0, %s222
      %s224 = sphi 0, %s222
      %s225 = sphi 0, %s224
      %s239 = sphi 0, %s225
      %s243 = sphi 0, %s243
      %s245 = sphi 0, %s243
      %s246 = sphi 0, %s245
      %s260 = sphi 0, %s246
      %s264 = sphi 0, %s264
      %s266 = sphi 0, %s264
      %s267 = sphi 0, %s266
      %s281 = sphi 0, %s267
      %s285 = sphi 0, %s285
      %s287 = sphi 0, %s285
      %s288 = sphi 0, %s287
      %s302 = sphi 0, %s288
      %s306 = sphi 0, %s306
      %s308 = sphi 0, %s306
      %s309 = sphi 0, %s308
      %s323 = sphi 0, %s309
      %s327 = sphi 0, %s327
      %s329 = sphi 0, %s327
      %s330 = sphi 0, %s329
      %s344 = sphi 0, %s330
      %s348 = sphi 0, %s348
      %s350 = sphi 0, %s348
      %s351 = sphi 0, %s350
      %s365 = sphi 0, %s351
      %s369 = sphi 0, %s369
      %s371 = sphi 0, %s369
      %s372 = sphi 0, %s371
      %s386 = sphi 0, %s372
      %s390 = sphi 0, %s390
      %s392 = sphi 0, %s390
      %s393 = sphi 0, %s392
      %s407 = sphi 0, %s393
      %s411 = sphi 0, %s411
      %s413 = sphi 0, %s411
      %s414 = sphi 0, %s413
      %s428 = sphi 0, %s414
      %s432 = sphi 0, %s432
      %s434 = sphi 0, %s432
      %s435 = sphi 0, %s434
      %s449 = sphi 0, %s435
      %s453 = sphi 0, %s453
      %s455 = sphi 0, %s453
      %s456 = sphi 0, %s455
      %s470 = sphi 0, %s456
      %s474 = sphi 0, %s474
      %s476 = sphi 0, %s474
      %s477 = sphi 0, %s476
      %s491 = sphi 0, %s477
      %s495 = sphi 0, %s495
      %s497 = sphi 0, %s495
      %s498 = sphi 0, %s497
      %s512 = sphi 0, %s498
      %s516 = sphi 0, %s516
      %s518 = sphi 0, %s516
      %s519 = sphi 0, %s518
      %s533 = sphi 0, %s519
      %s537 = sphi 0, %s537
      %s539 = sphi 0, %s537
      %s540 = sphi 0, %s539
      %s554 = sphi 0, %s540
      %s562 = sphi 0, %s564
      %s565 = sphi 0, %s562
      %s566 = sphi 0, %s565
      %s582 = sphi 0, %s566
    $region4: #{tpu_custom_call.1} parent=1 // loop_header_branch
      %41 = sbr.rel (%p39) target = $region8
    $region5: #{tpu_custom_call.1} parent=1 // loop_body
      %s43 = ssub.s32 %s38, 1
      %s44 = ssub.s32 %s38, 2
      %s51 = sadd.s32 1, %s46
      %p52 = scmp.ge.s32.totalorder %s51, 1
      %s53 = scalar_select %p52, 0, %s51
      %s54 = sadd.s32 1, %s45
      %s55 = scalar_select %p52, %s54, %s45
      %p56 = scmp.ge.s32.totalorder %s55, 2
      %s57 = scalar_select %p56, 0, %s55
      %s58 = ssub.s32 %s45, %s57
      %s59 = ssub.s32 %s46, %s53
      %s60 = sor.u32 %s58, %s59
      %p61 = scmp.eq.s32.totalorder %s60, 0
      %s63 = sadd.s32 %s62, 1
      %s64 = scalar_select %p61, %s62, %s63
      %p67 = pneg %p61
      %p68 = scmp.eq.s32.totalorder %s38, 1
      %p69 = por %p67, %p68
      %p70 = scmp.ne.s32.totalorder %s62, %s65
      %p71 = scmp.eq.s32.totalorder %s38, 0
      %p72 = por %p70, %p71
      %p73 = scmp.ne.s32.totalorder %s62, %s65
      %p74 = scmp.eq.s32.totalorder %s43, 1
      %p75 = por %p73, %p74
      %p76 = scmp.ne.s32.totalorder %s65, %s66
      %p77 = scmp.eq.s32.totalorder %s43, 0
      %p78 = por %p76, %p77
      %p79 = scmp.ne.s32.totalorder %s65, %s66
      %p80 = scmp.eq.s32.totalorder %s44, 1
      %p81 = por %p79, %p80
      %p83 = scmp.ne.s32.totalorder %s66, %s82
      %p84 = scmp.eq.s32.totalorder %s44, 0
      %p85 = por %p83, %p84
      %s86 = ssub.s32 %s45, %s57
      %p87 = scmp.eq.s32.totalorder %s86, 0
      %s89 = sadd.s32 %s88, 1
      %s90 = scalar_select %p87, %s88, %s89
      %p93 = pneg %p87
      %p94 = scmp.eq.s32.totalorder %s38, 1
      %p95 = por %p93, %p94
      %p96 = scmp.ne.s32.totalorder %s88, %s91
      %p97 = scmp.eq.s32.totalorder %s38, 0
      %p98 = por %p96, %p97
      %p99 = scmp.ne.s32.totalorder %s88, %s91
      %p100 = scmp.eq.s32.totalorder %s43, 1
      %p101 = por %p99, %p100
      %p102 = scmp.ne.s32.totalorder %s91, %s92
      %p103 = scmp.eq.s32.totalorder %s43, 0
      %p104 = por %p102, %p103
      %p105 = scmp.ne.s32.totalorder %s91, %s92
      %p106 = scmp.eq.s32.totalorder %s44, 1
      %p107 = por %p105, %p106
      %p109 = scmp.ne.s32.totalorder %s92, %s108
      %p110 = scmp.eq.s32.totalorder %s44, 0
      %p111 = por %p109, %p110
      %s112 = ssub.s32 %s45, %s57
      %p113 = scmp.eq.s32.totalorder %s112, 0
      %s115 = sadd.s32 %s114, 1
      %s116 = scalar_select %p113, %s114, %s115
      %p119 = pneg %p113
      %p120 = scmp.eq.s32.totalorder %s38, 1
      %p121 = por %p119, %p120
      %p122 = scmp.ne.s32.totalorder %s114, %s117
      %p123 = scmp.eq.s32.totalorder %s38, 0
      %p124 = por %p122, %p123
      %p125 = scmp.ne.s32.totalorder %s114, %s117
      %p126 = scmp.eq.s32.totalorder %s43, 1
      %p127 = por %p125, %p126
      %p128 = scmp.ne.s32.totalorder %s117, %s118
      %p129 = scmp.eq.s32.totalorder %s43, 0
      %p130 = por %p128, %p129
      %p131 = scmp.ne.s32.totalorder %s117, %s118
      %p132 = scmp.eq.s32.totalorder %s44, 1
      %p133 = por %p131, %p132
      %p135 = scmp.ne.s32.totalorder %s118, %s134
      %p136 = scmp.eq.s32.totalorder %s44, 0
      %p137 = por %p135, %p136
      %s139 = sadd.s32 %s138, 1
      %p142 = scmp.eq.s32.totalorder %s38, 1
      %p143 = scmp.ne.s32.totalorder %s138, %s140
      %p144 = scmp.eq.s32.totalorder %s38, 0
      %p145 = por %p143, %p144
      %p146 = scmp.ne.s32.totalorder %s138, %s140
      %p147 = scmp.eq.s32.totalorder %s43, 1
      %p148 = por %p146, %p147
      %p149 = scmp.ne.s32.totalorder %s140, %s141
      %p150 = scmp.eq.s32.totalorder %s43, 0
      %p151 = por %p149, %p150
      %p152 = scmp.ne.s32.totalorder %s140, %s141
      %p153 = scmp.eq.s32.totalorder %s44, 1
      %p154 = por %p152, %p153
      %p156 = scmp.ne.s32.totalorder %s141, %s155
      %p157 = scmp.eq.s32.totalorder %s44, 0
      %p158 = por %p156, %p157
      %s160 = sadd.s32 %s159, 1
      %p163 = scmp.eq.s32.totalorder %s38, 1
      %p164 = scmp.ne.s32.totalorder %s159, %s161
      %p165 = scmp.eq.s32.totalorder %s38, 0
      %p166 = por %p164, %p165
      %p167 = scmp.ne.s32.totalorder %s159, %s161
      %p168 = scmp.eq.s32.totalorder %s43, 1
      %p169 = por %p167, %p168
      %p170 = scmp.ne.s32.totalorder %s161, %s162
      %p171 = scmp.eq.s32.totalorder %s43, 0
      %p172 = por %p170, %p171
      %p173 = scmp.ne.s32.totalorder %s161, %s162
      %p174 = scmp.eq.s32.totalorder %s44, 1
      %p175 = por %p173, %p174
      %p177 = scmp.ne.s32.totalorder %s162, %s176
      %p178 = scmp.eq.s32.totalorder %s44, 0
      %p179 = por %p177, %p178
      %s181 = sadd.s32 %s180, 1
      %p184 = scmp.eq.s32.totalorder %s38, 1
      %p185 = scmp.ne.s32.totalorder %s180, %s182
      %p186 = scmp.eq.s32.totalorder %s38, 0
      %p187 = por %p185, %p186
      %p188 = scmp.ne.s32.totalorder %s180, %s182
      %p189 = scmp.eq.s32.totalorder %s43, 1
      %p190 = por %p188, %p189
      %p191 = scmp.ne.s32.totalorder %s182, %s183
      %p192 = scmp.eq.s32.totalorder %s43, 0
      %p193 = por %p191, %p192
      %p194 = scmp.ne.s32.totalorder %s182, %s183
      %p195 = scmp.eq.s32.totalorder %s44, 1
      %p196 = por %p194, %p195
      %p198 = scmp.ne.s32.totalorder %s183, %s197
      %p199 = scmp.eq.s32.totalorder %s44, 0
      %p200 = por %p198, %p199
      %s202 = sadd.s32 %s201, 1
      %p205 = scmp.eq.s32.totalorder %s38, 1
      %p206 = scmp.ne.s32.totalorder %s201, %s203
      %p207 = scmp.eq.s32.totalorder %s38, 0
      %p208 = por %p206, %p207
      %p209 = scmp.ne.s32.totalorder %s201, %s203
      %p210 = scmp.eq.s32.totalorder %s43, 1
      %p211 = por %p209, %p210
      %p212 = scmp.ne.s32.totalorder %s203, %s204
      %p213 = scmp.eq.s32.totalorder %s43, 0
      %p214 = por %p212, %p213
      %p215 = scmp.ne.s32.totalorder %s203, %s204
      %p216 = scmp.eq.s32.totalorder %s44, 1
      %p217 = por %p215, %p216
      %p219 = scmp.ne.s32.totalorder %s204, %s218
      %p220 = scmp.eq.s32.totalorder %s44, 0
      %p221 = por %p219, %p220
      %s223 = sadd.s32 %s222, 1
      %p226 = scmp.eq.s32.totalorder %s38, 1
      %p227 = scmp.ne.s32.totalorder %s222, %s224
      %p228 = scmp.eq.s32.totalorder %s38, 0
      %p229 = por %p227, %p228
      %p230 = scmp.ne.s32.totalorder %s222, %s224
      %p231 = scmp.eq.s32.totalorder %s43, 1
      %p232 = por %p230, %p231
      %p233 = scmp.ne.s32.totalorder %s224, %s225
      %p234 = scmp.eq.s32.totalorder %s43, 0
      %p235 = por %p233, %p234
      %p236 = scmp.ne.s32.totalorder %s224, %s225
      %p237 = scmp.eq.s32.totalorder %s44, 1
      %p238 = por %p236, %p237
      %p240 = scmp.ne.s32.totalorder %s225, %s239
      %p241 = scmp.eq.s32.totalorder %s44, 0
      %p242 = por %p240, %p241
      %s244 = sadd.s32 %s243, 1
      %p247 = scmp.eq.s32.totalorder %s38, 1
      %p248 = scmp.ne.s32.totalorder %s243, %s245
      %p249 = scmp.eq.s32.totalorder %s38, 0
      %p250 = por %p248, %p249
      %p251 = scmp.ne.s32.totalorder %s243, %s245
      %p252 = scmp.eq.s32.totalorder %s43, 1
      %p253 = por %p251, %p252
      %p254 = scmp.ne.s32.totalorder %s245, %s246
      %p255 = scmp.eq.s32.totalorder %s43, 0
      %p256 = por %p254, %p255
      %p257 = scmp.ne.s32.totalorder %s245, %s246
      %p258 = scmp.eq.s32.totalorder %s44, 1
      %p259 = por %p257, %p258
      %p261 = scmp.ne.s32.totalorder %s246, %s260
      %p262 = scmp.eq.s32.totalorder %s44, 0
      %p263 = por %p261, %p262
      %s265 = sadd.s32 %s264, 1
      %p268 = scmp.eq.s32.totalorder %s38, 1
      %p269 = scmp.ne.s32.totalorder %s264, %s266
      %p270 = scmp.eq.s32.totalorder %s38, 0
      %p271 = por %p269, %p270
      %p272 = scmp.ne.s32.totalorder %s264, %s266
      %p273 = scmp.eq.s32.totalorder %s43, 1
      %p274 = por %p272, %p273
      %p275 = scmp.ne.s32.totalorder %s266, %s267
      %p276 = scmp.eq.s32.totalorder %s43, 0
      %p277 = por %p275, %p276
      %p278 = scmp.ne.s32.totalorder %s266, %s267
      %p279 = scmp.eq.s32.totalorder %s44, 1
      %p280 = por %p278, %p279
      %p282 = scmp.ne.s32.totalorder %s267, %s281
      %p283 = scmp.eq.s32.totalorder %s44, 0
      %p284 = por %p282, %p283
      %s286 = sadd.s32 %s285, 1
      %p289 = scmp.eq.s32.totalorder %s38, 1
      %p290 = scmp.ne.s32.totalorder %s285, %s287
      %p291 = scmp.eq.s32.totalorder %s38, 0
      %p292 = por %p290, %p291
      %p293 = scmp.ne.s32.totalorder %s285, %s287
      %p294 = scmp.eq.s32.totalorder %s43, 1
      %p295 = por %p293, %p294
      %p296 = scmp.ne.s32.totalorder %s287, %s288
      %p297 = scmp.eq.s32.totalorder %s43, 0
      %p298 = por %p296, %p297
      %p299 = scmp.ne.s32.totalorder %s287, %s288
      %p300 = scmp.eq.s32.totalorder %s44, 1
      %p301 = por %p299, %p300
      %p303 = scmp.ne.s32.totalorder %s288, %s302
      %p304 = scmp.eq.s32.totalorder %s44, 0
      %p305 = por %p303, %p304
      %s307 = sadd.s32 %s306, 1
      %p310 = scmp.eq.s32.totalorder %s38, 1
      %p311 = scmp.ne.s32.totalorder %s306, %s308
      %p312 = scmp.eq.s32.totalorder %s38, 0
      %p313 = por %p311, %p312
      %p314 = scmp.ne.s32.totalorder %s306, %s308
      %p315 = scmp.eq.s32.totalorder %s43, 1
      %p316 = por %p314, %p315
      %p317 = scmp.ne.s32.totalorder %s308, %s309
      %p318 = scmp.eq.s32.totalorder %s43, 0
      %p319 = por %p317, %p318
      %p320 = scmp.ne.s32.totalorder %s308, %s309
      %p321 = scmp.eq.s32.totalorder %s44, 1
      %p322 = por %p320, %p321
      %p324 = scmp.ne.s32.totalorder %s309, %s323
      %p325 = scmp.eq.s32.totalorder %s44, 0
      %p326 = por %p324, %p325
      %s328 = sadd.s32 %s327, 1
      %p331 = scmp.eq.s32.totalorder %s38, 1
      %p332 = scmp.ne.s32.totalorder %s327, %s329
      %p333 = scmp.eq.s32.totalorder %s38, 0
      %p334 = por %p332, %p333
      %p335 = scmp.ne.s32.totalorder %s327, %s329
      %p336 = scmp.eq.s32.totalorder %s43, 1
      %p337 = por %p335, %p336
      %p338 = scmp.ne.s32.totalorder %s329, %s330
      %p339 = scmp.eq.s32.totalorder %s43, 0
      %p340 = por %p338, %p339
      %p341 = scmp.ne.s32.totalorder %s329, %s330
      %p342 = scmp.eq.s32.totalorder %s44, 1
      %p343 = por %p341, %p342
      %p345 = scmp.ne.s32.totalorder %s330, %s344
      %p346 = scmp.eq.s32.totalorder %s44, 0
      %p347 = por %p345, %p346
      %s349 = sadd.s32 %s348, 1
      %p352 = scmp.eq.s32.totalorder %s38, 1
      %p353 = scmp.ne.s32.totalorder %s348, %s350
      %p354 = scmp.eq.s32.totalorder %s38, 0
      %p355 = por %p353, %p354
      %p356 = scmp.ne.s32.totalorder %s348, %s350
      %p357 = scmp.eq.s32.totalorder %s43, 1
      %p358 = por %p356, %p357
      %p359 = scmp.ne.s32.totalorder %s350, %s351
      %p360 = scmp.eq.s32.totalorder %s43, 0
      %p361 = por %p359, %p360
      %p362 = scmp.ne.s32.totalorder %s350, %s351
      %p363 = scmp.eq.s32.totalorder %s44, 1
      %p364 = por %p362, %p363
      %p366 = scmp.ne.s32.totalorder %s351, %s365
      %p367 = scmp.eq.s32.totalorder %s44, 0
      %p368 = por %p366, %p367
      %s370 = sadd.s32 %s369, 1
      %p373 = scmp.eq.s32.totalorder %s38, 1
      %p374 = scmp.ne.s32.totalorder %s369, %s371
      %p375 = scmp.eq.s32.totalorder %s38, 0
      %p376 = por %p374, %p375
      %p377 = scmp.ne.s32.totalorder %s369, %s371
      %p378 = scmp.eq.s32.totalorder %s43, 1
      %p379 = por %p377, %p378
      %p380 = scmp.ne.s32.totalorder %s371, %s372
      %p381 = scmp.eq.s32.totalorder %s43, 0
      %p382 = por %p380, %p381
      %p383 = scmp.ne.s32.totalorder %s371, %s372
      %p384 = scmp.eq.s32.totalorder %s44, 1
      %p385 = por %p383, %p384
      %p387 = scmp.ne.s32.totalorder %s372, %s386
      %p388 = scmp.eq.s32.totalorder %s44, 0
      %p389 = por %p387, %p388
      %s391 = sadd.s32 %s390, 1
      %p394 = scmp.eq.s32.totalorder %s38, 1
      %p395 = scmp.ne.s32.totalorder %s390, %s392
      %p396 = scmp.eq.s32.totalorder %s38, 0
      %p397 = por %p395, %p396
      %p398 = scmp.ne.s32.totalorder %s390, %s392
      %p399 = scmp.eq.s32.totalorder %s43, 1
      %p400 = por %p398, %p399
      %p401 = scmp.ne.s32.totalorder %s392, %s393
      %p402 = scmp.eq.s32.totalorder %s43, 0
      %p403 = por %p401, %p402
      %p404 = scmp.ne.s32.totalorder %s392, %s393
      %p405 = scmp.eq.s32.totalorder %s44, 1
      %p406 = por %p404, %p405
      %p408 = scmp.ne.s32.totalorder %s393, %s407
      %p409 = scmp.eq.s32.totalorder %s44, 0
      %p410 = por %p408, %p409
      %s412 = sadd.s32 %s411, 1
      %p415 = scmp.eq.s32.totalorder %s38, 1
      %p416 = scmp.ne.s32.totalorder %s411, %s413
      %p417 = scmp.eq.s32.totalorder %s38, 0
      %p418 = por %p416, %p417
      %p419 = scmp.ne.s32.totalorder %s411, %s413
      %p420 = scmp.eq.s32.totalorder %s43, 1
      %p421 = por %p419, %p420
      %p422 = scmp.ne.s32.totalorder %s413, %s414
      %p423 = scmp.eq.s32.totalorder %s43, 0
      %p424 = por %p422, %p423
      %p425 = scmp.ne.s32.totalorder %s413, %s414
      %p426 = scmp.eq.s32.totalorder %s44, 1
      %p427 = por %p425, %p426
      %p429 = scmp.ne.s32.totalorder %s414, %s428
      %p430 = scmp.eq.s32.totalorder %s44, 0
      %p431 = por %p429, %p430
      %s433 = sadd.s32 %s432, 1
      %p436 = scmp.eq.s32.totalorder %s38, 1
      %p437 = scmp.ne.s32.totalorder %s432, %s434
      %p438 = scmp.eq.s32.totalorder %s38, 0
      %p439 = por %p437, %p438
      %p440 = scmp.ne.s32.totalorder %s432, %s434
      %p441 = scmp.eq.s32.totalorder %s43, 1
      %p442 = por %p440, %p441
      %p443 = scmp.ne.s32.totalorder %s434, %s435
      %p444 = scmp.eq.s32.totalorder %s43, 0
      %p445 = por %p443, %p444
      %p446 = scmp.ne.s32.totalorder %s434, %s435
      %p447 = scmp.eq.s32.totalorder %s44, 1
      %p448 = por %p446, %p447
      %p450 = scmp.ne.s32.totalorder %s435, %s449
      %p451 = scmp.eq.s32.totalorder %s44, 0
      %p452 = por %p450, %p451
      %s454 = sadd.s32 %s453, 1
      %p457 = scmp.eq.s32.totalorder %s38, 1
      %p458 = scmp.ne.s32.totalorder %s453, %s455
      %p459 = scmp.eq.s32.totalorder %s38, 0
      %p460 = por %p458, %p459
      %p461 = scmp.ne.s32.totalorder %s453, %s455
      %p462 = scmp.eq.s32.totalorder %s43, 1
      %p463 = por %p461, %p462
      %p464 = scmp.ne.s32.totalorder %s455, %s456
      %p465 = scmp.eq.s32.totalorder %s43, 0
      %p466 = por %p464, %p465
      %p467 = scmp.ne.s32.totalorder %s455, %s456
      %p468 = scmp.eq.s32.totalorder %s44, 1
      %p469 = por %p467, %p468
      %p471 = scmp.ne.s32.totalorder %s456, %s470
      %p472 = scmp.eq.s32.totalorder %s44, 0
      %p473 = por %p471, %p472
      %s475 = sadd.s32 %s474, 1
      %p478 = scmp.eq.s32.totalorder %s38, 1
      %p479 = scmp.ne.s32.totalorder %s474, %s476
      %p480 = scmp.eq.s32.totalorder %s38, 0
      %p481 = por %p479, %p480
      %p482 = scmp.ne.s32.totalorder %s474, %s476
      %p483 = scmp.eq.s32.totalorder %s43, 1
      %p484 = por %p482, %p483
      %p485 = scmp.ne.s32.totalorder %s476, %s477
      %p486 = scmp.eq.s32.totalorder %s43, 0
      %p487 = por %p485, %p486
      %p488 = scmp.ne.s32.totalorder %s476, %s477
      %p489 = scmp.eq.s32.totalorder %s44, 1
      %p490 = por %p488, %p489
      %p492 = scmp.ne.s32.totalorder %s477, %s491
      %p493 = scmp.eq.s32.totalorder %s44, 0
      %p494 = por %p492, %p493
      %s496 = sadd.s32 %s495, 1
      %p499 = scmp.eq.s32.totalorder %s38, 1
      %p500 = scmp.ne.s32.totalorder %s495, %s497
      %p501 = scmp.eq.s32.totalorder %s38, 0
      %p502 = por %p500, %p501
      %p503 = scmp.ne.s32.totalorder %s495, %s497
      %p504 = scmp.eq.s32.totalorder %s43, 1
      %p505 = por %p503, %p504
      %p506 = scmp.ne.s32.totalorder %s497, %s498
      %p507 = scmp.eq.s32.totalorder %s43, 0
      %p508 = por %p506, %p507
      %p509 = scmp.ne.s32.totalorder %s497, %s498
      %p510 = scmp.eq.s32.totalorder %s44, 1
      %p511 = por %p509, %p510
      %p513 = scmp.ne.s32.totalorder %s498, %s512
      %p514 = scmp.eq.s32.totalorder %s44, 0
      %p515 = por %p513, %p514
      %s517 = sadd.s32 %s516, 1
      %p520 = scmp.eq.s32.totalorder %s38, 1
      %p521 = scmp.ne.s32.totalorder %s516, %s518
      %p522 = scmp.eq.s32.totalorder %s38, 0
      %p523 = por %p521, %p522
      %p524 = scmp.ne.s32.totalorder %s516, %s518
      %p525 = scmp.eq.s32.totalorder %s43, 1
      %p526 = por %p524, %p525
      %p527 = scmp.ne.s32.totalorder %s518, %s519
      %p528 = scmp.eq.s32.totalorder %s43, 0
      %p529 = por %p527, %p528
      %p530 = scmp.ne.s32.totalorder %s518, %s519
      %p531 = scmp.eq.s32.totalorder %s44, 1
      %p532 = por %p530, %p531
      %p534 = scmp.ne.s32.totalorder %s519, %s533
      %p535 = scmp.eq.s32.totalorder %s44, 0
      %p536 = por %p534, %p535
      %s538 = sadd.s32 %s537, 1
      %p541 = scmp.eq.s32.totalorder %s38, 1
      %p542 = scmp.ne.s32.totalorder %s537, %s539
      %p543 = scmp.eq.s32.totalorder %s38, 0
      %p544 = por %p542, %p543
      %p545 = scmp.ne.s32.totalorder %s537, %s539
      %p546 = scmp.eq.s32.totalorder %s43, 1
      %p547 = por %p545, %p546
      %p548 = scmp.ne.s32.totalorder %s539, %s540
      %p549 = scmp.eq.s32.totalorder %s43, 0
      %p550 = por %p548, %p549
      %p551 = scmp.ne.s32.totalorder %s539, %s540
      %p552 = scmp.eq.s32.totalorder %s44, 1
      %p553 = por %p551, %p552
      %p555 = scmp.ne.s32.totalorder %s540, %s554
      %p556 = scmp.eq.s32.totalorder %s44, 0
      %p557 = por %p555, %p556
      %s558 = ssub.s32 %s45, %s57
      %s559 = ssub.s32 %s46, %s53
      %s560 = sor.u32 %s558, %s559
      %p561 = scmp.eq.s32.totalorder %s560, 0
      %s563 = sadd.s32 %s562, 1
      %s564 = scalar_select %p561, %s562, %s563
      %p567 = pneg %p561
      %p568 = scmp.eq.s32.totalorder %s38, 1
      %p569 = por %p567, %p568
      %p570 = scmp.ne.s32.totalorder %s562, %s565
      %p571 = scmp.eq.s32.totalorder %s38, 0
      %p572 = por %p570, %p571
      %p573 = scmp.ne.s32.totalorder %s562, %s565
      %p574 = scmp.eq.s32.totalorder %s43, 1
      %p575 = por %p573, %p574
      %p576 = scmp.ne.s32.totalorder %s565, %s566
      %p577 = scmp.eq.s32.totalorder %s43, 0
      %p578 = por %p576, %p577
      %p579 = scmp.ne.s32.totalorder %s565, %s566
      %p580 = scmp.eq.s32.totalorder %s44, 1
      %p581 = por %p579, %p580
      %p583 = scmp.ne.s32.totalorder %s566, %s582
      %p584 = scmp.eq.s32.totalorder %s44, 0
      %p585 = por %p583, %p584
      %p586 = scmp.le.s32.totalorder 1, %s38
      %p587 = scmp.lt.s32.totalorder %s38, 3
      %p588 = pnand %p586, %p587
      %p589 = pneg %p588
      // Predicated region
      $region9: #{tpu_custom_call.1} parent=5 // pred_check
        _
      $region10: #{tpu_custom_call.1} parent=5 // pred_check_branch
        %591 = sbr.rel (%p588) target = $region12
      $region11: #{tpu_custom_call.1} parent=5 // pred_region
        %s592 = ssub.s32 %s38, 1
        // Predicated region
        $region13: #{tpu_custom_call.1} parent=11 // pred_check
          %p593 = pneg %p151
        $region14: #{tpu_custom_call.1} parent=11 // pred_check_branch
          %595 = sbr.rel (%p593) target = $region16
        $region15: #{tpu_custom_call.1} parent=11 // pred_region
          %s597 = ssub.s32 16, 16
          %598 = vsyncadd [#allocation7], %s597
          %s600 = sshll.u32 [#allocation6], 4
          %s601 = int_to_ptr.vmem [resolvable:$true] %s600
          %603 = dma.hbm_to_vmem [thread:$0]  %s3, 16, %s601, [#allocation7]
        $region16: #{tpu_custom_call.1} parent=11 // pred_fallthru
          _
        // Predicated region
        $region17: #{tpu_custom_call.1} parent=11 // pred_check
          %p604 = pneg %p172
        $region18: #{tpu_custom_call.1} parent=11 // pred_check_branch
          %606 = sbr.rel (%p604) target = $region20
        $region19: #{tpu_custom_call.1} parent=11 // pred_region
          %s608 = ssub.s32 16, 16
          %609 = vsyncadd [#allocation10], %s608
          %s611 = sshll.u32 [#allocation9], 4
          %s612 = int_to_ptr.vmem [resolvable:$true] %s611
          %614 = dma.hbm_to_vmem [thread:$0]  %s4, 16, %s612, [#allocation10]
        $region20: #{tpu_custom_call.1} parent=11 // pred_fallthru
          _
        // Predicated region
        $region21: #{tpu_custom_call.1} parent=11 // pred_check
          %p615 = pneg %p193
        $region22: #{tpu_custom_call.1} parent=11 // pred_check_branch
          %617 = sbr.rel (%p615) target = $region24
        $region23: #{tpu_custom_call.1} parent=11 // pred_region
          _
        $region24: #{tpu_custom_call.1} parent=11 // pred_fallthru
          _
        // Predicated region
        $region25: #{tpu_custom_call.1} parent=11 // pred_check
          %p618 = pneg %p214
        $region26: #{tpu_custom_call.1} parent=11 // pred_check_branch
          %620 = sbr.rel (%p618) target = $region28
        $region27: #{tpu_custom_call.1} parent=11 // pred_region
          _
        $region28: #{tpu_custom_call.1} parent=11 // pred_fallthru
          _
        // Predicated region
        $region29: #{tpu_custom_call.1} parent=11 // pred_check
          %p621 = pneg %p235
        $region30: #{tpu_custom_call.1} parent=11 // pred_check_branch
          %623 = sbr.rel (%p621) target = $region32
        $region31: #{tpu_custom_call.1} parent=11 // pred_region
          %s625 = ssub.s32 256, 256
          %626 = vsyncadd [#allocation10], %s625
          %s627 = sshll.u32 [#allocation11], 4
          %s628 = int_to_ptr.vmem [resolvable:$true] %s627
          %633 = dma.hbm_to_vmem [thread:$0]  %s7, 256, %s628, [#allocation10], 64, 64, 4
        $region32: #{tpu_custom_call.1} parent=11 // pred_fallthru
          _
        // Predicated region
        $region33: #{tpu_custom_call.1} parent=11 // pred_check
          %p634 = pneg %p256
        $region34: #{tpu_custom_call.1} parent=11 // pred_check_branch
          %636 = sbr.rel (%p634) target = $region36
        $region35: #{tpu_custom_call.1} parent=11 // pred_region
          %s638 = ssub.s32 256, 256
          %639 = vsyncadd [#allocation13], %s638
          %s640 = sshll.u32 [#allocation12], 4
          %s641 = int_to_ptr.vmem [resolvable:$true] %s640
          %646 = dma.hbm_to_vmem [thread:$0]  %s8, 256, %s641, [#allocation13], 64, 64, 4
        $region36: #{tpu_custom_call.1} parent=11 // pred_fallthru
          _
        // Predicated region
        $region37: #{tpu_custom_call.1} parent=11 // pred_check
          %p647 = pneg %p277
        $region38: #{tpu_custom_call.1} parent=11 // pred_check_branch
          %649 = sbr.rel (%p647) target = $region40
        $region39: #{tpu_custom_call.1} parent=11 // pred_region
          %s651 = ssub.s32 16, 16
          %652 = vsyncadd [#allocation13], %s651
          %s654 = sshll.u32 [#allocation14], 4
          %s655 = int_to_ptr.vmem [resolvable:$true] %s654
          %657 = dma.hbm_to_vmem [thread:$0]  %s9, 16, %s655, [#allocation13]
        $region40: #{tpu_custom_call.1} parent=11 // pred_fallthru
          _
        // Predicated region
        $region41: #{tpu_custom_call.1} parent=11 // pred_check
          %p658 = pneg %p298
        $region42: #{tpu_custom_call.1} parent=11 // pred_check_branch
          %660 = sbr.rel (%p658) target = $region44
        $region43: #{tpu_custom_call.1} parent=11 // pred_region
          %s662 = ssub.s32 16, 16
          %663 = vsyncadd [#allocation16], %s662
          %s665 = sshll.u32 [#allocation15], 4
          %s666 = int_to_ptr.vmem [resolvable:$true] %s665
          %668 = dma.hbm_to_vmem [thread:$0]  %s10, 16, %s666, [#allocation16]
        $region44: #{tpu_custom_call.1} parent=11 // pred_fallthru
          _
        // Predicated region
        $region45: #{tpu_custom_call.1} parent=11 // pred_check
          %p669 = pneg %p319
        $region46: #{tpu_custom_call.1} parent=11 // pred_check_branch
          %671 = sbr.rel (%p669) target = $region48
        $region47: #{tpu_custom_call.1} parent=11 // pred_region
          %s673 = ssub.s32 16, 16
          %674 = vsyncadd [#allocation16], %s673
          %s676 = sshll.u32 [#allocation17], 4
          %s677 = int_to_ptr.vmem [resolvable:$true] %s676
          %679 = dma.hbm_to_vmem [thread:$0]  %s11, 16, %s677, [#allocation16]
        $region48: #{tpu_custom_call.1} parent=11 // pred_fallthru
          _
        // Predicated region
        $region49: #{tpu_custom_call.1} parent=11 // pred_check
          %p680 = pneg %p340
        $region50: #{tpu_custom_call.1} parent=11 // pred_check_branch
          %682 = sbr.rel (%p680) target = $region52
        $region51: #{tpu_custom_call.1} parent=11 // pred_region
          _
        $region52: #{tpu_custom_call.1} parent=11 // pred_fallthru
          _
        // Predicated region
        $region53: #{tpu_custom_call.1} parent=11 // pred_check
          %p683 = pneg %p361
        $region54: #{tpu_custom_call.1} parent=11 // pred_check_branch
          %685 = sbr.rel (%p683) target = $region56
        $region55: #{tpu_custom_call.1} parent=11 // pred_region
          %s687 = ssub.s32 128, 128
          %688 = vsyncadd [#allocation19], %s687
          %s689 = sshll.u32 [#allocation18], 4
          %s690 = int_to_ptr.vmem [resolvable:$true] %s689
          %695 = dma.hbm_to_vmem [thread:$0]  %s13, 128, %s690, [#allocation19], 64, 64, 4
        $region56: #{tpu_custom_call.1} parent=11 // pred_fallthru
          _
        // Predicated region
        $region57: #{tpu_custom_call.1} parent=11 // pred_check
          %p696 = pneg %p382
        $region58: #{tpu_custom_call.1} parent=11 // pred_check_branch
          %698 = sbr.rel (%p696) target = $region60
        $region59: #{tpu_custom_call.1} parent=11 // pred_region
          %s700 = ssub.s32 128, 128
          %701 = vsyncadd [#allocation19], %s700
          %s702 = sshll.u32 [#allocation20], 4
          %s703 = int_to_ptr.vmem [resolvable:$true] %s702
          %708 = dma.hbm_to_vmem [thread:$0]  %s14, 128, %s703, [#allocation19], 64, 64, 4
        $region60: #{tpu_custom_call.1} parent=11 // pred_fallthru
          _
        // Predicated region
        $region61: #{tpu_custom_call.1} parent=11 // pred_check
          %p709 = pneg %p403
        $region62: #{tpu_custom_call.1} parent=11 // pred_check_branch
          %711 = sbr.rel (%p709) target = $region64
        $region63: #{tpu_custom_call.1} parent=11 // pred_region
          _
        $region64: #{tpu_custom_call.1} parent=11 // pred_fallthru
          _
        // Predicated region
        $region65: #{tpu_custom_call.1} parent=11 // pred_check
          %p712 = pneg %p424
        $region66: #{tpu_custom_call.1} parent=11 // pred_check_branch
          %714 = sbr.rel (%p712) target = $region68
        $region67: #{tpu_custom_call.1} parent=11 // pred_region
          %s716 = ssub.s32 16, 16
          %717 = vsyncadd [#allocation22], %s716
          %s719 = sshll.u32 [#allocation21], 4
          %s720 = int_to_ptr.vmem [resolvable:$true] %s719
          %722 = dma.hbm_to_vmem [thread:$0]  %s16, 16, %s720, [#allocation22]
        $region68: #{tpu_custom_call.1} parent=11 // pred_fallthru
          _
        // Predicated region
        $region69: #{tpu_custom_call.1} parent=11 // pred_check
          %p723 = pneg %p445
        $region70: #{tpu_custom_call.1} parent=11 // pred_check_branch
          %725 = sbr.rel (%p723) target = $region72
        $region71: #{tpu_custom_call.1} parent=11 // pred_region
          %s727 = ssub.s32 16, 16
          %728 = vsyncadd [#allocation22], %s727
          %s730 = sshll.u32 [#allocation23], 4
          %s731 = int_to_ptr.vmem [resolvable:$true] %s730
          %733 = dma.hbm_to_vmem [thread:$0]  %s17, 16, %s731, [#allocation22]
        $region72: #{tpu_custom_call.1} parent=11 // pred_fallthru
          _
        // Predicated region
        $region73: #{tpu_custom_call.1} parent=11 // pred_check
          %p734 = pneg %p466
        $region74: #{tpu_custom_call.1} parent=11 // pred_check_branch
          %736 = sbr.rel (%p734) target = $region76
        $region75: #{tpu_custom_call.1} parent=11 // pred_region
          _
        $region76: #{tpu_custom_call.1} parent=11 // pred_fallthru
          _
        // Predicated region
        $region77: #{tpu_custom_call.1} parent=11 // pred_check
          %p737 = pneg %p487
        $region78: #{tpu_custom_call.1} parent=11 // pred_check_branch
          %739 = sbr.rel (%p737) target = $region80
        $region79: #{tpu_custom_call.1} parent=11 // pred_region
          _
        $region80: #{tpu_custom_call.1} parent=11 // pred_fallthru
          _
        // Predicated region
        $region81: #{tpu_custom_call.1} parent=11 // pred_check
          %p740 = pneg %p508
        $region82: #{tpu_custom_call.1} parent=11 // pred_check_branch
          %742 = sbr.rel (%p740) target = $region84
        $region83: #{tpu_custom_call.1} parent=11 // pred_region
          _
        $region84: #{tpu_custom_call.1} parent=11 // pred_fallthru
          _
        // Predicated region
        $region85: #{tpu_custom_call.1} parent=11 // pred_check
          %p743 = pneg %p529
        $region86: #{tpu_custom_call.1} parent=11 // pred_check_branch
          %745 = sbr.rel (%p743) target = $region88
        $region87: #{tpu_custom_call.1} parent=11 // pred_region
          _
        $region88: #{tpu_custom_call.1} parent=11 // pred_fallthru
          _
        // Predicated region
        $region89: #{tpu_custom_call.1} parent=11 // pred_check
          %p746 = pneg %p550
        $region90: #{tpu_custom_call.1} parent=11 // pred_check_branch
          %748 = sbr.rel (%p746) target = $region92
        $region91: #{tpu_custom_call.1} parent=11 // pred_region
          _
        $region92: #{tpu_custom_call.1} parent=11 // pred_fallthru
          _
      $region12: #{tpu_custom_call.1} parent=5 // pred_fallthru
        _
      %p749 = scmp.lt.s32.totalorder %s38, 2
      // Predicated region
      $region93: #{tpu_custom_call.1} parent=5 // pred_check
        %p750 = pneg %p749
      $region94: #{tpu_custom_call.1} parent=5 // pred_check_branch
        %752 = sbr.rel (%p750) target = $region96
      $region95: #{tpu_custom_call.1} parent=5 // pred_region
        // Predicated region
        $region97: #{tpu_custom_call.1} parent=95 // pred_check
          %p753 = pneg %p72
        $region98: #{tpu_custom_call.1} parent=95 // pred_check_branch
          %755 = sbr.rel (%p753) target = $region100
        $region99: #{tpu_custom_call.1} parent=95 // pred_region
          %p756 = scmp.lt.s32.totalorder %s45, 1
          %s757 = scalar_select %p756, %s45, 1
          %p758 = scmp.lt.s32.totalorder %s46, 0
          %s759 = scalar_select %p758, %s46, 0
          %s760 = sadd.s32 %s759, %s757
          %s761 = smul.addr %s760, 8
          %s762 = scalar_lea.vmem %s0, %s761
        $region100: #{tpu_custom_call.1} parent=95 // pred_fallthru
          _
        // Predicated region
        $region101: #{tpu_custom_call.1} parent=95 // pred_check
          %p763 = pneg %p98
        $region102: #{tpu_custom_call.1} parent=95 // pred_check_branch
          %765 = sbr.rel (%p763) target = $region104
        $region103: #{tpu_custom_call.1} parent=95 // pred_region
          %p766 = scmp.lt.s32.totalorder %s45, 1
          %s767 = scalar_select %p766, %s45, 1
          %s768 = smul.addr %s767, 8
          %s769 = scalar_lea.vmem %s1, %s768
        $region104: #{tpu_custom_call.1} parent=95 // pred_fallthru
          _
        // Predicated region
        $region105: #{tpu_custom_call.1} parent=95 // pred_check
          %p770 = pneg %p124
        $region106: #{tpu_custom_call.1} parent=95 // pred_check_branch
          %772 = sbr.rel (%p770) target = $region108
        $region107: #{tpu_custom_call.1} parent=95 // pred_region
          %p773 = scmp.lt.s32.totalorder %s45, 1
          %s774 = scalar_select %p773, %s45, 1
          %s775 = smul.addr %s774, 8
          %s776 = scalar_lea.vmem %s2, %s775
        $region108: #{tpu_custom_call.1} parent=95 // pred_fallthru
          _
      $region96: #{tpu_custom_call.1} parent=5 // pred_fallthru
        _
      %p777 = scmp.le.s32.totalorder 1, %s38
      %p778 = scmp.lt.s32.totalorder %s38, 3
      %p779 = pnand %p777, %p778
      %p780 = pneg %p779
      // Predicated region
      $region109: #{tpu_custom_call.1} parent=5 // pred_check
        _
      $region110: #{tpu_custom_call.1} parent=5 // pred_check_branch
        %782 = sbr.rel (%p779) target = $region112
      $region111: #{tpu_custom_call.1} parent=5 // pred_region
        %s783 = ssub.s32 %s38, 1
        // Predicated region
        $region113: #{tpu_custom_call.1} parent=111 // pred_check
          %p784 = pneg %p151
        $region114: #{tpu_custom_call.1} parent=111 // pred_check_branch
          %786 = sbr.rel (%p784) target = $region116
        $region115: #{tpu_custom_call.1} parent=111 // pred_region
          %787 = dma.done [#allocation7], 16
        $region116: #{tpu_custom_call.1} parent=111 // pred_fallthru
          _
        // Predicated region
        $region117: #{tpu_custom_call.1} parent=111 // pred_check
          %p788 = pneg %p172
        $region118: #{tpu_custom_call.1} parent=111 // pred_check_branch
          %790 = sbr.rel (%p788) target = $region120
        $region119: #{tpu_custom_call.1} parent=111 // pred_region
          %791 = dma.done [#allocation10], 16
        $region120: #{tpu_custom_call.1} parent=111 // pred_fallthru
          _
        // Predicated region
        $region121: #{tpu_custom_call.1} parent=111 // pred_check
          %p792 = pneg %p235
        $region122: #{tpu_custom_call.1} parent=111 // pred_check_branch
          %794 = sbr.rel (%p792) target = $region124
        $region123: #{tpu_custom_call.1} parent=111 // pred_region
          %795 = dma.done [#allocation10], 256
        $region124: #{tpu_custom_call.1} parent=111 // pred_fallthru
          _
        // Predicated region
        $region125: #{tpu_custom_call.1} parent=111 // pred_check
          %p796 = pneg %p256
        $region126: #{tpu_custom_call.1} parent=111 // pred_check_branch
          %798 = sbr.rel (%p796) target = $region128
        $region127: #{tpu_custom_call.1} parent=111 // pred_region
          %799 = dma.done [#allocation13], 256
        $region128: #{tpu_custom_call.1} parent=111 // pred_fallthru
          _
        // Predicated region
        $region129: #{tpu_custom_call.1} parent=111 // pred_check
          %p800 = pneg %p277
        $region130: #{tpu_custom_call.1} parent=111 // pred_check_branch
          %802 = sbr.rel (%p800) target = $region132
        $region131: #{tpu_custom_call.1} parent=111 // pred_region
          %803 = dma.done [#allocation13], 16
        $region132: #{tpu_custom_call.1} parent=111 // pred_fallthru
          _
        // Predicated region
        $region133: #{tpu_custom_call.1} parent=111 // pred_check
          %p804 = pneg %p298
        $region134: #{tpu_custom_call.1} parent=111 // pred_check_branch
          %806 = sbr.rel (%p804) target = $region136
        $region135: #{tpu_custom_call.1} parent=111 // pred_region
          %807 = dma.done [#allocation16], 16
        $region136: #{tpu_custom_call.1} parent=111 // pred_fallthru
          _
        // Predicated region
        $region137: #{tpu_custom_call.1} parent=111 // pred_check
          %p808 = pneg %p319
        $region138: #{tpu_custom_call.1} parent=111 // pred_check_branch
          %810 = sbr.rel (%p808) target = $region140
        $region139: #{tpu_custom_call.1} parent=111 // pred_region
          %811 = dma.done [#allocation16], 16
        $region140: #{tpu_custom_call.1} parent=111 // pred_fallthru
          _
        // Predicated region
        $region141: #{tpu_custom_call.1} parent=111 // pred_check
          %p812 = pneg %p361
        $region142: #{tpu_custom_call.1} parent=111 // pred_check_branch
          %814 = sbr.rel (%p812) target = $region144
        $region143: #{tpu_custom_call.1} parent=111 // pred_region
          %815 = dma.done [#allocation19], 128
        $region144: #{tpu_custom_call.1} parent=111 // pred_fallthru
          _
        // Predicated region
        $region145: #{tpu_custom_call.1} parent=111 // pred_check
          %p816 = pneg %p382
        $region146: #{tpu_custom_call.1} parent=111 // pred_check_branch
          %818 = sbr.rel (%p816) target = $region148
        $region147: #{tpu_custom_call.1} parent=111 // pred_region
          %819 = dma.done [#allocation19], 128
        $region148: #{tpu_custom_call.1} parent=111 // pred_fallthru
          _
        // Predicated region
        $region149: #{tpu_custom_call.1} parent=111 // pred_check
          %p820 = pneg %p424
        $region150: #{tpu_custom_call.1} parent=111 // pred_check_branch
          %822 = sbr.rel (%p820) target = $region152
        $region151: #{tpu_custom_call.1} parent=111 // pred_region
          %823 = dma.done [#allocation22], 16
        $region152: #{tpu_custom_call.1} parent=111 // pred_fallthru
          _
        // Predicated region
        $region153: #{tpu_custom_call.1} parent=111 // pred_check
          %p824 = pneg %p445
        $region154: #{tpu_custom_call.1} parent=111 // pred_check_branch
          %826 = sbr.rel (%p824) target = $region156
        $region155: #{tpu_custom_call.1} parent=111 // pred_region
          %827 = dma.done [#allocation22], 16
        $region156: #{tpu_custom_call.1} parent=111 // pred_fallthru
          _
        %p828 = scmp.lt.s32.totalorder %s47, 1
        %s829 = scalar_select %p828, %s47, 1
        %p830 = scmp.lt.s32.totalorder %s48, 0
        %s831 = scalar_select %p830, %s48, 0
        %s832 = sadd.s32 %s831, %s829
        %s833 = smul.addr %s832, 8
        %s834 = scalar_lea.vmem %s0, %s833
        %p835 = pneg %p78
        %p836 = pneg %p75
        %p837 = scmp.lt.s32.totalorder %s47, 1
        %s838 = scalar_select %p837, %s47, 1
        %s839 = smul.addr %s838, 8
        %s840 = scalar_lea.vmem %s1, %s839
        %p841 = pneg %p104
        %p842 = pneg %p101
        %p843 = scmp.lt.s32.totalorder %s47, 1
        %s844 = scalar_select %p843, %s47, 1
        %s845 = smul.addr %s844, 8
        %s846 = scalar_lea.vmem %s2, %s845
        %p847 = pneg %p130
        %p848 = pneg %p127
        %p849 = pneg %p151
        %p850 = pneg %p148
        %p851 = pneg %p172
        %p852 = pneg %p169
        %p853 = pneg %p193
        %p854 = pneg %p190
        %p855 = pneg %p214
        %p856 = pneg %p211
        %p857 = pneg %p235
        %p858 = pneg %p232
        %p859 = pneg %p256
        %p860 = pneg %p253
        %p861 = pneg %p277
        %p862 = pneg %p274
        %p863 = pneg %p298
        %p864 = pneg %p295
        %p865 = pneg %p319
        %p866 = pneg %p316
        %p867 = pneg %p340
        %p868 = pneg %p337
        %p869 = pneg %p361
        %p870 = pneg %p358
        %p871 = pneg %p382
        %p872 = pneg %p379
        %p873 = pneg %p403
        %p874 = pneg %p400
        %p875 = pneg %p424
        %p876 = pneg %p421
        %p877 = pneg %p445
        %p878 = pneg %p442
        %p879 = pneg %p466
        %p880 = pneg %p463
        %p881 = pneg %p487
        %p882 = pneg %p484
        %p883 = pneg %p508
        %p884 = pneg %p505
        %p885 = pneg %p529
        %p886 = pneg %p526
        %p887 = pneg %p550
        %p888 = pneg %p547
        %p889 = pneg %p578
        %p890 = pneg %p575
        %s891 = sand.u32 %s565, 1
        %s892 = scalar_lea.sflag [#allocation8], %s891
        %s893 = sand.u32 %s565, 1
        %s894 = smul.addr %s893, 8
        %s895 = scalar_lea.vmem [#allocation24], %s894
        %p896 = scmp.lt.s32.totalorder %s47, 1
        %s897 = scalar_select %p896, %s47, 1
        %p898 = scmp.lt.s32.totalorder %s48, 0
        %s899 = scalar_select %p898, %s48, 0
        %s900 = sadd.s32 %s899, %s897
        %s901 = smul.addr %s900, 8
        %s902 = scalar_lea.vmem %s0, %s901
        %p903 = scmp.lt.s32.totalorder %s47, 1
        %s904 = scalar_select %p903, %s47, 1
        %s905 = smul.addr %s904, 8
        %s906 = scalar_lea.vmem %s1, %s905
        %p907 = scmp.lt.s32.totalorder %s47, 1
        %s908 = scalar_select %p907, %s47, 1
        %s909 = smul.addr %s908, 8
        %s910 = scalar_lea.vmem %s2, %s909
        %p912 = scmp.eq.s32.totalorder %s48, 0
        // Predicated region
        $region157: #{tpu_custom_call.1} parent=111 // pred_check
          %p913 = pneg %p912
        $region158: #{tpu_custom_call.1} parent=111 // pred_check_branch
          %915 = sbr.rel (%p913) target = $region160
        $region159: #{tpu_custom_call.1} parent=111 // pred_region
          %v916 = vld [vmem:[%s906] sm:$0xff]
          %v917 = vld [vmem:[#allocation6] sm:$0x1]
          %v918 = vld [vmem:[#allocation9] sm:$0x1]
          %vm919 = vcmask 261120
          %v920 = vsel %vm919, %v916, 0.0
          %921 = vadd.xlane.f32.xlu0 %v920
          %v922 = vpop.xlane.xlu0 %921
          %v923 = vrcp.pop 32.0
          %v924 = vmul.f32 %v922, %v923
          %v925 = vsub.f32 %v916, %v924
          %v926 = vmul.f32 %v925, %v925
          %v927 = vsel %vm919, %v926, 0.0
          %928 = vadd.xlane.f32.xlu0 %v927
          %v929 = vpop.xlane.xlu0 %928
          %v930 = vmul.f32 %v929, %v923
          %v931 = vadd.f32 %v930, 1e-05
          %v932 = vrsqrt.pop %v931
          %v933 = vmul.f32 %v925, %v932
          %v935 = vlaneseq
          %v936 = vshrl.u32 %v935, 7
          %v937 = vsub.s32 0, %v936
          %v938 = vrot.slane %v917, %v937
          %v940 = vmul.f32 %v933, %v938
          %v942 = vlaneseq
          %v943 = vshrl.u32 %v942, 7
          %v944 = vsub.s32 0, %v943
          %v945 = vrot.slane %v918, %v944
          %v947 = vadd.f32 %v940, %v945
          %v948 = vpack.c.bf16 %v947, %v947
          %v949 = vld [vmem:[%s6] sm:$0xf]
          %v950 = vld [vmem:[%s6 + $0x4] sm:$0xf]
          %v951 = vld [vmem:[%s6 + $0x8] sm:$0xf]
          %v952 = vld [vmem:[%s6 + $0xc] sm:$0xf]
          %v957 = vunpack.c.l.b16 %v949
          %v958 = vunpack.c.l.b16 %v950
          %v959 = vunpack.c.l.b16 %v951
          %v960 = vunpack.c.l.b16 %v952
          %v961 = vpack.c.b16 %v958, %v957
          %v962 = vpack.c.b16 %v960, %v959
          %v966 = vsel %vm919, %v948, 0
          %968 = vmatprep.subr.bf16.mxu0 0
          %969 = vmatpush1.bf16.msra.mxu0 %v961
          %970 = vmatprep.subr.bf16.mxu0 0
          %971 = vmatpush1.bf16.msra.mxu0 %v962
          %972 = vmatprep.subr.bf16.mxu0 0
          %973 = vmatpush1.bf16.msra.mxu0 0
          %974 = vmatprep.subr.bf16.mxu0 0
          %975 = vmatpush1.bf16.msra.mxu0 0
          %976 = vmatprep.subr.bf16.mxu0 0
          %977 = vmatpush1.bf16.msra.mxu0 0
          %978 = vmatprep.subr.bf16.mxu0 0
          %979 = vmatpush1.bf16.msra.mxu0 0
          %980 = vmatprep.subr.bf16.mxu0 0
          %981 = vmatpush1.bf16.msra.mxu0 0
          %982 = vmatprep.subr.bf16.mxu0 0
          %983 = vmatpush1.bf16.msra.mxu0 0
          %984 = vmatprep.subr.bf16.mxu0 0
          %985 = vmatpush1.bf16.msra.mxu0 0
          %986 = vmatprep.subr.bf16.mxu0 0
          %987 = vmatpush1.bf16.msra.mxu0 0
          %988 = vmatprep.subr.bf16.mxu0 0
          %989 = vmatpush1.bf16.msra.mxu0 0
          %990 = vmatprep.subr.bf16.mxu0 0
          %991 = vmatpush1.bf16.msra.mxu0 0
          %992 = vmatprep.subr.bf16.mxu0 0
          %993 = vmatpush1.bf16.msra.mxu0 0
          %994 = vmatprep.subr.bf16.mxu0 0
          %995 = vmatpush1.bf16.msra.mxu0 0
          %996 = vmatprep.subr.bf16.mxu0 0
          %997 = vmatpush1.bf16.msra.mxu0 0
          %998 = vmatprep.subr.bf16.mxu0 0
          %999 = vmatpush1.bf16.msra.mxu0 0
          %1000 = vmatprep.mubr.bf16.mxu0 0
          %1001 = vmatmul.mubr.bf16.gmra.mrb[0].mxu0 %v966
          %v1002 = vpop.f32.mrb[0].mxu0
          %v1003 = vadd.f32 0.0, %v1002
          %v1004 = vpop.f32.mrb[0].mxu0
          %v1005 = vpop.f32.mrb[0].mxu0
          %v1006 = vpop.f32.mrb[0].mxu0
          %1007 = vdwg.mxu0
          %v1008 = vpack.c.bf16 %v1003, %v1003
          %vm1009 = vcmask 257024
          %1010 = vst.msk [vmem:[#allocation2] sm:$0xf] %vm1009, %v1008
          %v1011 = vld [vmem:[#allocation11] sm:$0xf]
          %v1012 = vld [vmem:[#allocation11 + $0x4] sm:$0xf]
          %v1013 = vld [vmem:[#allocation11 + $0x8] sm:$0xf]
          %v1014 = vld [vmem:[#allocation11 + $0xc] sm:$0xf]
          %v1019 = vunpack.c.l.b16 %v1011
          %v1020 = vunpack.c.l.b16 %v1012
          %v1021 = vunpack.c.l.b16 %v1013
          %v1022 = vunpack.c.l.b16 %v1014
          %v1023 = vpack.c.b16 %v1020, %v1019
          %v1024 = vpack.c.b16 %v1022, %v1021
          %1027 = vmatprep.subr.bf16.mxu0 0
          %1028 = vmatpush1.bf16.msra.mxu0 %v1023
          %1029 = vmatprep.subr.bf16.mxu0 0
          %1030 = vmatpush1.bf16.msra.mxu0 %v1024
          %1031 = vmatprep.subr.bf16.mxu0 0
          %1032 = vmatpush1.bf16.msra.mxu0 0
          %1033 = vmatprep.subr.bf16.mxu0 0
          %1034 = vmatpush1.bf16.msra.mxu0 0
          %1035 = vmatprep.subr.bf16.mxu0 0
          %1036 = vmatpush1.bf16.msra.mxu0 0
          %1037 = vmatprep.subr.bf16.mxu0 0
          %1038 = vmatpush1.bf16.msra.mxu0 0
          %1039 = vmatprep.subr.bf16.mxu0 0
          %1040 = vmatpush1.bf16.msra.mxu0 0
          %1041 = vmatprep.subr.bf16.mxu0 0
          %1042 = vmatpush1.bf16.msra.mxu0 0
          %1043 = vmatprep.subr.bf16.mxu0 0
          %1044 = vmatpush1.bf16.msra.mxu0 0
          %1045 = vmatprep.subr.bf16.mxu0 0
          %1046 = vmatpush1.bf16.msra.mxu0 0
          %1047 = vmatprep.subr.bf16.mxu0 0
          %1048 = vmatpush1.bf16.msra.mxu0 0
          %1049 = vmatprep.subr.bf16.mxu0 0
          %1050 = vmatpush1.bf16.msra.mxu0 0
          %1051 = vmatprep.subr.bf16.mxu0 0
          %1052 = vmatpush1.bf16.msra.mxu0 0
          %1053 = vmatprep.subr.bf16.mxu0 0
          %1054 = vmatpush1.bf16.msra.mxu0 0
          %1055 = vmatprep.subr.bf16.mxu0 0
          %1056 = vmatpush1.bf16.msra.mxu0 0
          %1057 = vmatprep.subr.bf16.mxu0 0
          %1058 = vmatpush1.bf16.msra.mxu0 0
          %1059 = vmatprep.mubr.bf16.mxu0 0
          %1060 = vmatmul.mubr.bf16.gmra.mrb[0].mxu0 %v966
          %v1061 = vpop.f32.mrb[0].mxu0
          %v1062 = vadd.f32 0.0, %v1061
          %v1063 = vpop.f32.mrb[0].mxu0
          %v1064 = vpop.f32.mrb[0].mxu0
          %v1065 = vpop.f32.mrb[0].mxu0
          %1066 = vdwg.mxu0
          %v1067 = vpack.c.bf16 %v1062, %v1062
          %1068 = vst.msk [vmem:[#allocation3] sm:$0xf] %vm1009, %v1067
          %v1069 = vld [vmem:[%s910] sm:$0xff]
          %v1070 = vpack.c.bf16 %v1069, %v1069
          %v1071 = vld [vmem:[#allocation18] sm:$0xf]
          %v1072 = vld [vmem:[#allocation18 + $0x4] sm:$0xf]
          %v1075 = vunpack.c.l.b16 %v1071
          %v1076 = vunpack.c.l.b16 %v1072
          %v1077 = vpack.c.b16 %v1076, %v1075
          %vm1079 = vcmask 130048
          %v1081 = vsel %vm1079, %v1070, 0
          %1083 = vmatprep.subr.bf16.mxu0 0
          %1084 = vmatpush1.bf16.msra.mxu0 %v1077
          %1085 = vmatprep.subr.bf16.mxu0 0
          %1086 = vmatpush1.bf16.msra.mxu0 0
          %1087 = vmatprep.subr.bf16.mxu0 0
          %1088 = vmatpush1.bf16.msra.mxu0 0
          %1089 = vmatprep.subr.bf16.mxu0 0
          %1090 = vmatpush1.bf16.msra.mxu0 0
          %1091 = vmatprep.subr.bf16.mxu0 0
          %1092 = vmatpush1.bf16.msra.mxu0 0
          %1093 = vmatprep.subr.bf16.mxu0 0
          %1094 = vmatpush1.bf16.msra.mxu0 0
          %1095 = vmatprep.subr.bf16.mxu0 0
          %1096 = vmatpush1.bf16.msra.mxu0 0
          %1097 = vmatprep.subr.bf16.mxu0 0
          %1098 = vmatpush1.bf16.msra.mxu0 0
          %1099 = vmatprep.subr.bf16.mxu0 0
          %1100 = vmatpush1.bf16.msra.mxu0 0
          %1101 = vmatprep.subr.bf16.mxu0 0
          %1102 = vmatpush1.bf16.msra.mxu0 0
          %1103 = vmatprep.subr.bf16.mxu0 0
          %1104 = vmatpush1.bf16.msra.mxu0 0
          %1105 = vmatprep.subr.bf16.mxu0 0
          %1106 = vmatpush1.bf16.msra.mxu0 0
          %1107 = vmatprep.subr.bf16.mxu0 0
          %1108 = vmatpush1.bf16.msra.mxu0 0
          %1109 = vmatprep.subr.bf16.mxu0 0
          %1110 = vmatpush1.bf16.msra.mxu0 0
          %1111 = vmatprep.subr.bf16.mxu0 0
          %1112 = vmatpush1.bf16.msra.mxu0 0
          %1113 = vmatprep.subr.bf16.mxu0 0
          %1114 = vmatpush1.bf16.msra.mxu0 0
          %1115 = vmatprep.mubr.bf16.mxu0 0
          %1116 = vmatmul.mubr.bf16.gmra.mrb[0].mxu0 %v1081
          %v1117 = vpop.f32.mrb[0].mxu0
          %v1118 = vadd.f32 0.0, %v1117
          %v1119 = vpop.f32.mrb[0].mxu0
          %v1120 = vpop.f32.mrb[0].mxu0
          %v1121 = vpop.f32.mrb[0].mxu0
          %1122 = vdwg.mxu0
          %v1123 = vpack.c.bf16 %v1118, %v1118
          %1124 = vst.msk [vmem:[#allocation4] sm:$0xf] %vm1009, %v1123
          %v1125 = vld [vmem:[#allocation20] sm:$0xf]
          %v1126 = vld [vmem:[#allocation20 + $0x4] sm:$0xf]
          %v1129 = vunpack.c.l.b16 %v1125
          %v1130 = vunpack.c.l.b16 %v1126
          %v1131 = vpack.c.b16 %v1130, %v1129
          %1133 = vmatprep.subr.bf16.mxu0 0
          %1134 = vmatpush1.bf16.msra.mxu0 %v1131
          %1135 = vmatprep.subr.bf16.mxu0 0
          %1136 = vmatpush1.bf16.msra.mxu0 0
          %1137 = vmatprep.subr.bf16.mxu0 0
          %1138 = vmatpush1.bf16.msra.mxu0 0
          %1139 = vmatprep.subr.bf16.mxu0 0
          %1140 = vmatpush1.bf16.msra.mxu0 0
          %1141 = vmatprep.subr.bf16.mxu0 0
          %1142 = vmatpush1.bf16.msra.mxu0 0
          %1143 = vmatprep.subr.bf16.mxu0 0
          %1144 = vmatpush1.bf16.msra.mxu0 0
          %1145 = vmatprep.subr.bf16.mxu0 0
          %1146 = vmatpush1.bf16.msra.mxu0 0
          %1147 = vmatprep.subr.bf16.mxu0 0
          %1148 = vmatpush1.bf16.msra.mxu0 0
          %1149 = vmatprep.subr.bf16.mxu0 0
          %1150 = vmatpush1.bf16.msra.mxu0 0
          %1151 = vmatprep.subr.bf16.mxu0 0
          %1152 = vmatpush1.bf16.msra.mxu0 0
          %1153 = vmatprep.subr.bf16.mxu0 0
          %1154 = vmatpush1.bf16.msra.mxu0 0
          %1155 = vmatprep.subr.bf16.mxu0 0
          %1156 = vmatpush1.bf16.msra.mxu0 0
          %1157 = vmatprep.subr.bf16.mxu0 0
          %1158 = vmatpush1.bf16.msra.mxu0 0
          %1159 = vmatprep.subr.bf16.mxu0 0
          %1160 = vmatpush1.bf16.msra.mxu0 0
          %1161 = vmatprep.subr.bf16.mxu0 0
          %1162 = vmatpush1.bf16.msra.mxu0 0
          %1163 = vmatprep.subr.bf16.mxu0 0
          %1164 = vmatpush1.bf16.msra.mxu0 0
          %1165 = vmatprep.mubr.bf16.mxu0 0
          %1166 = vmatmul.mubr.bf16.gmra.mrb[0].mxu0 %v1081
          %v1167 = vpop.f32.mrb[0].mxu0
          %v1168 = vadd.f32 0.0, %v1167
          %v1169 = vpop.f32.mrb[0].mxu0
          %v1170 = vpop.f32.mrb[0].mxu0
          %v1171 = vpop.f32.mrb[0].mxu0
          %1172 = vdwg.mxu0
          %v1173 = vpack.c.bf16 %v1168, %v1168
          %1174 = vst.msk [vmem:[#allocation5] sm:$0xf] %vm1009, %v1173
        $region160: #{tpu_custom_call.1} parent=111 // pred_fallthru
          _
        %v1175 = vld [vmem:[%s902] sm:$0xff]
        %v1176 = vld [vmem:[#allocation6] sm:$0x1]
        %v1177 = vld [vmem:[#allocation9] sm:$0x1]
        %vm1178 = vcmask 261120
        %v1179 = vsel %vm1178, %v1175, 0.0
        %1180 = vadd.xlane.f32.xlu0 %v1179
        %v1181 = vpop.xlane.xlu0 %1180
        %v1182 = vrcp.pop 32.0
        %v1183 = vmul.f32 %v1181, %v1182
        %v1184 = vsub.f32 %v1175, %v1183
        %v1185 = vmul.f32 %v1184, %v1184
        %v1186 = vsel %vm1178, %v1185, 0.0
        %1187 = vadd.xlane.f32.xlu0 %v1186
        %v1188 = vpop.xlane.xlu0 %1187
        %v1189 = vmul.f32 %v1188, %v1182
        %v1190 = vadd.f32 %v1189, 1e-05
        %v1191 = vrsqrt.pop %v1190
        %v1192 = vmul.f32 %v1184, %v1191
        %v1194 = vlaneseq
        %v1195 = vshrl.u32 %v1194, 7
        %v1196 = vsub.s32 0, %v1195
        %v1197 = vrot.slane %v1176, %v1196
        %v1199 = vmul.f32 %v1192, %v1197
        %v1201 = vlaneseq
        %v1202 = vshrl.u32 %v1201, 7
        %v1203 = vsub.s32 0, %v1202
        %v1204 = vrot.slane %v1177, %v1203
        %v1206 = vadd.f32 %v1199, %v1204
        %v1207 = vld [vmem:[#allocation2] sm:$0xf]
        %v1208 = vld [vmem:[#allocation3] sm:$0xf]
        %v1209 = vld [vmem:[%s5] sm:$0xf]
        %v1210 = vld [vmem:[%s5 + $0x4] sm:$0xf]
        %v1211 = vld [vmem:[%s5 + $0x8] sm:$0xf]
        %v1212 = vld [vmem:[%s5 + $0xc] sm:$0xf]
        %v1213 = vld [vmem:[#allocation12] sm:$0xf]
        %v1214 = vld [vmem:[#allocation12 + $0x4] sm:$0xf]
        %v1215 = vld [vmem:[#allocation12 + $0x8] sm:$0xf]
        %v1216 = vld [vmem:[#allocation12 + $0xc] sm:$0xf]
        %v1217 = vld [vmem:[#allocation14] sm:$0x1]
        %v1218 = vpack.c.bf16 %v1206, %v1206
        %v1223 = vunpack.c.l.b16 %v1209
        %v1224 = vunpack.c.l.b16 %v1210
        %v1225 = vunpack.c.l.b16 %v1211
        %v1226 = vunpack.c.l.b16 %v1212
        %v1227 = vpack.c.b16 %v1224, %v1223
        %v1228 = vpack.c.b16 %v1226, %v1225
        %v1232 = vsel %vm1178, %v1218, 0
        %1234 = vmatprep.subr.bf16.mxu0 0
        %1235 = vmatpush1.bf16.msra.mxu0 %v1227
        %1236 = vmatprep.subr.bf16.mxu0 0
        %1237 = vmatpush1.bf16.msra.mxu0 %v1228
        %1238 = vmatprep.subr.bf16.mxu0 0
        %1239 = vmatpush1.bf16.msra.mxu0 0
        %1240 = vmatprep.subr.bf16.mxu0 0
        %1241 = vmatpush1.bf16.msra.mxu0 0
        %1242 = vmatprep.subr.bf16.mxu0 0
        %1243 = vmatpush1.bf16.msra.mxu0 0
        %1244 = vmatprep.subr.bf16.mxu0 0
        %1245 = vmatpush1.bf16.msra.mxu0 0
        %1246 = vmatprep.subr.bf16.mxu0 0
        %1247 = vmatpush1.bf16.msra.mxu0 0
        %1248 = vmatprep.subr.bf16.mxu0 0
        %1249 = vmatpush1.bf16.msra.mxu0 0
        %1250 = vmatprep.subr.bf16.mxu0 0
        %1251 = vmatpush1.bf16.msra.mxu0 0
        %1252 = vmatprep.subr.bf16.mxu0 0
        %1253 = vmatpush1.bf16.msra.mxu0 0
        %1254 = vmatprep.subr.bf16.mxu0 0
        %1255 = vmatpush1.bf16.msra.mxu0 0
        %1256 = vmatprep.subr.bf16.mxu0 0
        %1257 = vmatpush1.bf16.msra.mxu0 0
        %1258 = vmatprep.subr.bf16.mxu0 0
        %1259 = vmatpush1.bf16.msra.mxu0 0
        %1260 = vmatprep.subr.bf16.mxu0 0
        %1261 = vmatpush1.bf16.msra.mxu0 0
        %1262 = vmatprep.subr.bf16.mxu0 0
        %1263 = vmatpush1.bf16.msra.mxu0 0
        %1264 = vmatprep.subr.bf16.mxu0 0
        %1265 = vmatpush1.bf16.msra.mxu0 0
        %1266 = vmatprep.mubr.bf16.mxu0 0
        %1267 = vmatmul.mubr.bf16.gmra.mrb[0].mxu0 %v1232
        %v1268 = vpop.f32.mrb[0].mxu0
        %v1269 = vadd.f32 0.0, %v1268
        %v1270 = vpop.f32.mrb[0].mxu0
        %v1271 = vpop.f32.mrb[0].mxu0
        %v1272 = vpop.f32.mrb[0].mxu0
        %1273 = vdwg.mxu0
        %v1274 = vmul.f32 %v1269, 0.35355338
        %v1275 = vpack.c.bf16 %v1274, %v1274
        %vm1276 = vcmask 64512
        %v1278 = vsel %vm1276, %v1275, 0
        %v1281 = vsel %vm1276, %v1207, 0
        %1283 = vmatprep.subr.bf16.mxu0 0
        %1284 = vmatpush1.bf16.xpose.msra.mxu0 %v1281
        %1285 = vmatprep.subr.bf16.mxu0 0
        %1286 = vmatpush1.bf16.xpose.msra.mxu0 0
        %1287 = vmatprep.subr.bf16.mxu0 0
        %1288 = vmatpush1.bf16.xpose.msra.mxu0 0
        %1289 = vmatprep.subr.bf16.mxu0 0
        %1290 = vmatpush1.bf16.xpose.msra.mxu0 0
        %1291 = vmatprep.subr.bf16.mxu0 0
        %1292 = vmatpush1.bf16.xpose.msra.mxu0 0
        %1293 = vmatprep.subr.bf16.mxu0 0
        %1294 = vmatpush1.bf16.xpose.msra.mxu0 0
        %1295 = vmatprep.subr.bf16.mxu0 0
        %1296 = vmatpush1.bf16.xpose.msra.mxu0 0
        %1297 = vmatprep.subr.bf16.mxu0 0
        %1298 = vmatpush1.bf16.xpose.msra.mxu0 0
        %1299 = vmatprep.subr.bf16.mxu0 0
        %1300 = vmatpush1.bf16.xpose.msra.mxu0 0
        %1301 = vmatprep.subr.bf16.mxu0 0
        %1302 = vmatpush1.bf16.xpose.msra.mxu0 0
        %1303 = vmatprep.subr.bf16.mxu0 0
        %1304 = vmatpush1.bf16.xpose.msra.mxu0 0
        %1305 = vmatprep.subr.bf16.mxu0 0
        %1306 = vmatpush1.bf16.xpose.msra.mxu0 0
        %1307 = vmatprep.subr.bf16.mxu0 0
        %1308 = vmatpush1.bf16.xpose.msra.mxu0 0
        %1309 = vmatprep.subr.bf16.mxu0 0
        %1310 = vmatpush1.bf16.xpose.msra.mxu0 0
        %1311 = vmatprep.subr.bf16.mxu0 0
        %1312 = vmatpush1.bf16.xpose.msra.mxu0 0
        %1313 = vmatprep.subr.bf16.mxu0 0
        %1314 = vmatpush1.bf16.xpose.msra.mxu0 0
        %1315 = vmatprep.mubr.bf16.mxu0 0
        %1316 = vmatmul.mubr.bf16.gmra.mrb[0].mxu0 %v1278
        %v1317 = vpop.f32.mrb[0].mxu0
        %v1318 = vadd.f32 0.0, %v1317
        %v1319 = vpop.f32.mrb[0].mxu0
        %v1320 = vpop.f32.mrb[0].mxu0
        %v1321 = vpop.f32.mrb[0].mxu0
        %1322 = vdwg.mxu0
        %v1323 = vsel %vm1276, %v1318, -inf
        %1324 = vmax.xlane.f32.xlu0 %v1323
        %v1325 = vpop.xlane.xlu0 %1324
        %v1326 = vsub.f32 %v1318, %v1325
        %v1327 = vmul.f32 %v1326, 1.442695
        %v1328 = vpow.pop %v1327
        %v1329 = vsel %vm1276, %v1328, 0.0
        %1330 = vadd.xlane.f32.xlu0 %v1329
        %v1331 = vpop.xlane.xlu0 %1330
        %v1332 = vrcp.pop %v1331
        %v1333 = vmul.f32 %v1328, %v1332
        %v1334 = vpack.c.bf16 %v1333, %v1333
        %v1336 = vsel %vm1276, %v1334, 0
        %vm1338 = vcmask 1043456
        %v1340 = vsel %vm1338, %v1208, 0
        %1342 = vmatprep.subr.bf16.mxu0 0
        %1343 = vmatpush1.bf16.msra.mxu0 %v1340
        %1344 = vmatprep.subr.bf16.mxu0 0
        %1345 = vmatpush1.bf16.msra.mxu0 0
        %1346 = vmatprep.subr.bf16.mxu0 0
        %1347 = vmatpush1.bf16.msra.mxu0 0
        %1348 = vmatprep.subr.bf16.mxu0 0
        %1349 = vmatpush1.bf16.msra.mxu0 0
        %1350 = vmatprep.subr.bf16.mxu0 0
        %1351 = vmatpush1.bf16.msra.mxu0 0
        %1352 = vmatprep.subr.bf16.mxu0 0
        %1353 = vmatpush1.bf16.msra.mxu0 0
        %1354 = vmatprep.subr.bf16.mxu0 0
        %1355 = vmatpush1.bf16.msra.mxu0 0
        %1356 = vmatprep.subr.bf16.mxu0 0
        %1357 = vmatpush1.bf16.msra.mxu0 0
        %1358 = vmatprep.subr.bf16.mxu0 0
        %1359 = vmatpush1.bf16.msra.mxu0 0
        %1360 = vmatprep.subr.bf16.mxu0 0
        %1361 = vmatpush1.bf16.msra.mxu0 0
        %1362 = vmatprep.subr.bf16.mxu0 0
        %1363 = vmatpush1.bf16.msra.mxu0 0
        %1364 = vmatprep.subr.bf16.mxu0 0
        %1365 = vmatpush1.bf16.msra.mxu0 0
        %1366 = vmatprep.subr.bf16.mxu0 0
        %1367 = vmatpush1.bf16.msra.mxu0 0
        %1368 = vmatprep.subr.bf16.mxu0 0
        %1369 = vmatpush1.bf16.msra.mxu0 0
        %1370 = vmatprep.subr.bf16.mxu0 0
        %1371 = vmatpush1.bf16.msra.mxu0 0
        %1372 = vmatprep.subr.bf16.mxu0 0
        %1373 = vmatpush1.bf16.msra.mxu0 0
        %1374 = vmatprep.mubr.bf16.mxu0 0
        %1375 = vmatmul.mubr.bf16.gmra.mrb[0].mxu0 %v1336
        %v1376 = vpop.f32.mrb[0].mxu0
        %v1377 = vadd.f32 0.0, %v1376
        %v1378 = vpop.f32.mrb[0].mxu0
        %v1379 = vpop.f32.mrb[0].mxu0
        %v1380 = vpop.f32.mrb[0].mxu0
        %1381 = vdwg.mxu0
        %1383 = vrot.lane.b32.xlu0 %v1275, 120
        %v1384 = vpop.permute.xlu0 %1383
        %v1386 = vunpack.c.l.b16 %v1207
        %v1387 = vpack.c.b16 %v1386, %v1386
        %1388 = vrot.lane.b32.xlu0 %v1387, 120
        %v1389 = vpop.permute.xlu0 %1388
        %v1391 = vsel %vm1276, %v1384, 0
        %v1394 = vsel %vm1276, %v1389, 0
        %1396 = vmatprep.subr.bf16.mxu0 0
        %1397 = vmatpush1.bf16.xpose.msra.mxu0 %v1394
        %1398 = vmatprep.subr.bf16.mxu0 0
        %1399 = vmatpush1.bf16.xpose.msra.mxu0 0
        %1400 = vmatprep.subr.bf16.mxu0 0
        %1401 = vmatpush1.bf16.xpose.msra.mxu0 0
        %1402 = vmatprep.subr.bf16.mxu0 0
        %1403 = vmatpush1.bf16.xpose.msra.mxu0 0
        %1404 = vmatprep.subr.bf16.mxu0 0
        %1405 = vmatpush1.bf16.xpose.msra.mxu0 0
        %1406 = vmatprep.subr.bf16.mxu0 0
        %1407 = vmatpush1.bf16.xpose.msra.mxu0 0
        %1408 = vmatprep.subr.bf16.mxu0 0
        %1409 = vmatpush1.bf16.xpose.msra.mxu0 0
        %1410 = vmatprep.subr.bf16.mxu0 0
        %1411 = vmatpush1.bf16.xpose.msra.mxu0 0
        %1412 = vmatprep.subr.bf16.mxu0 0
        %1413 = vmatpush1.bf16.xpose.msra.mxu0 0
        %1414 = vmatprep.subr.bf16.mxu0 0
        %1415 = vmatpush1.bf16.xpose.msra.mxu0 0
        %1416 = vmatprep.subr.bf16.mxu0 0
        %1417 = vmatpush1.bf16.xpose.msra.mxu0 0
        %1418 = vmatprep.subr.bf16.mxu0 0
        %1419 = vmatpush1.bf16.xpose.msra.mxu0 0
        %1420 = vmatprep.subr.bf16.mxu0 0
        %1421 = vmatpush1.bf16.xpose.msra.mxu0 0
        %1422 = vmatprep.subr.bf16.mxu0 0
        %1423 = vmatpush1.bf16.xpose.msra.mxu0 0
        %1424 = vmatprep.subr.bf16.mxu0 0
        %1425 = vmatpush1.bf16.xpose.msra.mxu0 0
        %1426 = vmatprep.subr.bf16.mxu0 0
        %1427 = vmatpush1.bf16.xpose.msra.mxu0 0
        %1428 = vmatprep.mubr.bf16.mxu0 0
        %1429 = vmatmul.mubr.bf16.gmra.mrb[0].mxu0 %v1391
        %v1430 = vpop.f32.mrb[0].mxu0
        %v1431 = vadd.f32 0.0, %v1430
        %v1432 = vpop.f32.mrb[0].mxu0
        %v1433 = vpop.f32.mrb[0].mxu0
        %v1434 = vpop.f32.mrb[0].mxu0
        %1435 = vdwg.mxu0
        %v1436 = vsel %vm1276, %v1431, -inf
        %1437 = vmax.xlane.f32.xlu0 %v1436
        %v1438 = vpop.xlane.xlu0 %1437
        %v1439 = vsub.f32 %v1431, %v1438
        %v1440 = vmul.f32 %v1439, 1.442695
        %v1441 = vpow.pop %v1440
        %v1442 = vsel %vm1276, %v1441, 0.0
        %1443 = vadd.xlane.f32.xlu0 %v1442
        %v1444 = vpop.xlane.xlu0 %1443
        %v1445 = vrcp.pop %v1444
        %v1446 = vmul.f32 %v1441, %v1445
        %v1447 = vpack.c.bf16 %v1446, %v1446
        %v1449 = vunpack.c.l.b16 %v1208
        %v1450 = vpack.c.b16 %v1449, %v1449
        %1451 = vrot.lane.b32.xlu0 %v1450, 120
        %v1452 = vpop.permute.xlu0 %1451
        %v1454 = vsel %vm1276, %v1447, 0
        %v1457 = vsel %vm1338, %v1452, 0
        %1459 = vmatprep.subr.bf16.mxu0 0
        %1460 = vmatpush1.bf16.msra.mxu0 %v1457
        %1461 = vmatprep.subr.bf16.mxu0 0
        %1462 = vmatpush1.bf16.msra.mxu0 0
        %1463 = vmatprep.subr.bf16.mxu0 0
        %1464 = vmatpush1.bf16.msra.mxu0 0
        %1465 = vmatprep.subr.bf16.mxu0 0
        %1466 = vmatpush1.bf16.msra.mxu0 0
        %1467 = vmatprep.subr.bf16.mxu0 0
        %1468 = vmatpush1.bf16.msra.mxu0 0
        %1469 = vmatprep.subr.bf16.mxu0 0
        %1470 = vmatpush1.bf16.msra.mxu0 0
        %1471 = vmatprep.subr.bf16.mxu0 0
        %1472 = vmatpush1.bf16.msra.mxu0 0
        %1473 = vmatprep.subr.bf16.mxu0 0
        %1474 = vmatpush1.bf16.msra.mxu0 0
        %1475 = vmatprep.subr.bf16.mxu0 0
        %1476 = vmatpush1.bf16.msra.mxu0 0
        %1477 = vmatprep.subr.bf16.mxu0 0
        %1478 = vmatpush1.bf16.msra.mxu0 0
        %1479 = vmatprep.subr.bf16.mxu0 0
        %1480 = vmatpush1.bf16.msra.mxu0 0
        %1481 = vmatprep.subr.bf16.mxu0 0
        %1482 = vmatpush1.bf16.msra.mxu0 0
        %1483 = vmatprep.subr.bf16.mxu0 0
        %1484 = vmatpush1.bf16.msra.mxu0 0
        %1485 = vmatprep.subr.bf16.mxu0 0
        %1486 = vmatpush1.bf16.msra.mxu0 0
        %1487 = vmatprep.subr.bf16.mxu0 0
        %1488 = vmatpush1.bf16.msra.mxu0 0
        %1489 = vmatprep.subr.bf16.mxu0 0
        %1490 = vmatpush1.bf16.msra.mxu0 0
        %1491 = vmatprep.mubr.bf16.mxu0 0
        %1492 = vmatmul.mubr.bf16.gmra.mrb[0].mxu0 %v1454
        %v1493 = vpop.f32.mrb[0].mxu0
        %v1494 = vadd.f32 0.0, %v1493
        %v1495 = vpop.f32.mrb[0].mxu0
        %v1496 = vpop.f32.mrb[0].mxu0
        %v1497 = vpop.f32.mrb[0].mxu0
        %1498 = vdwg.mxu0
        %1499 = vrot.lane.b32.xlu0 %v1275, 112
        %v1500 = vpop.permute.xlu0 %1499
        %1501 = vrot.lane.b32.xlu0 %v1387, 112
        %v1502 = vpop.permute.xlu0 %1501
        %v1504 = vsel %vm1276, %v1500, 0
        %v1507 = vsel %vm1276, %v1502, 0
        %1509 = vmatprep.subr.bf16.mxu0 0
        %1510 = vmatpush1.bf16.xpose.msra.mxu0 %v1507
        %1511 = vmatprep.subr.bf16.mxu0 0
        %1512 = vmatpush1.bf16.xpose.msra.mxu0 0
        %1513 = vmatprep.subr.bf16.mxu0 0
        %1514 = vmatpush1.bf16.xpose.msra.mxu0 0
        %1515 = vmatprep.subr.bf16.mxu0 0
        %1516 = vmatpush1.bf16.xpose.msra.mxu0 0
        %1517 = vmatprep.subr.bf16.mxu0 0
        %1518 = vmatpush1.bf16.xpose.msra.mxu0 0
        %1519 = vmatprep.subr.bf16.mxu0 0
        %1520 = vmatpush1.bf16.xpose.msra.mxu0 0
        %1521 = vmatprep.subr.bf16.mxu0 0
        %1522 = vmatpush1.bf16.xpose.msra.mxu0 0
        %1523 = vmatprep.subr.bf16.mxu0 0
        %1524 = vmatpush1.bf16.xpose.msra.mxu0 0
        %1525 = vmatprep.subr.bf16.mxu0 0
        %1526 = vmatpush1.bf16.xpose.msra.mxu0 0
        %1527 = vmatprep.subr.bf16.mxu0 0
        %1528 = vmatpush1.bf16.xpose.msra.mxu0 0
        %1529 = vmatprep.subr.bf16.mxu0 0
        %1530 = vmatpush1.bf16.xpose.msra.mxu0 0
        %1531 = vmatprep.subr.bf16.mxu0 0
        %1532 = vmatpush1.bf16.xpose.msra.mxu0 0
        %1533 = vmatprep.subr.bf16.mxu0 0
        %1534 = vmatpush1.bf16.xpose.msra.mxu0 0
        %1535 = vmatprep.subr.bf16.mxu0 0
        %1536 = vmatpush1.bf16.xpose.msra.mxu0 0
        %1537 = vmatprep.subr.bf16.mxu0 0
        %1538 = vmatpush1.bf16.xpose.msra.mxu0 0
        %1539 = vmatprep.subr.bf16.mxu0 0
        %1540 = vmatpush1.bf16.xpose.msra.mxu0 0
        %1541 = vmatprep.mubr.bf16.mxu0 0
        %1542 = vmatmul.mubr.bf16.gmra.mrb[0].mxu0 %v1504
        %v1543 = vpop.f32.mrb[0].mxu0
        %v1544 = vadd.f32 0.0, %v1543
        %v1545 = vpop.f32.mrb[0].mxu0
        %v1546 = vpop.f32.mrb[0].mxu0
        %v1547 = vpop.f32.mrb[0].mxu0
        %1548 = vdwg.mxu0
        %v1549 = vsel %vm1276, %v1544, -inf
        %1550 = vmax.xlane.f32.xlu0 %v1549
        %v1551 = vpop.xlane.xlu0 %1550
        %v1552 = vsub.f32 %v1544, %v1551
        %v1553 = vmul.f32 %v1552, 1.442695
        %v1554 = vpow.pop %v1553
        %v1555 = vsel %vm1276, %v1554, 0.0
        %1556 = vadd.xlane.f32.xlu0 %v1555
        %v1557 = vpop.xlane.xlu0 %1556
        %v1558 = vrcp.pop %v1557
        %v1559 = vmul.f32 %v1554, %v1558
        %v1560 = vpack.c.bf16 %v1559, %v1559
        %1561 = vrot.lane.b32.xlu0 %v1450, 112
        %v1562 = vpop.permute.xlu0 %1561
        %v1564 = vsel %vm1276, %v1560, 0
        %v1567 = vsel %vm1338, %v1562, 0
        %1569 = vmatprep.subr.bf16.mxu0 0
        %1570 = vmatpush1.bf16.msra.mxu0 %v1567
        %1571 = vmatprep.subr.bf16.mxu0 0
        %1572 = vmatpush1.bf16.msra.mxu0 0
        %1573 = vmatprep.subr.bf16.mxu0 0
        %1574 = vmatpush1.bf16.msra.mxu0 0
        %1575 = vmatprep.subr.bf16.mxu0 0
        %1576 = vmatpush1.bf16.msra.mxu0 0
        %1577 = vmatprep.subr.bf16.mxu0 0
        %1578 = vmatpush1.bf16.msra.mxu0 0
        %1579 = vmatprep.subr.bf16.mxu0 0
        %1580 = vmatpush1.bf16.msra.mxu0 0
        %1581 = vmatprep.subr.bf16.mxu0 0
        %1582 = vmatpush1.bf16.msra.mxu0 0
        %1583 = vmatprep.subr.bf16.mxu0 0
        %1584 = vmatpush1.bf16.msra.mxu0 0
        %1585 = vmatprep.subr.bf16.mxu0 0
        %1586 = vmatpush1.bf16.msra.mxu0 0
        %1587 = vmatprep.subr.bf16.mxu0 0
        %1588 = vmatpush1.bf16.msra.mxu0 0
        %1589 = vmatprep.subr.bf16.mxu0 0
        %1590 = vmatpush1.bf16.msra.mxu0 0
        %1591 = vmatprep.subr.bf16.mxu0 0
        %1592 = vmatpush1.bf16.msra.mxu0 0
        %1593 = vmatprep.subr.bf16.mxu0 0
        %1594 = vmatpush1.bf16.msra.mxu0 0
        %1595 = vmatprep.subr.bf16.mxu0 0
        %1596 = vmatpush1.bf16.msra.mxu0 0
        %1597 = vmatprep.subr.bf16.mxu0 0
        %1598 = vmatpush1.bf16.msra.mxu0 0
        %1599 = vmatprep.subr.bf16.mxu0 0
        %1600 = vmatpush1.bf16.msra.mxu0 0
        %1601 = vmatprep.mubr.bf16.mxu0 0
        %1602 = vmatmul.mubr.bf16.gmra.mrb[0].mxu0 %v1564
        %v1603 = vpop.f32.mrb[0].mxu0
        %v1604 = vadd.f32 0.0, %v1603
        %v1605 = vpop.f32.mrb[0].mxu0
        %v1606 = vpop.f32.mrb[0].mxu0
        %v1607 = vpop.f32.mrb[0].mxu0
        %1608 = vdwg.mxu0
        %1609 = vrot.lane.b32.xlu0 %v1275, 104
        %v1610 = vpop.permute.xlu0 %1609
        %1611 = vrot.lane.b32.xlu0 %v1387, 104
        %v1612 = vpop.permute.xlu0 %1611
        %v1614 = vsel %vm1276, %v1610, 0
        %v1617 = vsel %vm1276, %v1612, 0
        %1619 = vmatprep.subr.bf16.mxu0 0
        %1620 = vmatpush1.bf16.xpose.msra.mxu0 %v1617
        %1621 = vmatprep.subr.bf16.mxu0 0
        %1622 = vmatpush1.bf16.xpose.msra.mxu0 0
        %1623 = vmatprep.subr.bf16.mxu0 0
        %1624 = vmatpush1.bf16.xpose.msra.mxu0 0
        %1625 = vmatprep.subr.bf16.mxu0 0
        %1626 = vmatpush1.bf16.xpose.msra.mxu0 0
        %1627 = vmatprep.subr.bf16.mxu0 0
        %1628 = vmatpush1.bf16.xpose.msra.mxu0 0
        %1629 = vmatprep.subr.bf16.mxu0 0
        %1630 = vmatpush1.bf16.xpose.msra.mxu0 0
        %1631 = vmatprep.subr.bf16.mxu0 0
        %1632 = vmatpush1.bf16.xpose.msra.mxu0 0
        %1633 = vmatprep.subr.bf16.mxu0 0
        %1634 = vmatpush1.bf16.xpose.msra.mxu0 0
        %1635 = vmatprep.subr.bf16.mxu0 0
        %1636 = vmatpush1.bf16.xpose.msra.mxu0 0
        %1637 = vmatprep.subr.bf16.mxu0 0
        %1638 = vmatpush1.bf16.xpose.msra.mxu0 0
        %1639 = vmatprep.subr.bf16.mxu0 0
        %1640 = vmatpush1.bf16.xpose.msra.mxu0 0
        %1641 = vmatprep.subr.bf16.mxu0 0
        %1642 = vmatpush1.bf16.xpose.msra.mxu0 0
        %1643 = vmatprep.subr.bf16.mxu0 0
        %1644 = vmatpush1.bf16.xpose.msra.mxu0 0
        %1645 = vmatprep.subr.bf16.mxu0 0
        %1646 = vmatpush1.bf16.xpose.msra.mxu0 0
        %1647 = vmatprep.subr.bf16.mxu0 0
        %1648 = vmatpush1.bf16.xpose.msra.mxu0 0
        %1649 = vmatprep.subr.bf16.mxu0 0
        %1650 = vmatpush1.bf16.xpose.msra.mxu0 0
        %1651 = vmatprep.mubr.bf16.mxu0 0
        %1652 = vmatmul.mubr.bf16.gmra.mrb[0].mxu0 %v1614
        %v1653 = vpop.f32.mrb[0].mxu0
        %v1654 = vadd.f32 0.0, %v1653
        %v1655 = vpop.f32.mrb[0].mxu0
        %v1656 = vpop.f32.mrb[0].mxu0
        %v1657 = vpop.f32.mrb[0].mxu0
        %1658 = vdwg.mxu0
        %v1659 = vsel %vm1276, %v1654, -inf
        %1660 = vmax.xlane.f32.xlu0 %v1659
        %v1661 = vpop.xlane.xlu0 %1660
        %v1662 = vsub.f32 %v1654, %v1661
        %v1663 = vmul.f32 %v1662, 1.442695
        %v1664 = vpow.pop %v1663
        %v1665 = vsel %vm1276, %v1664, 0.0
        %1666 = vadd.xlane.f32.xlu0 %v1665
        %v1667 = vpop.xlane.xlu0 %1666
        %v1668 = vrcp.pop %v1667
        %v1669 = vmul.f32 %v1664, %v1668
        %v1670 = vpack.c.bf16 %v1669, %v1669
        %1671 = vrot.lane.b32.xlu0 %v1450, 104
        %v1672 = vpop.permute.xlu0 %1671
        %v1674 = vsel %vm1276, %v1670, 0
        %v1677 = vsel %vm1338, %v1672, 0
        %1679 = vmatprep.subr.bf16.mxu0 0
        %1680 = vmatpush1.bf16.msra.mxu0 %v1677
        %1681 = vmatprep.subr.bf16.mxu0 0
        %1682 = vmatpush1.bf16.msra.mxu0 0
        %1683 = vmatprep.subr.bf16.mxu0 0
        %1684 = vmatpush1.bf16.msra.mxu0 0
        %1685 = vmatprep.subr.bf16.mxu0 0
        %1686 = vmatpush1.bf16.msra.mxu0 0
        %1687 = vmatprep.subr.bf16.mxu0 0
        %1688 = vmatpush1.bf16.msra.mxu0 0
        %1689 = vmatprep.subr.bf16.mxu0 0
        %1690 = vmatpush1.bf16.msra.mxu0 0
        %1691 = vmatprep.subr.bf16.mxu0 0
        %1692 = vmatpush1.bf16.msra.mxu0 0
        %1693 = vmatprep.subr.bf16.mxu0 0
        %1694 = vmatpush1.bf16.msra.mxu0 0
        %1695 = vmatprep.subr.bf16.mxu0 0
        %1696 = vmatpush1.bf16.msra.mxu0 0
        %1697 = vmatprep.subr.bf16.mxu0 0
        %1698 = vmatpush1.bf16.msra.mxu0 0
        %1699 = vmatprep.subr.bf16.mxu0 0
        %1700 = vmatpush1.bf16.msra.mxu0 0
        %1701 = vmatprep.subr.bf16.mxu0 0
        %1702 = vmatpush1.bf16.msra.mxu0 0
        %1703 = vmatprep.subr.bf16.mxu0 0
        %1704 = vmatpush1.bf16.msra.mxu0 0
        %1705 = vmatprep.subr.bf16.mxu0 0
        %1706 = vmatpush1.bf16.msra.mxu0 0
        %1707 = vmatprep.subr.bf16.mxu0 0
        %1708 = vmatpush1.bf16.msra.mxu0 0
        %1709 = vmatprep.subr.bf16.mxu0 0
        %1710 = vmatpush1.bf16.msra.mxu0 0
        %1711 = vmatprep.mubr.bf16.mxu0 0
        %1712 = vmatmul.mubr.bf16.gmra.mrb[0].mxu0 %v1674
        %v1713 = vpop.f32.mrb[0].mxu0
        %v1714 = vadd.f32 0.0, %v1713
        %v1715 = vpop.f32.mrb[0].mxu0
        %v1716 = vpop.f32.mrb[0].mxu0
        %v1717 = vpop.f32.mrb[0].mxu0
        %1718 = vdwg.mxu0
        %1720 = vrot.lane.b32.xlu0 %v1494, 8
        %v1721 = vpop.permute.xlu0 %1720
        %1724 = vrot.lane.b32.xlu0 %v1604, 16
        %v1725 = vpop.permute.xlu0 %1724
        %1728 = vrot.lane.b32.xlu0 %v1714, 24
        %v1729 = vpop.permute.xlu0 %1728
        %v1731 = vsel %vm1276, %v1377, %v1721
        %vm1732 = vcmask 130048
        %v1733 = vsel %vm1732, %v1731, %v1725
        %vm1734 = vcmask 195584
        %v1735 = vsel %vm1734, %v1733, %v1729
        %v1736 = vpack.c.bf16 %v1735, %v1735
        %v1738 = vlaneseq
        %v1739 = vshrl.u32 %v1738, 7
        %v1740 = vsub.s32 0, %v1739
        %v1741 = vrot.slane %v1217, %v1740
        %v1747 = vunpack.c.l.b16 %v1213
        %v1748 = vunpack.c.l.b16 %v1214
        %v1749 = vunpack.c.l.b16 %v1215
        %v1750 = vunpack.c.l.b16 %v1216
        %v1751 = vpack.c.b16 %v1748, %v1747
        %v1752 = vpack.c.b16 %v1750, %v1749
        %v1756 = vsel %vm1178, %v1736, 0
        %1758 = vmatprep.subr.bf16.mxu0 0
        %1759 = vmatpush1.bf16.msra.mxu0 %v1751
        %1760 = vmatprep.subr.bf16.mxu0 0
        %1761 = vmatpush1.bf16.msra.mxu0 %v1752
        %1762 = vmatprep.subr.bf16.mxu0 0
        %1763 = vmatpush1.bf16.msra.mxu0 0
        %1764 = vmatprep.subr.bf16.mxu0 0
        %1765 = vmatpush1.bf16.msra.mxu0 0
        %1766 = vmatprep.subr.bf16.mxu0 0
        %1767 = vmatpush1.bf16.msra.mxu0 0
        %1768 = vmatprep.subr.bf16.mxu0 0
        %1769 = vmatpush1.bf16.msra.mxu0 0
        %1770 = vmatprep.subr.bf16.mxu0 0
        %1771 = vmatpush1.bf16.msra.mxu0 0
        %1772 = vmatprep.subr.bf16.mxu0 0
        %1773 = vmatpush1.bf16.msra.mxu0 0
        %1774 = vmatprep.subr.bf16.mxu0 0
        %1775 = vmatpush1.bf16.msra.mxu0 0
        %1776 = vmatprep.subr.bf16.mxu0 0
        %1777 = vmatpush1.bf16.msra.mxu0 0
        %1778 = vmatprep.subr.bf16.mxu0 0
        %1779 = vmatpush1.bf16.msra.mxu0 0
        %1780 = vmatprep.subr.bf16.mxu0 0
        %1781 = vmatpush1.bf16.msra.mxu0 0
        %1782 = vmatprep.subr.bf16.mxu0 0
        %1783 = vmatpush1.bf16.msra.mxu0 0
        %1784 = vmatprep.subr.bf16.mxu0 0
        %1785 = vmatpush1.bf16.msra.mxu0 0
        %1786 = vmatprep.subr.bf16.mxu0 0
        %1787 = vmatpush1.bf16.msra.mxu0 0
        %1788 = vmatprep.subr.bf16.mxu0 0
        %1789 = vmatpush1.bf16.msra.mxu0 0
        %1790 = vmatprep.mubr.bf16.mxu0 0
        %1791 = vmatmul.mubr.bf16.gmra.mrb[0].mxu0 %v1756
        %v1792 = vpop.f32.mrb[0].mxu0
        %v1793 = vadd.f32 %v1741, %v1792
        %v1794 = vpop.f32.mrb[0].mxu0
        %v1795 = vpop.f32.mrb[0].mxu0
        %v1796 = vpop.f32.mrb[0].mxu0
        %1797 = vdwg.mxu0
        %v1798 = vadd.f32 %v1175, %v1793
        %v1799 = vld [vmem:[#allocation15] sm:$0x1]
        %v1800 = vld [vmem:[#allocation17] sm:$0x1]
        %v1801 = vsel %vm1178, %v1798, 0.0
        %1802 = vadd.xlane.f32.xlu0 %v1801
        %v1803 = vpop.xlane.xlu0 %1802
        %v1804 = vmul.f32 %v1803, %v1182
        %v1805 = vsub.f32 %v1798, %v1804
        %v1806 = vmul.f32 %v1805, %v1805
        %v1807 = vsel %vm1178, %v1806, 0.0
        %1808 = vadd.xlane.f32.xlu0 %v1807
        %v1809 = vpop.xlane.xlu0 %1808
        %v1810 = vmul.f32 %v1809, %v1182
        %v1811 = vadd.f32 %v1810, 1e-05
        %v1812 = vrsqrt.pop %v1811
        %v1813 = vmul.f32 %v1805, %v1812
        %v1815 = vlaneseq
        %v1816 = vshrl.u32 %v1815, 7
        %v1817 = vsub.s32 0, %v1816
        %v1818 = vrot.slane %v1799, %v1817
        %v1820 = vmul.f32 %v1813, %v1818
        %v1822 = vlaneseq
        %v1823 = vshrl.u32 %v1822, 7
        %v1824 = vsub.s32 0, %v1823
        %v1825 = vrot.slane %v1800, %v1824
        %v1827 = vadd.f32 %v1820, %v1825
        %v1828 = vld [vmem:[#allocation4] sm:$0xf]
        %v1829 = vld [vmem:[#allocation5] sm:$0xf]
        %v1830 = vld [vmem:[%s12] sm:$0xf]
        %v1831 = vld [vmem:[%s12 + $0x4] sm:$0xf]
        %v1832 = vld [vmem:[%s12 + $0x8] sm:$0xf]
        %v1833 = vld [vmem:[%s12 + $0xc] sm:$0xf]
        %v1834 = vld [vmem:[%s15] sm:$0xf]
        %v1835 = vld [vmem:[%s15 + $0x4] sm:$0xf]
        %v1836 = vld [vmem:[%s15 + $0x8] sm:$0xf]
        %v1837 = vld [vmem:[%s15 + $0xc] sm:$0xf]
        %v1838 = vld [vmem:[#allocation21] sm:$0x1]
        %v1839 = vpack.c.bf16 %v1827, %v1827
        %v1844 = vunpack.c.l.b16 %v1830
        %v1845 = vunpack.c.l.b16 %v1831
        %v1846 = vunpack.c.l.b16 %v1832
        %v1847 = vunpack.c.l.b16 %v1833
        %v1848 = vpack.c.b16 %v1845, %v1844
        %v1849 = vpack.c.b16 %v1847, %v1846
        %v1853 = vsel %vm1178, %v1839, 0
        %1855 = vmatprep.subr.bf16.mxu0 0
        %1856 = vmatpush1.bf16.msra.mxu0 %v1848
        %1857 = vmatprep.subr.bf16.mxu0 0
        %1858 = vmatpush1.bf16.msra.mxu0 %v1849
        %1859 = vmatprep.subr.bf16.mxu0 0
        %1860 = vmatpush1.bf16.msra.mxu0 0
        %1861 = vmatprep.subr.bf16.mxu0 0
        %1862 = vmatpush1.bf16.msra.mxu0 0
        %1863 = vmatprep.subr.bf16.mxu0 0
        %1864 = vmatpush1.bf16.msra.mxu0 0
        %1865 = vmatprep.subr.bf16.mxu0 0
        %1866 = vmatpush1.bf16.msra.mxu0 0
        %1867 = vmatprep.subr.bf16.mxu0 0
        %1868 = vmatpush1.bf16.msra.mxu0 0
        %1869 = vmatprep.subr.bf16.mxu0 0
        %1870 = vmatpush1.bf16.msra.mxu0 0
        %1871 = vmatprep.subr.bf16.mxu0 0
        %1872 = vmatpush1.bf16.msra.mxu0 0
        %1873 = vmatprep.subr.bf16.mxu0 0
        %1874 = vmatpush1.bf16.msra.mxu0 0
        %1875 = vmatprep.subr.bf16.mxu0 0
        %1876 = vmatpush1.bf16.msra.mxu0 0
        %1877 = vmatprep.subr.bf16.mxu0 0
        %1878 = vmatpush1.bf16.msra.mxu0 0
        %1879 = vmatprep.subr.bf16.mxu0 0
        %1880 = vmatpush1.bf16.msra.mxu0 0
        %1881 = vmatprep.subr.bf16.mxu0 0
        %1882 = vmatpush1.bf16.msra.mxu0 0
        %1883 = vmatprep.subr.bf16.mxu0 0
        %1884 = vmatpush1.bf16.msra.mxu0 0
        %1885 = vmatprep.subr.bf16.mxu0 0
        %1886 = vmatpush1.bf16.msra.mxu0 0
        %1887 = vmatprep.mubr.bf16.mxu0 0
        %1888 = vmatmul.mubr.bf16.gmra.mrb[0].mxu0 %v1853
        %v1889 = vpop.f32.mrb[0].mxu0
        %v1890 = vadd.f32 0.0, %v1889
        %v1891 = vpop.f32.mrb[0].mxu0
        %v1892 = vpop.f32.mrb[0].mxu0
        %v1893 = vpop.f32.mrb[0].mxu0
        %1894 = vdwg.mxu0
        %v1895 = vmul.f32 %v1890, 0.35355338
        %v1896 = vpack.c.bf16 %v1895, %v1895
        %v1898 = vsel %vm1276, %v1896, 0
        %v1901 = vsel %vm1276, %v1828, 0
        %1903 = vmatprep.subr.bf16.mxu0 0
        %1904 = vmatpush1.bf16.xpose.msra.mxu0 %v1901
        %1905 = vmatprep.subr.bf16.mxu0 0
        %1906 = vmatpush1.bf16.xpose.msra.mxu0 0
        %1907 = vmatprep.subr.bf16.mxu0 0
        %1908 = vmatpush1.bf16.xpose.msra.mxu0 0
        %1909 = vmatprep.subr.bf16.mxu0 0
        %1910 = vmatpush1.bf16.xpose.msra.mxu0 0
        %1911 = vmatprep.subr.bf16.mxu0 0
        %1912 = vmatpush1.bf16.xpose.msra.mxu0 0
        %1913 = vmatprep.subr.bf16.mxu0 0
        %1914 = vmatpush1.bf16.xpose.msra.mxu0 0
        %1915 = vmatprep.subr.bf16.mxu0 0
        %1916 = vmatpush1.bf16.xpose.msra.mxu0 0
        %1917 = vmatprep.subr.bf16.mxu0 0
        %1918 = vmatpush1.bf16.xpose.msra.mxu0 0
        %1919 = vmatprep.subr.bf16.mxu0 0
        %1920 = vmatpush1.bf16.xpose.msra.mxu0 0
        %1921 = vmatprep.subr.bf16.mxu0 0
        %1922 = vmatpush1.bf16.xpose.msra.mxu0 0
        %1923 = vmatprep.subr.bf16.mxu0 0
        %1924 = vmatpush1.bf16.xpose.msra.mxu0 0
        %1925 = vmatprep.subr.bf16.mxu0 0
        %1926 = vmatpush1.bf16.xpose.msra.mxu0 0
        %1927 = vmatprep.subr.bf16.mxu0 0
        %1928 = vmatpush1.bf16.xpose.msra.mxu0 0
        %1929 = vmatprep.subr.bf16.mxu0 0
        %1930 = vmatpush1.bf16.xpose.msra.mxu0 0
        %1931 = vmatprep.subr.bf16.mxu0 0
        %1932 = vmatpush1.bf16.xpose.msra.mxu0 0
        %1933 = vmatprep.subr.bf16.mxu0 0
        %1934 = vmatpush1.bf16.xpose.msra.mxu0 0
        %1935 = vmatprep.mubr.bf16.mxu0 0
        %1936 = vmatmul.mubr.bf16.gmra.mrb[0].mxu0 %v1898
        %v1937 = vpop.f32.mrb[0].mxu0
        %v1938 = vadd.f32 0.0, %v1937
        %v1939 = vpop.f32.mrb[0].mxu0
        %v1940 = vpop.f32.mrb[0].mxu0
        %v1941 = vpop.f32.mrb[0].mxu0
        %1942 = vdwg.mxu0
        %v1943 = vsel %vm1276, %v1938, -inf
        %1944 = vmax.xlane.f32.xlu0 %v1943
        %v1945 = vpop.xlane.xlu0 %1944
        %v1946 = vsub.f32 %v1938, %v1945
        %v1947 = vmul.f32 %v1946, 1.442695
        %v1948 = vpow.pop %v1947
        %v1949 = vsel %vm1276, %v1948, 0.0
        %1950 = vadd.xlane.f32.xlu0 %v1949
        %v1951 = vpop.xlane.xlu0 %1950
        %v1952 = vrcp.pop %v1951
        %v1953 = vmul.f32 %v1948, %v1952
        %v1954 = vpack.c.bf16 %v1953, %v1953
        %v1956 = vsel %vm1276, %v1954, 0
        %v1959 = vsel %vm1338, %v1829, 0
        %1961 = vmatprep.subr.bf16.mxu0 0
        %1962 = vmatpush1.bf16.msra.mxu0 %v1959
        %1963 = vmatprep.subr.bf16.mxu0 0
        %1964 = vmatpush1.bf16.msra.mxu0 0
        %1965 = vmatprep.subr.bf16.mxu0 0
        %1966 = vmatpush1.bf16.msra.mxu0 0
        %1967 = vmatprep.subr.bf16.mxu0 0
        %1968 = vmatpush1.bf16.msra.mxu0 0
        %1969 = vmatprep.subr.bf16.mxu0 0
        %1970 = vmatpush1.bf16.msra.mxu0 0
        %1971 = vmatprep.subr.bf16.mxu0 0
        %1972 = vmatpush1.bf16.msra.mxu0 0
        %1973 = vmatprep.subr.bf16.mxu0 0
        %1974 = vmatpush1.bf16.msra.mxu0 0
        %1975 = vmatprep.subr.bf16.mxu0 0
        %1976 = vmatpush1.bf16.msra.mxu0 0
        %1977 = vmatprep.subr.bf16.mxu0 0
        %1978 = vmatpush1.bf16.msra.mxu0 0
        %1979 = vmatprep.subr.bf16.mxu0 0
        %1980 = vmatpush1.bf16.msra.mxu0 0
        %1981 = vmatprep.subr.bf16.mxu0 0
        %1982 = vmatpush1.bf16.msra.mxu0 0
        %1983 = vmatprep.subr.bf16.mxu0 0
        %1984 = vmatpush1.bf16.msra.mxu0 0
        %1985 = vmatprep.subr.bf16.mxu0 0
        %1986 = vmatpush1.bf16.msra.mxu0 0
        %1987 = vmatprep.subr.bf16.mxu0 0
        %1988 = vmatpush1.bf16.msra.mxu0 0
        %1989 = vmatprep.subr.bf16.mxu0 0
        %1990 = vmatpush1.bf16.msra.mxu0 0
        %1991 = vmatprep.subr.bf16.mxu0 0
        %1992 = vmatpush1.bf16.msra.mxu0 0
        %1993 = vmatprep.mubr.bf16.mxu0 0
        %1994 = vmatmul.mubr.bf16.gmra.mrb[0].mxu0 %v1956
        %v1995 = vpop.f32.mrb[0].mxu0
        %v1996 = vadd.f32 0.0, %v1995
        %v1997 = vpop.f32.mrb[0].mxu0
        %v1998 = vpop.f32.mrb[0].mxu0
        %v1999 = vpop.f32.mrb[0].mxu0
        %2000 = vdwg.mxu0
        %2002 = vrot.lane.b32.xlu0 %v1896, 120
        %v2003 = vpop.permute.xlu0 %2002
        %v2005 = vunpack.c.l.b16 %v1828
        %v2006 = vpack.c.b16 %v2005, %v2005
        %2007 = vrot.lane.b32.xlu0 %v2006, 120
        %v2008 = vpop.permute.xlu0 %2007
        %v2010 = vsel %vm1276, %v2003, 0
        %v2013 = vsel %vm1276, %v2008, 0
        %2015 = vmatprep.subr.bf16.mxu0 0
        %2016 = vmatpush1.bf16.xpose.msra.mxu0 %v2013
        %2017 = vmatprep.subr.bf16.mxu0 0
        %2018 = vmatpush1.bf16.xpose.msra.mxu0 0
        %2019 = vmatprep.subr.bf16.mxu0 0
        %2020 = vmatpush1.bf16.xpose.msra.mxu0 0
        %2021 = vmatprep.subr.bf16.mxu0 0
        %2022 = vmatpush1.bf16.xpose.msra.mxu0 0
        %2023 = vmatprep.subr.bf16.mxu0 0
        %2024 = vmatpush1.bf16.xpose.msra.mxu0 0
        %2025 = vmatprep.subr.bf16.mxu0 0
        %2026 = vmatpush1.bf16.xpose.msra.mxu0 0
        %2027 = vmatprep.subr.bf16.mxu0 0
        %2028 = vmatpush1.bf16.xpose.msra.mxu0 0
        %2029 = vmatprep.subr.bf16.mxu0 0
        %2030 = vmatpush1.bf16.xpose.msra.mxu0 0
        %2031 = vmatprep.subr.bf16.mxu0 0
        %2032 = vmatpush1.bf16.xpose.msra.mxu0 0
        %2033 = vmatprep.subr.bf16.mxu0 0
        %2034 = vmatpush1.bf16.xpose.msra.mxu0 0
        %2035 = vmatprep.subr.bf16.mxu0 0
        %2036 = vmatpush1.bf16.xpose.msra.mxu0 0
        %2037 = vmatprep.subr.bf16.mxu0 0
        %2038 = vmatpush1.bf16.xpose.msra.mxu0 0
        %2039 = vmatprep.subr.bf16.mxu0 0
        %2040 = vmatpush1.bf16.xpose.msra.mxu0 0
        %2041 = vmatprep.subr.bf16.mxu0 0
        %2042 = vmatpush1.bf16.xpose.msra.mxu0 0
        %2043 = vmatprep.subr.bf16.mxu0 0
        %2044 = vmatpush1.bf16.xpose.msra.mxu0 0
        %2045 = vmatprep.subr.bf16.mxu0 0
        %2046 = vmatpush1.bf16.xpose.msra.mxu0 0
        %2047 = vmatprep.mubr.bf16.mxu0 0
        %2048 = vmatmul.mubr.bf16.gmra.mrb[0].mxu0 %v2010
        %v2049 = vpop.f32.mrb[0].mxu0
        %v2050 = vadd.f32 0.0, %v2049
        %v2051 = vpop.f32.mrb[0].mxu0
        %v2052 = vpop.f32.mrb[0].mxu0
        %v2053 = vpop.f32.mrb[0].mxu0
        %2054 = vdwg.mxu0
        %v2055 = vsel %vm1276, %v2050, -inf
        %2056 = vmax.xlane.f32.xlu0 %v2055
        %v2057 = vpop.xlane.xlu0 %2056
        %v2058 = vsub.f32 %v2050, %v2057
        %v2059 = vmul.f32 %v2058, 1.442695
        %v2060 = vpow.pop %v2059
        %v2061 = vsel %vm1276, %v2060, 0.0
        %2062 = vadd.xlane.f32.xlu0 %v2061
        %v2063 = vpop.xlane.xlu0 %2062
        %v2064 = vrcp.pop %v2063
        %v2065 = vmul.f32 %v2060, %v2064
        %v2066 = vpack.c.bf16 %v2065, %v2065
        %v2068 = vunpack.c.l.b16 %v1829
        %v2069 = vpack.c.b16 %v2068, %v2068
        %2070 = vrot.lane.b32.xlu0 %v2069, 120
        %v2071 = vpop.permute.xlu0 %2070
        %v2073 = vsel %vm1276, %v2066, 0
        %v2076 = vsel %vm1338, %v2071, 0
        %2078 = vmatprep.subr.bf16.mxu0 0
        %2079 = vmatpush1.bf16.msra.mxu0 %v2076
        %2080 = vmatprep.subr.bf16.mxu0 0
        %2081 = vmatpush1.bf16.msra.mxu0 0
        %2082 = vmatprep.subr.bf16.mxu0 0
        %2083 = vmatpush1.bf16.msra.mxu0 0
        %2084 = vmatprep.subr.bf16.mxu0 0
        %2085 = vmatpush1.bf16.msra.mxu0 0
        %2086 = vmatprep.subr.bf16.mxu0 0
        %2087 = vmatpush1.bf16.msra.mxu0 0
        %2088 = vmatprep.subr.bf16.mxu0 0
        %2089 = vmatpush1.bf16.msra.mxu0 0
        %2090 = vmatprep.subr.bf16.mxu0 0
        %2091 = vmatpush1.bf16.msra.mxu0 0
        %2092 = vmatprep.subr.bf16.mxu0 0
        %2093 = vmatpush1.bf16.msra.mxu0 0
        %2094 = vmatprep.subr.bf16.mxu0 0
        %2095 = vmatpush1.bf16.msra.mxu0 0
        %2096 = vmatprep.subr.bf16.mxu0 0
        %2097 = vmatpush1.bf16.msra.mxu0 0
        %2098 = vmatprep.subr.bf16.mxu0 0
        %2099 = vmatpush1.bf16.msra.mxu0 0
        %2100 = vmatprep.subr.bf16.mxu0 0
        %2101 = vmatpush1.bf16.msra.mxu0 0
        %2102 = vmatprep.subr.bf16.mxu0 0
        %2103 = vmatpush1.bf16.msra.mxu0 0
        %2104 = vmatprep.subr.bf16.mxu0 0
        %2105 = vmatpush1.bf16.msra.mxu0 0
        %2106 = vmatprep.subr.bf16.mxu0 0
        %2107 = vmatpush1.bf16.msra.mxu0 0
        %2108 = vmatprep.subr.bf16.mxu0 0
        %2109 = vmatpush1.bf16.msra.mxu0 0
        %2110 = vmatprep.mubr.bf16.mxu0 0
        %2111 = vmatmul.mubr.bf16.gmra.mrb[0].mxu0 %v2073
        %v2112 = vpop.f32.mrb[0].mxu0
        %v2113 = vadd.f32 0.0, %v2112
        %v2114 = vpop.f32.mrb[0].mxu0
        %v2115 = vpop.f32.mrb[0].mxu0
        %v2116 = vpop.f32.mrb[0].mxu0
        %2117 = vdwg.mxu0
        %2118 = vrot.lane.b32.xlu0 %v1896, 112
        %v2119 = vpop.permute.xlu0 %2118
        %2120 = vrot.lane.b32.xlu0 %v2006, 112
        %v2121 = vpop.permute.xlu0 %2120
        %v2123 = vsel %vm1276, %v2119, 0
        %v2126 = vsel %vm1276, %v2121, 0
        %2128 = vmatprep.subr.bf16.mxu0 0
        %2129 = vmatpush1.bf16.xpose.msra.mxu0 %v2126
        %2130 = vmatprep.subr.bf16.mxu0 0
        %2131 = vmatpush1.bf16.xpose.msra.mxu0 0
        %2132 = vmatprep.subr.bf16.mxu0 0
        %2133 = vmatpush1.bf16.xpose.msra.mxu0 0
        %2134 = vmatprep.subr.bf16.mxu0 0
        %2135 = vmatpush1.bf16.xpose.msra.mxu0 0
        %2136 = vmatprep.subr.bf16.mxu0 0
        %2137 = vmatpush1.bf16.xpose.msra.mxu0 0
        %2138 = vmatprep.subr.bf16.mxu0 0
        %2139 = vmatpush1.bf16.xpose.msra.mxu0 0
        %2140 = vmatprep.subr.bf16.mxu0 0
        %2141 = vmatpush1.bf16.xpose.msra.mxu0 0
        %2142 = vmatprep.subr.bf16.mxu0 0
        %2143 = vmatpush1.bf16.xpose.msra.mxu0 0
        %2144 = vmatprep.subr.bf16.mxu0 0
        %2145 = vmatpush1.bf16.xpose.msra.mxu0 0
        %2146 = vmatprep.subr.bf16.mxu0 0
        %2147 = vmatpush1.bf16.xpose.msra.mxu0 0
        %2148 = vmatprep.subr.bf16.mxu0 0
        %2149 = vmatpush1.bf16.xpose.msra.mxu0 0
        %2150 = vmatprep.subr.bf16.mxu0 0
        %2151 = vmatpush1.bf16.xpose.msra.mxu0 0
        %2152 = vmatprep.subr.bf16.mxu0 0
        %2153 = vmatpush1.bf16.xpose.msra.mxu0 0
        %2154 = vmatprep.subr.bf16.mxu0 0
        %2155 = vmatpush1.bf16.xpose.msra.mxu0 0
        %2156 = vmatprep.subr.bf16.mxu0 0
        %2157 = vmatpush1.bf16.xpose.msra.mxu0 0
        %2158 = vmatprep.subr.bf16.mxu0 0
        %2159 = vmatpush1.bf16.xpose.msra.mxu0 0
        %2160 = vmatprep.mubr.bf16.mxu0 0
        %2161 = vmatmul.mubr.bf16.gmra.mrb[0].mxu0 %v2123
        %v2162 = vpop.f32.mrb[0].mxu0
        %v2163 = vadd.f32 0.0, %v2162
        %v2164 = vpop.f32.mrb[0].mxu0
        %v2165 = vpop.f32.mrb[0].mxu0
        %v2166 = vpop.f32.mrb[0].mxu0
        %2167 = vdwg.mxu0
        %v2168 = vsel %vm1276, %v2163, -inf
        %2169 = vmax.xlane.f32.xlu0 %v2168
        %v2170 = vpop.xlane.xlu0 %2169
        %v2171 = vsub.f32 %v2163, %v2170
        %v2172 = vmul.f32 %v2171, 1.442695
        %v2173 = vpow.pop %v2172
        %v2174 = vsel %vm1276, %v2173, 0.0
        %2175 = vadd.xlane.f32.xlu0 %v2174
        %v2176 = vpop.xlane.xlu0 %2175
        %v2177 = vrcp.pop %v2176
        %v2178 = vmul.f32 %v2173, %v2177
        %v2179 = vpack.c.bf16 %v2178, %v2178
        %2180 = vrot.lane.b32.xlu0 %v2069, 112
        %v2181 = vpop.permute.xlu0 %2180
        %v2183 = vsel %vm1276, %v2179, 0
        %v2186 = vsel %vm1338, %v2181, 0
        %2188 = vmatprep.subr.bf16.mxu0 0
        %2189 = vmatpush1.bf16.msra.mxu0 %v2186
        %2190 = vmatprep.subr.bf16.mxu0 0
        %2191 = vmatpush1.bf16.msra.mxu0 0
        %2192 = vmatprep.subr.bf16.mxu0 0
        %2193 = vmatpush1.bf16.msra.mxu0 0
        %2194 = vmatprep.subr.bf16.mxu0 0
        %2195 = vmatpush1.bf16.msra.mxu0 0
        %2196 = vmatprep.subr.bf16.mxu0 0
        %2197 = vmatpush1.bf16.msra.mxu0 0
        %2198 = vmatprep.subr.bf16.mxu0 0
        %2199 = vmatpush1.bf16.msra.mxu0 0
        %2200 = vmatprep.subr.bf16.mxu0 0
        %2201 = vmatpush1.bf16.msra.mxu0 0
        %2202 = vmatprep.subr.bf16.mxu0 0
        %2203 = vmatpush1.bf16.msra.mxu0 0
        %2204 = vmatprep.subr.bf16.mxu0 0
        %2205 = vmatpush1.bf16.msra.mxu0 0
        %2206 = vmatprep.subr.bf16.mxu0 0
        %2207 = vmatpush1.bf16.msra.mxu0 0
        %2208 = vmatprep.subr.bf16.mxu0 0
        %2209 = vmatpush1.bf16.msra.mxu0 0
        %2210 = vmatprep.subr.bf16.mxu0 0
        %2211 = vmatpush1.bf16.msra.mxu0 0
        %2212 = vmatprep.subr.bf16.mxu0 0
        %2213 = vmatpush1.bf16.msra.mxu0 0
        %2214 = vmatprep.subr.bf16.mxu0 0
        %2215 = vmatpush1.bf16.msra.mxu0 0
        %2216 = vmatprep.subr.bf16.mxu0 0
        %2217 = vmatpush1.bf16.msra.mxu0 0
        %2218 = vmatprep.subr.bf16.mxu0 0
        %2219 = vmatpush1.bf16.msra.mxu0 0
        %2220 = vmatprep.mubr.bf16.mxu0 0
        %2221 = vmatmul.mubr.bf16.gmra.mrb[0].mxu0 %v2183
        %v2222 = vpop.f32.mrb[0].mxu0
        %v2223 = vadd.f32 0.0, %v2222
        %v2224 = vpop.f32.mrb[0].mxu0
        %v2225 = vpop.f32.mrb[0].mxu0
        %v2226 = vpop.f32.mrb[0].mxu0
        %2227 = vdwg.mxu0
        %2228 = vrot.lane.b32.xlu0 %v1896, 104
        %v2229 = vpop.permute.xlu0 %2228
        %2230 = vrot.lane.b32.xlu0 %v2006, 104
        %v2231 = vpop.permute.xlu0 %2230
        %v2233 = vsel %vm1276, %v2229, 0
        %v2236 = vsel %vm1276, %v2231, 0
        %2238 = vmatprep.subr.bf16.mxu0 0
        %2239 = vmatpush1.bf16.xpose.msra.mxu0 %v2236
        %2240 = vmatprep.subr.bf16.mxu0 0
        %2241 = vmatpush1.bf16.xpose.msra.mxu0 0
        %2242 = vmatprep.subr.bf16.mxu0 0
        %2243 = vmatpush1.bf16.xpose.msra.mxu0 0
        %2244 = vmatprep.subr.bf16.mxu0 0
        %2245 = vmatpush1.bf16.xpose.msra.mxu0 0
        %2246 = vmatprep.subr.bf16.mxu0 0
        %2247 = vmatpush1.bf16.xpose.msra.mxu0 0
        %2248 = vmatprep.subr.bf16.mxu0 0
        %2249 = vmatpush1.bf16.xpose.msra.mxu0 0
        %2250 = vmatprep.subr.bf16.mxu0 0
        %2251 = vmatpush1.bf16.xpose.msra.mxu0 0
        %2252 = vmatprep.subr.bf16.mxu0 0
        %2253 = vmatpush1.bf16.xpose.msra.mxu0 0
        %2254 = vmatprep.subr.bf16.mxu0 0
        %2255 = vmatpush1.bf16.xpose.msra.mxu0 0
        %2256 = vmatprep.subr.bf16.mxu0 0
        %2257 = vmatpush1.bf16.xpose.msra.mxu0 0
        %2258 = vmatprep.subr.bf16.mxu0 0
        %2259 = vmatpush1.bf16.xpose.msra.mxu0 0
        %2260 = vmatprep.subr.bf16.mxu0 0
        %2261 = vmatpush1.bf16.xpose.msra.mxu0 0
        %2262 = vmatprep.subr.bf16.mxu0 0
        %2263 = vmatpush1.bf16.xpose.msra.mxu0 0
        %2264 = vmatprep.subr.bf16.mxu0 0
        %2265 = vmatpush1.bf16.xpose.msra.mxu0 0
        %2266 = vmatprep.subr.bf16.mxu0 0
        %2267 = vmatpush1.bf16.xpose.msra.mxu0 0
        %2268 = vmatprep.subr.bf16.mxu0 0
        %2269 = vmatpush1.bf16.xpose.msra.mxu0 0
        %2270 = vmatprep.mubr.bf16.mxu0 0
        %2271 = vmatmul.mubr.bf16.gmra.mrb[0].mxu0 %v2233
        %v2272 = vpop.f32.mrb[0].mxu0
        %v2273 = vadd.f32 0.0, %v2272
        %v2274 = vpop.f32.mrb[0].mxu0
        %v2275 = vpop.f32.mrb[0].mxu0
        %v2276 = vpop.f32.mrb[0].mxu0
        %2277 = vdwg.mxu0
        %v2278 = vsel %vm1276, %v2273, -inf
        %2279 = vmax.xlane.f32.xlu0 %v2278
        %v2280 = vpop.xlane.xlu0 %2279
        %v2281 = vsub.f32 %v2273, %v2280
        %v2282 = vmul.f32 %v2281, 1.442695
        %v2283 = vpow.pop %v2282
        %v2284 = vsel %vm1276, %v2283, 0.0
        %2285 = vadd.xlane.f32.xlu0 %v2284
        %v2286 = vpop.xlane.xlu0 %2285
        %v2287 = vrcp.pop %v2286
        %v2288 = vmul.f32 %v2283, %v2287
        %v2289 = vpack.c.bf16 %v2288, %v2288
        %2290 = vrot.lane.b32.xlu0 %v2069, 104
        %v2291 = vpop.permute.xlu0 %2290
        %v2293 = vsel %vm1276, %v2289, 0
        %v2296 = vsel %vm1338, %v2291, 0
        %2298 = vmatprep.subr.bf16.mxu0 0
        %2299 = vmatpush1.bf16.msra.mxu0 %v2296
        %2300 = vmatprep.subr.bf16.mxu0 0
        %2301 = vmatpush1.bf16.msra.mxu0 0
        %2302 = vmatprep.subr.bf16.mxu0 0
        %2303 = vmatpush1.bf16.msra.mxu0 0
        %2304 = vmatprep.subr.bf16.mxu0 0
        %2305 = vmatpush1.bf16.msra.mxu0 0
        %2306 = vmatprep.subr.bf16.mxu0 0
        %2307 = vmatpush1.bf16.msra.mxu0 0
        %2308 = vmatprep.subr.bf16.mxu0 0
        %2309 = vmatpush1.bf16.msra.mxu0 0
        %2310 = vmatprep.subr.bf16.mxu0 0
        %2311 = vmatpush1.bf16.msra.mxu0 0
        %2312 = vmatprep.subr.bf16.mxu0 0
        %2313 = vmatpush1.bf16.msra.mxu0 0
        %2314 = vmatprep.subr.bf16.mxu0 0
        %2315 = vmatpush1.bf16.msra.mxu0 0
        %2316 = vmatprep.subr.bf16.mxu0 0
        %2317 = vmatpush1.bf16.msra.mxu0 0
        %2318 = vmatprep.subr.bf16.mxu0 0
        %2319 = vmatpush1.bf16.msra.mxu0 0
        %2320 = vmatprep.subr.bf16.mxu0 0
        %2321 = vmatpush1.bf16.msra.mxu0 0
        %2322 = vmatprep.subr.bf16.mxu0 0
        %2323 = vmatpush1.bf16.msra.mxu0 0
        %2324 = vmatprep.subr.bf16.mxu0 0
        %2325 = vmatpush1.bf16.msra.mxu0 0
        %2326 = vmatprep.subr.bf16.mxu0 0
        %2327 = vmatpush1.bf16.msra.mxu0 0
        %2328 = vmatprep.subr.bf16.mxu0 0
        %2329 = vmatpush1.bf16.msra.mxu0 0
        %2330 = vmatprep.mubr.bf16.mxu0 0
        %2331 = vmatmul.mubr.bf16.gmra.mrb[0].mxu0 %v2293
        %v2332 = vpop.f32.mrb[0].mxu0
        %v2333 = vadd.f32 0.0, %v2332
        %v2334 = vpop.f32.mrb[0].mxu0
        %v2335 = vpop.f32.mrb[0].mxu0
        %v2336 = vpop.f32.mrb[0].mxu0
        %2337 = vdwg.mxu0
        %2339 = vrot.lane.b32.xlu0 %v2113, 8
        %v2340 = vpop.permute.xlu0 %2339
        %2343 = vrot.lane.b32.xlu0 %v2223, 16
        %v2344 = vpop.permute.xlu0 %2343
        %2347 = vrot.lane.b32.xlu0 %v2333, 24
        %v2348 = vpop.permute.xlu0 %2347
        %v2350 = vsel %vm1276, %v1996, %v2340
        %v2351 = vsel %vm1732, %v2350, %v2344
        %v2352 = vsel %vm1734, %v2351, %v2348
        %v2353 = vpack.c.bf16 %v2352, %v2352
        %v2355 = vlaneseq
        %v2356 = vshrl.u32 %v2355, 7
        %v2357 = vsub.s32 0, %v2356
        %v2358 = vrot.slane %v1838, %v2357
        %v2364 = vunpack.c.l.b16 %v1834
        %v2365 = vunpack.c.l.b16 %v1835
        %v2366 = vunpack.c.l.b16 %v1836
        %v2367 = vunpack.c.l.b16 %v1837
        %v2368 = vpack.c.b16 %v2365, %v2364
        %v2369 = vpack.c.b16 %v2367, %v2366
        %v2373 = vsel %vm1178, %v2353, 0
        %2375 = vmatprep.subr.bf16.mxu0 0
        %2376 = vmatpush1.bf16.msra.mxu0 %v2368
        %2377 = vmatprep.subr.bf16.mxu0 0
        %2378 = vmatpush1.bf16.msra.mxu0 %v2369
        %2379 = vmatprep.subr.bf16.mxu0 0
        %2380 = vmatpush1.bf16.msra.mxu0 0
        %2381 = vmatprep.subr.bf16.mxu0 0
        %2382 = vmatpush1.bf16.msra.mxu0 0
        %2383 = vmatprep.subr.bf16.mxu0 0
        %2384 = vmatpush1.bf16.msra.mxu0 0
        %2385 = vmatprep.subr.bf16.mxu0 0
        %2386 = vmatpush1.bf16.msra.mxu0 0
        %2387 = vmatprep.subr.bf16.mxu0 0
        %2388 = vmatpush1.bf16.msra.mxu0 0
        %2389 = vmatprep.subr.bf16.mxu0 0
        %2390 = vmatpush1.bf16.msra.mxu0 0
        %2391 = vmatprep.subr.bf16.mxu0 0
        %2392 = vmatpush1.bf16.msra.mxu0 0
        %2393 = vmatprep.subr.bf16.mxu0 0
        %2394 = vmatpush1.bf16.msra.mxu0 0
        %2395 = vmatprep.subr.bf16.mxu0 0
        %2396 = vmatpush1.bf16.msra.mxu0 0
        %2397 = vmatprep.subr.bf16.mxu0 0
        %2398 = vmatpush1.bf16.msra.mxu0 0
        %2399 = vmatprep.subr.bf16.mxu0 0
        %2400 = vmatpush1.bf16.msra.mxu0 0
        %2401 = vmatprep.subr.bf16.mxu0 0
        %2402 = vmatpush1.bf16.msra.mxu0 0
        %2403 = vmatprep.subr.bf16.mxu0 0
        %2404 = vmatpush1.bf16.msra.mxu0 0
        %2405 = vmatprep.subr.bf16.mxu0 0
        %2406 = vmatpush1.bf16.msra.mxu0 0
        %2407 = vmatprep.mubr.bf16.mxu0 0
        %2408 = vmatmul.mubr.bf16.gmra.mrb[0].mxu0 %v2373
        %v2409 = vpop.f32.mrb[0].mxu0
        %v2410 = vadd.f32 %v2358, %v2409
        %v2411 = vpop.f32.mrb[0].mxu0
        %v2412 = vpop.f32.mrb[0].mxu0
        %v2413 = vpop.f32.mrb[0].mxu0
        %2414 = vdwg.mxu0
        %v2415 = vadd.f32 %v1798, %v2410
        %v2416 = vld [vmem:[#allocation23] sm:$0x1]
        %v2417 = vld [vmem:[%s18] sm:$0x1]
        %v2418 = vsel %vm1178, %v2415, 0.0
        %2419 = vadd.xlane.f32.xlu0 %v2418
        %v2420 = vpop.xlane.xlu0 %2419
        %v2421 = vmul.f32 %v2420, %v1182
        %v2422 = vsub.f32 %v2415, %v2421
        %v2423 = vmul.f32 %v2422, %v2422
        %v2424 = vsel %vm1178, %v2423, 0.0
        %2425 = vadd.xlane.f32.xlu0 %v2424
        %v2426 = vpop.xlane.xlu0 %2425
        %v2427 = vmul.f32 %v2426, %v1182
        %v2428 = vadd.f32 %v2427, 1e-05
        %v2429 = vrsqrt.pop %v2428
        %v2430 = vmul.f32 %v2422, %v2429
        %v2432 = vlaneseq
        %v2433 = vshrl.u32 %v2432, 7
        %v2434 = vsub.s32 0, %v2433
        %v2435 = vrot.slane %v2416, %v2434
        %v2437 = vmul.f32 %v2430, %v2435
        %v2439 = vlaneseq
        %v2440 = vshrl.u32 %v2439, 7
        %v2441 = vsub.s32 0, %v2440
        %v2442 = vrot.slane %v2417, %v2441
        %v2444 = vadd.f32 %v2437, %v2442
        %v2445 = vpack.c.bf16 %v2444, %v2444
        %v2446 = vld [vmem:[%s19] sm:$0xf]
        %v2447 = vld [vmem:[%s19 + $0x4] sm:$0xf]
        %v2448 = vld [vmem:[%s19 + $0x8] sm:$0xf]
        %v2449 = vld [vmem:[%s19 + $0xc] sm:$0xf]
        %v2450 = vld [vmem:[%s20] sm:$0x1]
        %v2452 = vlaneseq
        %v2453 = vshrl.u32 %v2452, 7
        %v2454 = vsub.s32 0, %v2453
        %v2455 = vrot.slane %v2450, %v2454
        %v2461 = vunpack.c.l.b16 %v2446
        %v2462 = vunpack.c.l.b16 %v2447
        %v2463 = vunpack.c.l.b16 %v2448
        %v2464 = vunpack.c.l.b16 %v2449
        %v2465 = vpack.c.b16 %v2462, %v2461
        %v2466 = vpack.c.b16 %v2464, %v2463
        %v2470 = vsel %vm1178, %v2445, 0
        %2472 = vmatprep.subr.bf16.mxu0 0
        %2473 = vmatpush1.bf16.msra.mxu0 %v2465
        %2474 = vmatprep.subr.bf16.mxu0 0
        %2475 = vmatpush1.bf16.msra.mxu0 %v2466
        %2476 = vmatprep.subr.bf16.mxu0 0
        %2477 = vmatpush1.bf16.msra.mxu0 0
        %2478 = vmatprep.subr.bf16.mxu0 0
        %2479 = vmatpush1.bf16.msra.mxu0 0
        %2480 = vmatprep.subr.bf16.mxu0 0
        %2481 = vmatpush1.bf16.msra.mxu0 0
        %2482 = vmatprep.subr.bf16.mxu0 0
        %2483 = vmatpush1.bf16.msra.mxu0 0
        %2484 = vmatprep.subr.bf16.mxu0 0
        %2485 = vmatpush1.bf16.msra.mxu0 0
        %2486 = vmatprep.subr.bf16.mxu0 0
        %2487 = vmatpush1.bf16.msra.mxu0 0
        %2488 = vmatprep.subr.bf16.mxu0 0
        %2489 = vmatpush1.bf16.msra.mxu0 0
        %2490 = vmatprep.subr.bf16.mxu0 0
        %2491 = vmatpush1.bf16.msra.mxu0 0
        %2492 = vmatprep.subr.bf16.mxu0 0
        %2493 = vmatpush1.bf16.msra.mxu0 0
        %2494 = vmatprep.subr.bf16.mxu0 0
        %2495 = vmatpush1.bf16.msra.mxu0 0
        %2496 = vmatprep.subr.bf16.mxu0 0
        %2497 = vmatpush1.bf16.msra.mxu0 0
        %2498 = vmatprep.subr.bf16.mxu0 0
        %2499 = vmatpush1.bf16.msra.mxu0 0
        %2500 = vmatprep.subr.bf16.mxu0 0
        %2501 = vmatpush1.bf16.msra.mxu0 0
        %2502 = vmatprep.subr.bf16.mxu0 0
        %2503 = vmatpush1.bf16.msra.mxu0 0
        %2504 = vmatprep.mubr.bf16.mxu0 0
        %2505 = vmatmul.mubr.bf16.gmra.mrb[0].mxu0 %v2470
        %v2506 = vpop.f32.mrb[0].mxu0
        %v2507 = vadd.f32 %v2455, %v2506
        %v2508 = vpop.f32.mrb[0].mxu0
        %v2509 = vpop.f32.mrb[0].mxu0
        %v2510 = vpop.f32.mrb[0].mxu0
        %2511 = vdwg.mxu0
        %v2512 = vmul.f32 %v2507, 0.5
        %v2513 = vmul.f32 %v2507, 0.70710677
        %v2514 = verf.f32.pop %v2513
        %v2515 = vadd.f32 %v2514, 1.0
        %v2516 = vmul.f32 %v2512, %v2515
        %v2517 = vpack.c.bf16 %v2516, %v2516
        %v2518 = vld [vmem:[%s21] sm:$0xf]
        %v2519 = vld [vmem:[%s21 + $0x4] sm:$0xf]
        %v2520 = vld [vmem:[%s21 + $0x8] sm:$0xf]
        %v2521 = vld [vmem:[%s21 + $0xc] sm:$0xf]
        %v2522 = vld [vmem:[%s21 + $0x10] sm:$0xf]
        %v2523 = vld [vmem:[%s21 + $0x14] sm:$0xf]
        %v2524 = vld [vmem:[%s21 + $0x18] sm:$0xf]
        %v2525 = vld [vmem:[%s21 + $0x1c] sm:$0xf]
        %v2526 = vld [vmem:[%s21 + $0x20] sm:$0xf]
        %v2527 = vld [vmem:[%s21 + $0x24] sm:$0xf]
        %v2528 = vld [vmem:[%s21 + $0x28] sm:$0xf]
        %v2529 = vld [vmem:[%s21 + $0x2c] sm:$0xf]
        %v2530 = vld [vmem:[%s21 + $0x30] sm:$0xf]
        %v2531 = vld [vmem:[%s21 + $0x34] sm:$0xf]
        %v2532 = vld [vmem:[%s21 + $0x38] sm:$0xf]
        %v2533 = vld [vmem:[%s21 + $0x3c] sm:$0xf]
        %v2550 = vunpack.c.l.b16 %v2518
        %v2551 = vunpack.c.l.b16 %v2519
        %v2552 = vunpack.c.l.b16 %v2520
        %v2553 = vunpack.c.l.b16 %v2521
        %v2554 = vunpack.c.l.b16 %v2522
        %v2555 = vunpack.c.l.b16 %v2523
        %v2556 = vunpack.c.l.b16 %v2524
        %v2557 = vunpack.c.l.b16 %v2525
        %v2558 = vunpack.c.l.b16 %v2526
        %v2559 = vunpack.c.l.b16 %v2527
        %v2560 = vunpack.c.l.b16 %v2528
        %v2561 = vunpack.c.l.b16 %v2529
        %v2562 = vunpack.c.l.b16 %v2530
        %v2563 = vunpack.c.l.b16 %v2531
        %v2564 = vunpack.c.l.b16 %v2532
        %v2565 = vunpack.c.l.b16 %v2533
        %v2566 = vpack.c.b16 %v2551, %v2550
        %v2567 = vpack.c.b16 %v2553, %v2552
        %v2568 = vpack.c.b16 %v2555, %v2554
        %v2569 = vpack.c.b16 %v2557, %v2556
        %v2570 = vpack.c.b16 %v2559, %v2558
        %v2571 = vpack.c.b16 %v2561, %v2560
        %v2572 = vpack.c.b16 %v2563, %v2562
        %v2573 = vpack.c.b16 %v2565, %v2564
        %2582 = vmatprep.subr.bf16.mxu0 0
        %2583 = vmatpush1.bf16.msra.mxu0 %v2566
        %2584 = vmatprep.subr.bf16.mxu0 0
        %2585 = vmatpush1.bf16.msra.mxu0 %v2567
        %2586 = vmatprep.subr.bf16.mxu0 0
        %2587 = vmatpush1.bf16.msra.mxu0 %v2568
        %2588 = vmatprep.subr.bf16.mxu0 0
        %2589 = vmatpush1.bf16.msra.mxu0 %v2569
        %2590 = vmatprep.subr.bf16.mxu0 0
        %2591 = vmatpush1.bf16.msra.mxu0 %v2570
        %2592 = vmatprep.subr.bf16.mxu0 0
        %2593 = vmatpush1.bf16.msra.mxu0 %v2571
        %2594 = vmatprep.subr.bf16.mxu0 0
        %2595 = vmatpush1.bf16.msra.mxu0 %v2572
        %2596 = vmatprep.subr.bf16.mxu0 0
        %2597 = vmatpush1.bf16.msra.mxu0 %v2573
        %2598 = vmatprep.subr.bf16.mxu0 0
        %2599 = vmatpush1.bf16.msra.mxu0 0
        %2600 = vmatprep.subr.bf16.mxu0 0
        %2601 = vmatpush1.bf16.msra.mxu0 0
        %2602 = vmatprep.subr.bf16.mxu0 0
        %2603 = vmatpush1.bf16.msra.mxu0 0
        %2604 = vmatprep.subr.bf16.mxu0 0
        %2605 = vmatpush1.bf16.msra.mxu0 0
        %2606 = vmatprep.subr.bf16.mxu0 0
        %2607 = vmatpush1.bf16.msra.mxu0 0
        %2608 = vmatprep.subr.bf16.mxu0 0
        %2609 = vmatpush1.bf16.msra.mxu0 0
        %2610 = vmatprep.subr.bf16.mxu0 0
        %2611 = vmatpush1.bf16.msra.mxu0 0
        %2612 = vmatprep.subr.bf16.mxu0 0
        %2613 = vmatpush1.bf16.msra.mxu0 0
        %2614 = vmatprep.mubr.bf16.mxu0 0
        %2615 = vmatmul.mubr.bf16.gmra.mrb[0].mxu0 %v2517
        %v2616 = vpop.f32.mrb[0].mxu0
        %v2617 = vadd.f32 0.0, %v2616
        %v2618 = vpop.f32.mrb[0].mxu0
        %v2619 = vpop.f32.mrb[0].mxu0
        %v2620 = vpop.f32.mrb[0].mxu0
        %2621 = vdwg.mxu0
        %v2622 = vadd.f32 %v2415, %v2617
        %v2623 = vld [vmem:[%s22] sm:$0x1]
        %v2625 = vlaneseq
        %v2626 = vshrl.u32 %v2625, 7
        %v2627 = vsub.s32 0, %v2626
        %v2628 = vrot.slane %v2623, %v2627
        %v2630 = vadd.f32 %v2622, %v2628
        %2631 = vst.msk [vmem:[%s895] sm:$0xff] %vm1178, %v2630
        %s2632 = sand.u32 %s565, 1
        %s2633 = scalar_lea.sflag [#allocation8], %s2632
        %s2634 = sand.u32 %s565, 1
        %s2635 = smul.addr %s2634, 8
        %s2636 = scalar_lea.vmem [#allocation24], %s2635
        // Predicated region
        $region161: #{tpu_custom_call.1} parent=111 // pred_check
          %p2637 = pneg %p575
        $region162: #{tpu_custom_call.1} parent=111 // pred_check_branch
          %2639 = sbr.rel (%p2637) target = $region164
        $region163: #{tpu_custom_call.1} parent=111 // pred_region
          %s2641 = ssub.s32 128, 128
          %2642 = vsyncadd %s2633, %s2641
          %s2643 = sadd.s32 %s48, %s47
          %s2644 = smul.addr %s2643, 128
          %s2645 = scalar_lea.hbm %s23, %s2644
          %s2647 = sshll.u32 %s2636, 4
          %s2648 = int_to_ptr.vmem [resolvable:$true] %s2647
          %2650 = dma.vmem_to_hbm [thread:$0]  %s2648, 128, %s2645, %s2633
        $region164: #{tpu_custom_call.1} parent=111 // pred_fallthru
          _
      $region112: #{tpu_custom_call.1} parent=5 // pred_fallthru
        _
      %p2651 = scmp.le.s32.totalorder 2, %s38
      // Predicated region
      $region165: #{tpu_custom_call.1} parent=5 // pred_check
        %p2652 = pneg %p2651
      $region166: #{tpu_custom_call.1} parent=5 // pred_check_branch
        %2654 = sbr.rel (%p2652) target = $region168
      $region167: #{tpu_custom_call.1} parent=5 // pred_region
        %s2655 = ssub.s32 %s38, 2
        // Predicated region
        $region169: #{tpu_custom_call.1} parent=167 // pred_check
          %p2656 = pneg %p581
        $region170: #{tpu_custom_call.1} parent=167 // pred_check_branch
          %2658 = sbr.rel (%p2656) target = $region172
        $region171: #{tpu_custom_call.1} parent=167 // pred_region
          %s2659 = sand.u32 %s566, 1
          %s2660 = scalar_lea.sflag [#allocation8], %s2659
          %s2661 = sand.u32 %s566, 1
          %s2662 = smul.addr %s2661, 8
          %s2663 = scalar_lea.vmem [#allocation24], %s2662
          %2664 = dma.done %s2660, 128
        $region172: #{tpu_custom_call.1} parent=167 // pred_fallthru
          _
      $region168: #{tpu_custom_call.1} parent=5 // pred_fallthru
        _
    $region6: #{tpu_custom_call.1} parent=1 // loop_footer
      %s42 = sadd.s32 1, %s38
    $region7: #{tpu_custom_call.1} parent=1 // loop_footer_branch
      %37 = sbr.rel target = $region3
    $region8: #{tpu_custom_call.1} parent=1 // loop_exit
      _
    %2665 = vsyncpa [#allocation7], 1
    %s2666 = scalar_lea.sflag [#allocation7], 1
    %2667 = vsyncpa %s2666, 1
    %2668 = vsyncpa [#allocation10], 1
    %2669 = vsyncpa [#allocation13], 1
    %2670 = vsyncpa [#allocation16], 1
    %2671 = vsyncpa [#allocation19], 1
    %2672 = vsyncpa [#allocation22], 1
    %2673 = vsyncpa [#allocation8], 1
    %s2674 = scalar_lea.sflag [#allocation8], 1
    %2675 = vsyncpa %s2674, 1

</llo_original>
